<compile_context>
chip_gen: v7x
topology: tpu7x:2x2x1
jax: 0.10.0
libtpu: 0.0.40
codegen_flags: <defaults>
</compile_context>

<pallas_src>
import jax
import jax.numpy as jnp
from jax.experimental import pallas as pl
from jax.experimental.pallas import tpu as pltpu


# ----------------------------- in-kernel math helpers -----------------------------

def _erf(x):
    # Abramowitz & Stegun 7.1.26 rational approximation (~1.5e-7 abs error). exp -> EUP.
    a1, a2, a3, a4, a5 = 0.254829592, -0.284496736, 1.421413741, -1.453152027, 1.061405429
    pc = 0.3275911
    sgn = jnp.where(x >= 0.0, 1.0, -1.0)
    ax = jnp.abs(x)
    t = 1.0 / (1.0 + pc * ax)
    poly = ((((a5 * t + a4) * t + a3) * t + a2) * t + a1) * t
    return sgn * (1.0 - poly * jnp.exp(-ax * ax))


def _gelu(x):
    # nn.GELU() default (approximate='none'): 0.5 * x * (1 + erf(x / sqrt(2))),
    # with erf approximated as above.
    return 0.5 * x * (1.0 + _erf(x * 0.7071067811865476))


def _layernorm(x, g, b, eps=1e-5):
    mu = jnp.mean(x, axis=-1, keepdims=True)
    xc = x - mu
    var = jnp.mean(xc * xc, axis=-1, keepdims=True)
    return xc * jax.lax.rsqrt(var + eps) * g + b


# ----------------------------------- fused kernel -----------------------------------

def _make_kernel(depth, heads, dim_head, mode, has_skip, scale):
    H, dh = heads, dim_head
    inner = H * dh

    def kernel(*refs):
        if has_skip:
            (x_ref, vec_ref, wqkv_ref, wo_ref, w1_ref, b1_ref, w2_ref,
             wcx_ref, wcp_ref, bc_ref, out_ref) = refs
        else:
            (x_ref, vec_ref, wqkv_ref, wo_ref, w1_ref, b1_ref, w2_ref,
             out_ref) = refs
            wcx_ref = wcp_ref = bc_ref = None

        Bb, N, D = x_ref.shape
        M = Bb * N
        bf16 = jnp.bfloat16

        # Flat residual stream: batch folded into the matmul M dimension.
        x = x_ref[...].astype(jnp.float32).reshape(M, D)

        h1_prev = None   # bf16 input of layer nl-1 (rolling CAF history)
        h2_prev = None   # bf16 input of layer nl-2

        for nl in range(depth):                            # static unroll over layers
            if mode == "CAF":
                cur = x.astype(bf16)                       # pre-skipcat input of this layer
                if nl > 1:
                    # Conv2d(N, N, [1, 2]) == two (N, N) token-mixing matmuls + bias.
                    wcx = wcx_ref[nl - 2]                  # (N, N) bf16, x tap
                    wcp = wcp_ref[nl - 2]                  # (N, N) bf16, prev tap
                    bc = bc_ref[nl - 2]                    # (N, 1) f32
                    x3 = cur.reshape(Bb, N, D)
                    p3 = h2_prev.reshape(Bb, N, D)
                    rows = []
                    for b in range(Bb):                    # Bb is small and static
                        rows.append(
                            jnp.dot(wcx, x3[b], preferred_element_type=jnp.float32)
                            + jnp.dot(wcp, p3[b], preferred_element_type=jnp.float32)
                            + bc)
                    x = jnp.concatenate(rows, axis=0)      # (M, D) f32
                # 2-deep rolling history (only index nl-2 is ever read).
                h2_prev, h1_prev = h1_prev, cur

            vec = vec_ref[nl]                              # (6, D) f32, merged vectors
            ln1g, ln1b = vec[0:1], vec[1:2]
            b_o = vec[2:3]
            ln2g, ln2b = vec[3:4], vec[4:5]
            b_f2 = vec[5:6]

            # --- Residual(PreNorm(Attention)) ---
            xn = _layernorm(x, ln1g, ln1b).astype(bf16)    # (M, D)
            # Fused QKV: one lane-dense (M, D) @ (D, 3*inner) matmul.
            qkv = jnp.dot(xn, wqkv_ref[nl], preferred_element_type=jnp.float32)

            outs = []
            for h in range(H):                             # peel heads with static lane slices
                q = qkv[:, h * dh:(h + 1) * dh].reshape(Bb, N, dh).astype(bf16)
                k = qkv[:, inner + h * dh: inner + (h + 1) * dh].reshape(Bb, N, dh).astype(bf16)
                v = qkv[:, 2 * inner + h * dh: 2 * inner + (h + 1) * dh].reshape(Bb, N, dh).astype(bf16)
                dots = jnp.einsum('bqe,bke->bqk', q, k,
                                  preferred_element_type=jnp.float32) * scale
                dots = dots - jnp.max(dots, axis=-1, keepdims=True)
                p = jnp.exp(dots)
                p = p / jnp.sum(p, axis=-1, keepdims=True)      # exact softmax divide
                outs.append(jnp.einsum('bqk,bke->bqe', p.astype(bf16), v,
                                       preferred_element_type=jnp.float32).astype(bf16))
            # 'b h n d -> b n (h d)' ordering, then one (M, inner) @ (inner, D) out-proj.
            o_all = jnp.concatenate(outs, axis=-1).reshape(M, inner)
            x = x + jnp.dot(o_all, wo_ref[nl], preferred_element_type=jnp.float32) + b_o

            # --- Residual(PreNorm(FeedForward)) ---
            xn2 = _layernorm(x, ln2g, ln2b).astype(bf16)
            hdn = jnp.dot(xn2, w1_ref[nl], preferred_element_type=jnp.float32) + b1_ref[nl]
            hdn = _gelu(hdn).astype(bf16)
            x = x + jnp.dot(hdn, w2_ref[nl], preferred_element_type=jnp.float32) + b_f2

        out_ref[...] = x.reshape(Bb, N, D).astype(out_ref.dtype)   # single final store

    return kernel


# ------------------------------- pallas_call builder --------------------------------

def _make_transformer_call(B, N, D, depth, heads, dim_head, mlp, mode, has_skip,
                           scale, batch_block):
    kernel = _make_kernel(depth, heads, dim_head, mode, has_skip, scale)
    inner = heads * dim_head

    def full(shape):
        # Whole array resident in VMEM; index_map invariant across the grid so the
        # weight block is DMA'd once.
        return pl.BlockSpec(shape, lambda i, _n=len(shape): (0,) * _n)

    in_specs = [
        pl.BlockSpec((batch_block, N, D), lambda i: (i, 0, 0)),  # x
        full((depth, 6, D)),            # merged [ln1_g, ln1_b, b_o, ln2_g, ln2_b, b_ff2]
        full((depth, D, 3 * inner)),    # fused W_qkv (bf16, lane-dense)
        full((depth, inner, D)),        # W_out (bf16)
        full((depth, D, mlp)),          # W_ff1 (bf16)
        full((depth, 1, mlp)),          # b_ff1 (f32)
        full((depth, mlp, D)),          # W_ff2 (bf16)
    ]
    if has_skip:
        in_specs += [
            full((depth - 2, N, N)),    # skipcat x-tap weight (bf16)
            full((depth - 2, N, N)),    # skipcat prev-tap weight (bf16)
            full((depth - 2, N, 1)),    # skipcat bias (f32)
        ]

    return pl.pallas_call(
        kernel,
        out_shape=jax.ShapeDtypeStruct((B, N, D), jnp.float32),
        grid=(B // batch_block,),
        in_specs=in_specs,
        out_specs=pl.BlockSpec((batch_block, N, D), lambda i: (i, 0, 0)),
        # "parallel" batch-chunk axis: trivial when batch_block == B; on v7x with
        # batch_block = B // 2 the two TensorCores each take a chunk.
        compiler_params=pltpu.CompilerParams(dimension_semantics=("parallel",)),
    )


# ------------------------------- parameters & forward -------------------------------

def init_params(key, dim, depth, heads, dim_head, mlp_head, num_token, mode):
    """Stacked (depth, ...) parameters in lane-dense layouts (f32)."""
    inner = heads * dim_head
    ks = jax.random.split(key, 8)
    u = lambda k, shape, bound: jax.random.uniform(k, shape, jnp.float32, -bound, bound)
    b_qkv = 1.0 / (dim ** 0.5)
    b_out = 1.0 / (inner ** 0.5)
    b_f1 = 1.0 / (dim ** 0.5)
    b_f2 = 1.0 / (mlp_head ** 0.5)

    ones = jnp.ones((depth, dim), jnp.float32)
    zeros = jnp.zeros((depth, dim), jnp.float32)
    b_o = u(ks[0], (depth, dim), b_out)
    b_ff2 = u(ks[1], (depth, dim), b_f2)
    # Merged (depth, 6, D) vector block: [ln1_g, ln1_b, b_o, ln2_g, ln2_b, b_ff2].
    vecs = jnp.stack([ones, zeros, b_o, ones, zeros, b_ff2], axis=1)

    params = dict(
        vecs=vecs,
        w_qkv=u(ks[2], (depth, dim, 3 * inner), b_qkv),   # fused [q | k | v] columns
        w_out=u(ks[3], (depth, inner, dim), b_out),
        w_ff1=u(ks[4], (depth, dim, mlp_head), b_f1),
        b_ff1=u(ks[5], (depth, 1, mlp_head), b_f1),
        w_ff2=u(ks[6], (depth, mlp_head, dim), b_f2),
    )
    if mode == "CAF" and depth > 2:
        kc1, kc2, kc3 = jax.random.split(ks[7], 3)
        bc = 1.0 / ((num_token * 1 * 2) ** 0.5)           # Conv2d fan_in = in_ch*kh*kw
        params["w_cat_x"] = u(kc1, (depth - 2, num_token, num_token), bc)   # tap [..., 0]
        params["w_cat_p"] = u(kc2, (depth - 2, num_token, num_token), bc)   # tap [..., 1]
        params["b_cat"] = u(kc3, (depth - 2, num_token, 1), bc)
    return params


def transformer_forward(x, degree, mask, params, *, mode, heads, dim_head,
                        batch_block=None):
    # `degree` is accepted for parity with the PyTorch forward, but — exactly as in the
    # reference — the degree/spatial/edge encoders never affect the output (dead code).
    del degree
    if mask is not None:
        # TODO(synk): boolean attention-mask path (F.pad + masked_fill) not implemented; run with mask=None.
        raise NotImplementedError("mask path not implemented")

    B, N, D = x.shape
    depth = params["w_qkv"].shape[0]
    mlp = params["w_ff1"].shape[2]
    has_skip = (mode == "CAF") and (depth > 2)
    scale = dim_head ** (-0.5)

    if batch_block is None:
        batch_block = B          # fold the whole batch: best for single-TC v5e/v6e
    assert B % batch_block == 0  # on v7x with even B, pass batch_block=B//2 (one chunk per TC)

    bf = lambda a: a.astype(jnp.bfloat16)      # MXU operands bf16, accumulation f32
    args = [
        x,
        params["vecs"],
        bf(params["w_qkv"]), bf(params["w_out"]),
        bf(params["w_ff1"]), params["b_ff1"], bf(params["w_ff2"]),
    ]
    if has_skip:
        args += [bf(params["w_cat_x"]), bf(params["w_cat_p"]), params["b_cat"]]

    call = _make_transformer_call(B, N, D, depth, heads, dim_head, mlp, mode,
                                  has_skip, scale, batch_block)
    return call(*args)


# ----------------------------------------- main ------------------------------------

if __name__ == "__main__":
    B, N, D = 2, 8, 32            # batch, num_token, dim
    heads, dim_head = 4, 8        # inner_dim = 32
    mlp_head = 64
    depth = 3
    mode = "CAF"                  # exercises fused layers + in-kernel skipcat conv

    key = jax.random.PRNGKey(0)
    kx, kd, kp = jax.random.split(key, 3)
    x = jax.random.normal(kx, (B, N, D), jnp.float32)
    degree = jax.random.randint(kd, (B, N), 0, 10)   # unused by the forward (dead code)
    params = init_params(kp, D, depth, heads, dim_head, mlp_head, N, mode)

    out = transformer_forward(x, degree, None, params, mode=mode,
                              heads=heads, dim_head=dim_head)
    jax.block_until_ready(out)
    assert out.shape == (B, N, D)
    print("KERNEL_OK")
</pallas_src>

<mosaic_0001>
module attributes {stable_mosaic.version = 11 : i64} {
  func.func @kernel(%arg0: i32, %arg1: memref<2x8x32xf32, #tpu.memory_space<vmem>>, %arg2: memref<3x6x32xf32, #tpu.memory_space<vmem>>, %arg3: memref<3x32x96xbf16, #tpu.memory_space<vmem>>, %arg4: memref<3x32x32xbf16, #tpu.memory_space<vmem>>, %arg5: memref<3x32x64xbf16, #tpu.memory_space<vmem>>, %arg6: memref<3x1x64xf32, #tpu.memory_space<vmem>>, %arg7: memref<3x64x32xbf16, #tpu.memory_space<vmem>>, %arg8: memref<1x8x8xbf16, #tpu.memory_space<vmem>>, %arg9: memref<1x8x8xbf16, #tpu.memory_space<vmem>>, %arg10: memref<1x8x1xf32, #tpu.memory_space<vmem>>, %arg11: memref<2x8x32xf32, #tpu.memory_space<vmem>>) attributes {dimension_semantics = [#tpu.dimension_semantics<parallel>], iteration_bounds = array<i64: 1>, scalar_prefetch = 0 : i64, scratch_operands = 0 : i64, tpu.core_type = #tpu.core_type<tc>, window_params = [{transform_indices = @transform_0, window_bounds = array<i64: 2, 8, 32>}, {pipeline_mode = #tpu.pipeline_mode<synchronous>, transform_indices = @transform_1, window_bounds = array<i64: 3, 6, 32>}, {pipeline_mode = #tpu.pipeline_mode<synchronous>, transform_indices = @transform_2, window_bounds = array<i64: 3, 32, 96>}, {pipeline_mode = #tpu.pipeline_mode<synchronous>, transform_indices = @transform_3, window_bounds = array<i64: 3, 32, 32>}, {pipeline_mode = #tpu.pipeline_mode<synchronous>, transform_indices = @transform_4, window_bounds = array<i64: 3, 32, 64>}, {pipeline_mode = #tpu.pipeline_mode<synchronous>, transform_indices = @transform_5, window_bounds = array<i64: 3, 1, 64>}, {pipeline_mode = #tpu.pipeline_mode<synchronous>, transform_indices = @transform_6, window_bounds = array<i64: 3, 64, 32>}, {pipeline_mode = #tpu.pipeline_mode<synchronous>, transform_indices = @transform_7, window_bounds = array<i64: 1, 8, 8>}, {pipeline_mode = #tpu.pipeline_mode<synchronous>, transform_indices = @transform_8, window_bounds = array<i64: 1, 8, 8>}, {pipeline_mode = #tpu.pipeline_mode<synchronous>, transform_indices = @transform_9, window_bounds = array<i64: 1, 8, 1>}, {transform_indices = @transform_10, window_bounds = array<i64: 2, 8, 32>}]} {
    %c0 = arith.constant 0 : index
    %c0_0 = arith.constant 0 : index
    %c0_1 = arith.constant 0 : index
    %0 = vector.load %arg1[%c0, %c0_0, %c0_1] : memref<2x8x32xf32, #tpu.memory_space<vmem>>, vector<2x8x32xf32>
    %1 = vector.shape_cast %0 : vector<2x8x32xf32> to vector<16x32xf32>
    %2 = arith.truncf %1 : vector<16x32xf32> to vector<16x32xbf16>
    %c0_2 = arith.constant 0 : index
    %c0_3 = arith.constant 0 : index
    %c0_4 = arith.constant 0 : index
    %3 = vector.load %arg2[%c0_2, %c0_3, %c0_4] : memref<3x6x32xf32, #tpu.memory_space<vmem>>, vector<1x6x32xf32>
    %4 = vector.shape_cast %3 : vector<1x6x32xf32> to vector<6x32xf32>
    %5 = vector.extract_strided_slice %4 {offsets = [0, 0], sizes = [1, 32], strides = [1, 1]} : vector<6x32xf32> to vector<1x32xf32>
    %6 = vector.extract_strided_slice %4 {offsets = [1, 0], sizes = [1, 32], strides = [1, 1]} : vector<6x32xf32> to vector<1x32xf32>
    %7 = vector.extract_strided_slice %4 {offsets = [2, 0], sizes = [1, 32], strides = [1, 1]} : vector<6x32xf32> to vector<1x32xf32>
    %8 = vector.extract_strided_slice %4 {offsets = [3, 0], sizes = [1, 32], strides = [1, 1]} : vector<6x32xf32> to vector<1x32xf32>
    %9 = vector.extract_strided_slice %4 {offsets = [4, 0], sizes = [1, 32], strides = [1, 1]} : vector<6x32xf32> to vector<1x32xf32>
    %10 = vector.extract_strided_slice %4 {offsets = [5, 0], sizes = [1, 32], strides = [1, 1]} : vector<6x32xf32> to vector<1x32xf32>
    %cst = arith.constant dense<0.000000e+00> : vector<16xf32>
    %11 = vector.multi_reduction <add>, %1, %cst [1] : vector<16x32xf32> to vector<16xf32>
    %12 = vector.shape_cast %11 : vector<16xf32> to vector<16x1xf32>
    %cst_5 = arith.constant 3.200000e+01 : f32
    %13 = vector.broadcast %cst_5 : f32 to vector<16x1xf32>
    %14 = arith.divf %12, %13 : vector<16x1xf32>
    %15 = vector.broadcast %14 : vector<16x1xf32> to vector<16x32xf32>
    %16 = arith.subf %1, %15 : vector<16x32xf32>
    %17 = arith.mulf %16, %16 : vector<16x32xf32>
    %cst_6 = arith.constant dense<0.000000e+00> : vector<16xf32>
    %18 = vector.multi_reduction <add>, %17, %cst_6 [1] : vector<16x32xf32> to vector<16xf32>
    %19 = vector.shape_cast %18 : vector<16xf32> to vector<16x1xf32>
    %cst_7 = arith.constant 3.200000e+01 : f32
    %20 = vector.broadcast %cst_7 : f32 to vector<16x1xf32>
    %21 = arith.divf %19, %20 : vector<16x1xf32>
    %cst_8 = arith.constant 9.99999974E-6 : f32
    %22 = vector.broadcast %cst_8 : f32 to vector<16x1xf32>
    %23 = arith.addf %21, %22 : vector<16x1xf32>
    %24 = math.rsqrt %23 : vector<16x1xf32>
    %25 = vector.broadcast %24 : vector<16x1xf32> to vector<16x32xf32>
    %26 = arith.mulf %16, %25 : vector<16x32xf32>
    %27 = vector.broadcast %5 : vector<1x32xf32> to vector<16x32xf32>
    %28 = arith.mulf %26, %27 : vector<16x32xf32>
    %29 = vector.broadcast %6 : vector<1x32xf32> to vector<16x32xf32>
    %30 = arith.addf %28, %29 : vector<16x32xf32>
    %31 = arith.truncf %30 : vector<16x32xf32> to vector<16x32xbf16>
    %c0_9 = arith.constant 0 : index
    %c0_10 = arith.constant 0 : index
    %c0_11 = arith.constant 0 : index
    %32 = vector.load %arg3[%c0_9, %c0_10, %c0_11] : memref<3x32x96xbf16, #tpu.memory_space<vmem>>, vector<1x32x96xbf16>
    %33 = vector.shape_cast %32 : vector<1x32x96xbf16> to vector<32x96xbf16>
    %cst_12 = arith.constant dense<0.000000e+00> : vector<16x96xf32>
    %34 = tpu.matmul %31, %33, %cst_12 {dimension_numbers = #tpu.dot_dimension_numbers<[1], [0], [0], [1], [0, 0, 1, 1], [], []>} : vector<16x32xbf16>, vector<32x96xbf16>, vector<16x96xf32> -> vector<16x96xf32>
    %35 = vector.extract_strided_slice %34 {offsets = [0, 0], sizes = [16, 8], strides = [1, 1]} : vector<16x96xf32> to vector<16x8xf32>
    %36 = vector.shape_cast %35 : vector<16x8xf32> to vector<2x8x8xf32>
    %37 = arith.truncf %36 : vector<2x8x8xf32> to vector<2x8x8xbf16>
    %38 = vector.extract_strided_slice %34 {offsets = [0, 32], sizes = [16, 8], strides = [1, 1]} : vector<16x96xf32> to vector<16x8xf32>
    %39 = vector.shape_cast %38 : vector<16x8xf32> to vector<2x8x8xf32>
    %40 = arith.truncf %39 : vector<2x8x8xf32> to vector<2x8x8xbf16>
    %41 = vector.extract_strided_slice %34 {offsets = [0, 64], sizes = [16, 8], strides = [1, 1]} : vector<16x96xf32> to vector<16x8xf32>
    %42 = vector.shape_cast %41 : vector<16x8xf32> to vector<2x8x8xf32>
    %43 = arith.truncf %42 : vector<2x8x8xf32> to vector<2x8x8xbf16>
    "tpu.trace_start"() <{level = 10 : i32, message = "bqe,bke->bqk"}> : () -> ()
    %cst_13 = arith.constant dense<0.000000e+00> : vector<2x8x8xf32>
    %44 = tpu.matmul %37, %40, %cst_13 {dimension_numbers = #tpu.dot_dimension_numbers<[2], [2], [1], [1], [0, 0, 0, 1, 1, 1], [0], [0]>} : vector<2x8x8xbf16>, vector<2x8x8xbf16>, vector<2x8x8xf32> -> vector<2x8x8xf32>
    "tpu.trace_stop"() : () -> ()
    %cst_14 = arith.constant 0.353553385 : f32
    %45 = vector.broadcast %cst_14 : f32 to vector<2x8x8xf32>
    %46 = arith.mulf %44, %45 : vector<2x8x8xf32>
    %cst_15 = arith.constant dense<0xFF800000> : vector<2x8xf32>
    %47 = vector.multi_reduction <maximumf>, %46, %cst_15 [2] : vector<2x8x8xf32> to vector<2x8xf32>
    %48 = vector.shape_cast %47 : vector<2x8xf32> to vector<2x8x1xf32>
    %49 = vector.broadcast %48 : vector<2x8x1xf32> to vector<2x8x8xf32>
    %50 = arith.subf %46, %49 : vector<2x8x8xf32>
    %51 = math.exp %50 : vector<2x8x8xf32>
    %cst_16 = arith.constant dense<0.000000e+00> : vector<2x8xf32>
    %52 = vector.multi_reduction <add>, %51, %cst_16 [2] : vector<2x8x8xf32> to vector<2x8xf32>
    %53 = vector.shape_cast %52 : vector<2x8xf32> to vector<2x8x1xf32>
    %54 = vector.broadcast %53 : vector<2x8x1xf32> to vector<2x8x8xf32>
    %55 = arith.divf %51, %54 : vector<2x8x8xf32>
    %56 = arith.truncf %55 : vector<2x8x8xf32> to vector<2x8x8xbf16>
    "tpu.trace_start"() <{level = 10 : i32, message = "bqk,bke->bqe"}> : () -> ()
    %cst_17 = arith.constant dense<0.000000e+00> : vector<2x8x8xf32>
    %57 = tpu.matmul %56, %43, %cst_17 {dimension_numbers = #tpu.dot_dimension_numbers<[2], [1], [1], [2], [0, 0, 0, 1, 1, 2], [0], [0]>} : vector<2x8x8xbf16>, vector<2x8x8xbf16>, vector<2x8x8xf32> -> vector<2x8x8xf32>
    "tpu.trace_stop"() : () -> ()
    %58 = arith.truncf %57 : vector<2x8x8xf32> to vector<2x8x8xbf16>
    %59 = vector.extract_strided_slice %34 {offsets = [0, 8], sizes = [16, 8], strides = [1, 1]} : vector<16x96xf32> to vector<16x8xf32>
    %60 = vector.shape_cast %59 : vector<16x8xf32> to vector<2x8x8xf32>
    %61 = arith.truncf %60 : vector<2x8x8xf32> to vector<2x8x8xbf16>
    %62 = vector.extract_strided_slice %34 {offsets = [0, 40], sizes = [16, 8], strides = [1, 1]} : vector<16x96xf32> to vector<16x8xf32>
    %63 = vector.shape_cast %62 : vector<16x8xf32> to vector<2x8x8xf32>
    %64 = arith.truncf %63 : vector<2x8x8xf32> to vector<2x8x8xbf16>
    %65 = vector.extract_strided_slice %34 {offsets = [0, 72], sizes = [16, 8], strides = [1, 1]} : vector<16x96xf32> to vector<16x8xf32>
    %66 = vector.shape_cast %65 : vector<16x8xf32> to vector<2x8x8xf32>
    %67 = arith.truncf %66 : vector<2x8x8xf32> to vector<2x8x8xbf16>
    "tpu.trace_start"() <{level = 10 : i32, message = "bqe,bke->bqk"}> : () -> ()
    %cst_18 = arith.constant dense<0.000000e+00> : vector<2x8x8xf32>
    %68 = tpu.matmul %61, %64, %cst_18 {dimension_numbers = #tpu.dot_dimension_numbers<[2], [2], [1], [1], [0, 0, 0, 1, 1, 1], [0], [0]>} : vector<2x8x8xbf16>, vector<2x8x8xbf16>, vector<2x8x8xf32> -> vector<2x8x8xf32>
    "tpu.trace_stop"() : () -> ()
    %cst_19 = arith.constant 0.353553385 : f32
    %69 = vector.broadcast %cst_19 : f32 to vector<2x8x8xf32>
    %70 = arith.mulf %68, %69 : vector<2x8x8xf32>
    %cst_20 = arith.constant dense<0xFF800000> : vector<2x8xf32>
    %71 = vector.multi_reduction <maximumf>, %70, %cst_20 [2] : vector<2x8x8xf32> to vector<2x8xf32>
    %72 = vector.shape_cast %71 : vector<2x8xf32> to vector<2x8x1xf32>
    %73 = vector.broadcast %72 : vector<2x8x1xf32> to vector<2x8x8xf32>
    %74 = arith.subf %70, %73 : vector<2x8x8xf32>
    %75 = math.exp %74 : vector<2x8x8xf32>
    %cst_21 = arith.constant dense<0.000000e+00> : vector<2x8xf32>
    %76 = vector.multi_reduction <add>, %75, %cst_21 [2] : vector<2x8x8xf32> to vector<2x8xf32>
    %77 = vector.shape_cast %76 : vector<2x8xf32> to vector<2x8x1xf32>
    %78 = vector.broadcast %77 : vector<2x8x1xf32> to vector<2x8x8xf32>
    %79 = arith.divf %75, %78 : vector<2x8x8xf32>
    %80 = arith.truncf %79 : vector<2x8x8xf32> to vector<2x8x8xbf16>
    "tpu.trace_start"() <{level = 10 : i32, message = "bqk,bke->bqe"}> : () -> ()
    %cst_22 = arith.constant dense<0.000000e+00> : vector<2x8x8xf32>
    %81 = tpu.matmul %80, %67, %cst_22 {dimension_numbers = #tpu.dot_dimension_numbers<[2], [1], [1], [2], [0, 0, 0, 1, 1, 2], [0], [0]>} : vector<2x8x8xbf16>, vector<2x8x8xbf16>, vector<2x8x8xf32> -> vector<2x8x8xf32>
    "tpu.trace_stop"() : () -> ()
    %82 = arith.truncf %81 : vector<2x8x8xf32> to vector<2x8x8xbf16>
    %83 = vector.extract_strided_slice %34 {offsets = [0, 16], sizes = [16, 8], strides = [1, 1]} : vector<16x96xf32> to vector<16x8xf32>
    %84 = vector.shape_cast %83 : vector<16x8xf32> to vector<2x8x8xf32>
    %85 = arith.truncf %84 : vector<2x8x8xf32> to vector<2x8x8xbf16>
    %86 = vector.extract_strided_slice %34 {offsets = [0, 48], sizes = [16, 8], strides = [1, 1]} : vector<16x96xf32> to vector<16x8xf32>
    %87 = vector.shape_cast %86 : vector<16x8xf32> to vector<2x8x8xf32>
    %88 = arith.truncf %87 : vector<2x8x8xf32> to vector<2x8x8xbf16>
    %89 = vector.extract_strided_slice %34 {offsets = [0, 80], sizes = [16, 8], strides = [1, 1]} : vector<16x96xf32> to vector<16x8xf32>
    %90 = vector.shape_cast %89 : vector<16x8xf32> to vector<2x8x8xf32>
    %91 = arith.truncf %90 : vector<2x8x8xf32> to vector<2x8x8xbf16>
    "tpu.trace_start"() <{level = 10 : i32, message = "bqe,bke->bqk"}> : () -> ()
    %cst_23 = arith.constant dense<0.000000e+00> : vector<2x8x8xf32>
    %92 = tpu.matmul %85, %88, %cst_23 {dimension_numbers = #tpu.dot_dimension_numbers<[2], [2], [1], [1], [0, 0, 0, 1, 1, 1], [0], [0]>} : vector<2x8x8xbf16>, vector<2x8x8xbf16>, vector<2x8x8xf32> -> vector<2x8x8xf32>
    "tpu.trace_stop"() : () -> ()
    %cst_24 = arith.constant 0.353553385 : f32
    %93 = vector.broadcast %cst_24 : f32 to vector<2x8x8xf32>
    %94 = arith.mulf %92, %93 : vector<2x8x8xf32>
    %cst_25 = arith.constant dense<0xFF800000> : vector<2x8xf32>
    %95 = vector.multi_reduction <maximumf>, %94, %cst_25 [2] : vector<2x8x8xf32> to vector<2x8xf32>
    %96 = vector.shape_cast %95 : vector<2x8xf32> to vector<2x8x1xf32>
    %97 = vector.broadcast %96 : vector<2x8x1xf32> to vector<2x8x8xf32>
    %98 = arith.subf %94, %97 : vector<2x8x8xf32>
    %99 = math.exp %98 : vector<2x8x8xf32>
    %cst_26 = arith.constant dense<0.000000e+00> : vector<2x8xf32>
    %100 = vector.multi_reduction <add>, %99, %cst_26 [2] : vector<2x8x8xf32> to vector<2x8xf32>
    %101 = vector.shape_cast %100 : vector<2x8xf32> to vector<2x8x1xf32>
    %102 = vector.broadcast %101 : vector<2x8x1xf32> to vector<2x8x8xf32>
    %103 = arith.divf %99, %102 : vector<2x8x8xf32>
    %104 = arith.truncf %103 : vector<2x8x8xf32> to vector<2x8x8xbf16>
    "tpu.trace_start"() <{level = 10 : i32, message = "bqk,bke->bqe"}> : () -> ()
    %cst_27 = arith.constant dense<0.000000e+00> : vector<2x8x8xf32>
    %105 = tpu.matmul %104, %91, %cst_27 {dimension_numbers = #tpu.dot_dimension_numbers<[2], [1], [1], [2], [0, 0, 0, 1, 1, 2], [0], [0]>} : vector<2x8x8xbf16>, vector<2x8x8xbf16>, vector<2x8x8xf32> -> vector<2x8x8xf32>
    "tpu.trace_stop"() : () -> ()
    %106 = arith.truncf %105 : vector<2x8x8xf32> to vector<2x8x8xbf16>
    %107 = vector.extract_strided_slice %34 {offsets = [0, 24], sizes = [16, 8], strides = [1, 1]} : vector<16x96xf32> to vector<16x8xf32>
    %108 = vector.shape_cast %107 : vector<16x8xf32> to vector<2x8x8xf32>
    %109 = arith.truncf %108 : vector<2x8x8xf32> to vector<2x8x8xbf16>
    %110 = vector.extract_strided_slice %34 {offsets = [0, 56], sizes = [16, 8], strides = [1, 1]} : vector<16x96xf32> to vector<16x8xf32>
    %111 = vector.shape_cast %110 : vector<16x8xf32> to vector<2x8x8xf32>
    %112 = arith.truncf %111 : vector<2x8x8xf32> to vector<2x8x8xbf16>
    %113 = vector.extract_strided_slice %34 {offsets = [0, 88], sizes = [16, 8], strides = [1, 1]} : vector<16x96xf32> to vector<16x8xf32>
    %114 = vector.shape_cast %113 : vector<16x8xf32> to vector<2x8x8xf32>
    %115 = arith.truncf %114 : vector<2x8x8xf32> to vector<2x8x8xbf16>
    "tpu.trace_start"() <{level = 10 : i32, message = "bqe,bke->bqk"}> : () -> ()
    %cst_28 = arith.constant dense<0.000000e+00> : vector<2x8x8xf32>
    %116 = tpu.matmul %109, %112, %cst_28 {dimension_numbers = #tpu.dot_dimension_numbers<[2], [2], [1], [1], [0, 0, 0, 1, 1, 1], [0], [0]>} : vector<2x8x8xbf16>, vector<2x8x8xbf16>, vector<2x8x8xf32> -> vector<2x8x8xf32>
    "tpu.trace_stop"() : () -> ()
    %cst_29 = arith.constant 0.353553385 : f32
    %117 = vector.broadcast %cst_29 : f32 to vector<2x8x8xf32>
    %118 = arith.mulf %116, %117 : vector<2x8x8xf32>
    %cst_30 = arith.constant dense<0xFF800000> : vector<2x8xf32>
    %119 = vector.multi_reduction <maximumf>, %118, %cst_30 [2] : vector<2x8x8xf32> to vector<2x8xf32>
    %120 = vector.shape_cast %119 : vector<2x8xf32> to vector<2x8x1xf32>
    %121 = vector.broadcast %120 : vector<2x8x1xf32> to vector<2x8x8xf32>
    %122 = arith.subf %118, %121 : vector<2x8x8xf32>
    %123 = math.exp %122 : vector<2x8x8xf32>
    %cst_31 = arith.constant dense<0.000000e+00> : vector<2x8xf32>
    %124 = vector.multi_reduction <add>, %123, %cst_31 [2] : vector<2x8x8xf32> to vector<2x8xf32>
    %125 = vector.shape_cast %124 : vector<2x8xf32> to vector<2x8x1xf32>
    %126 = vector.broadcast %125 : vector<2x8x1xf32> to vector<2x8x8xf32>
    %127 = arith.divf %123, %126 : vector<2x8x8xf32>
    %128 = arith.truncf %127 : vector<2x8x8xf32> to vector<2x8x8xbf16>
    "tpu.trace_start"() <{level = 10 : i32, message = "bqk,bke->bqe"}> : () -> ()
    %cst_32 = arith.constant dense<0.000000e+00> : vector<2x8x8xf32>
    %129 = tpu.matmul %128, %115, %cst_32 {dimension_numbers = #tpu.dot_dimension_numbers<[2], [1], [1], [2], [0, 0, 0, 1, 1, 2], [0], [0]>} : vector<2x8x8xbf16>, vector<2x8x8xbf16>, vector<2x8x8xf32> -> vector<2x8x8xf32>
    "tpu.trace_stop"() : () -> ()
    %130 = arith.truncf %129 : vector<2x8x8xf32> to vector<2x8x8xbf16>
    %131 = tpu.concatenate %58, %82, %106, %130 in 2 : vector<2x8x8xbf16>, vector<2x8x8xbf16>, vector<2x8x8xbf16>, vector<2x8x8xbf16> -> vector<2x8x32xbf16>
    %132 = vector.shape_cast %131 : vector<2x8x32xbf16> to vector<16x32xbf16>
    %c0_33 = arith.constant 0 : index
    %c0_34 = arith.constant 0 : index
    %c0_35 = arith.constant 0 : index
    %133 = vector.load %arg4[%c0_33, %c0_34, %c0_35] : memref<3x32x32xbf16, #tpu.memory_space<vmem>>, vector<1x32x32xbf16>
    %134 = vector.shape_cast %133 : vector<1x32x32xbf16> to vector<32x32xbf16>
    %cst_36 = arith.constant dense<0.000000e+00> : vector<16x32xf32>
    %135 = tpu.matmul %132, %134, %cst_36 {dimension_numbers = #tpu.dot_dimension_numbers<[1], [0], [0], [1], [0, 0, 1, 1], [], []>} : vector<16x32xbf16>, vector<32x32xbf16>, vector<16x32xf32> -> vector<16x32xf32>
    %136 = arith.addf %1, %135 : vector<16x32xf32>
    %137 = vector.broadcast %7 : vector<1x32xf32> to vector<16x32xf32>
    %138 = arith.addf %136, %137 : vector<16x32xf32>
    %cst_37 = arith.constant dense<0.000000e+00> : vector<16xf32>
    %139 = vector.multi_reduction <add>, %138, %cst_37 [1] : vector<16x32xf32> to vector<16xf32>
    %140 = vector.shape_cast %139 : vector<16xf32> to vector<16x1xf32>
    %cst_38 = arith.constant 3.200000e+01 : f32
    %141 = vector.broadcast %cst_38 : f32 to vector<16x1xf32>
    %142 = arith.divf %140, %141 : vector<16x1xf32>
    %143 = vector.broadcast %142 : vector<16x1xf32> to vector<16x32xf32>
    %144 = arith.subf %138, %143 : vector<16x32xf32>
    %145 = arith.mulf %144, %144 : vector<16x32xf32>
    %cst_39 = arith.constant dense<0.000000e+00> : vector<16xf32>
    %146 = vector.multi_reduction <add>, %145, %cst_39 [1] : vector<16x32xf32> to vector<16xf32>
    %147 = vector.shape_cast %146 : vector<16xf32> to vector<16x1xf32>
    %cst_40 = arith.constant 3.200000e+01 : f32
    %148 = vector.broadcast %cst_40 : f32 to vector<16x1xf32>
    %149 = arith.divf %147, %148 : vector<16x1xf32>
    %cst_41 = arith.constant 9.99999974E-6 : f32
    %150 = vector.broadcast %cst_41 : f32 to vector<16x1xf32>
    %151 = arith.addf %149, %150 : vector<16x1xf32>
    %152 = math.rsqrt %151 : vector<16x1xf32>
    %153 = vector.broadcast %152 : vector<16x1xf32> to vector<16x32xf32>
    %154 = arith.mulf %144, %153 : vector<16x32xf32>
    %155 = vector.broadcast %8 : vector<1x32xf32> to vector<16x32xf32>
    %156 = arith.mulf %154, %155 : vector<16x32xf32>
    %157 = vector.broadcast %9 : vector<1x32xf32> to vector<16x32xf32>
    %158 = arith.addf %156, %157 : vector<16x32xf32>
    %159 = arith.truncf %158 : vector<16x32xf32> to vector<16x32xbf16>
    %c0_42 = arith.constant 0 : index
    %c0_43 = arith.constant 0 : index
    %c0_44 = arith.constant 0 : index
    %160 = vector.load %arg5[%c0_42, %c0_43, %c0_44] : memref<3x32x64xbf16, #tpu.memory_space<vmem>>, vector<1x32x64xbf16>
    %161 = vector.shape_cast %160 : vector<1x32x64xbf16> to vector<32x64xbf16>
    %cst_45 = arith.constant dense<0.000000e+00> : vector<16x64xf32>
    %162 = tpu.matmul %159, %161, %cst_45 {dimension_numbers = #tpu.dot_dimension_numbers<[1], [0], [0], [1], [0, 0, 1, 1], [], []>} : vector<16x32xbf16>, vector<32x64xbf16>, vector<16x64xf32> -> vector<16x64xf32>
    %c0_46 = arith.constant 0 : index
    %c0_47 = arith.constant 0 : index
    %c0_48 = arith.constant 0 : index
    %163 = vector.load %arg6[%c0_46, %c0_47, %c0_48] : memref<3x1x64xf32, #tpu.memory_space<vmem>>, vector<1x1x64xf32>
    %164 = vector.shape_cast %163 : vector<1x1x64xf32> to vector<1x64xf32>
    %165 = vector.broadcast %164 : vector<1x64xf32> to vector<16x64xf32>
    %166 = arith.addf %162, %165 : vector<16x64xf32>
    %cst_49 = arith.constant 5.000000e-01 : f32
    %167 = vector.broadcast %cst_49 : f32 to vector<16x64xf32>
    %168 = arith.mulf %167, %166 : vector<16x64xf32>
    %cst_50 = arith.constant 0.707106769 : f32
    %169 = vector.broadcast %cst_50 : f32 to vector<16x64xf32>
    %170 = arith.mulf %166, %169 : vector<16x64xf32>
    %cst_51 = arith.constant 0.000000e+00 : f32
    %171 = vector.broadcast %cst_51 : f32 to vector<16x64xf32>
    %172 = arith.cmpf oge, %170, %171 : vector<16x64xf32>
    %cst_52 = arith.constant 1.000000e+00 : f32
    %cst_53 = arith.constant -1.000000e+00 : f32
    %173 = vector.broadcast %cst_52 : f32 to vector<16x64xf32>
    %174 = vector.broadcast %cst_53 : f32 to vector<16x64xf32>
    %175 = arith.select %172, %173, %174 : vector<16x64xi1>, vector<16x64xf32>
    %176 = math.absf %170 : vector<16x64xf32>
    %cst_54 = arith.constant 0.327591091 : f32
    %177 = vector.broadcast %cst_54 : f32 to vector<16x64xf32>
    %178 = arith.mulf %177, %176 : vector<16x64xf32>
    %cst_55 = arith.constant 1.000000e+00 : f32
    %179 = vector.broadcast %cst_55 : f32 to vector<16x64xf32>
    %180 = arith.addf %179, %178 : vector<16x64xf32>
    %cst_56 = arith.constant 1.000000e+00 : f32
    %181 = vector.broadcast %cst_56 : f32 to vector<16x64xf32>
    %182 = arith.divf %181, %180 : vector<16x64xf32>
    %cst_57 = arith.constant 1.06140542 : f32
    %183 = vector.broadcast %cst_57 : f32 to vector<16x64xf32>
    %184 = arith.mulf %183, %182 : vector<16x64xf32>
    %cst_58 = arith.constant -1.45315206 : f32
    %185 = vector.broadcast %cst_58 : f32 to vector<16x64xf32>
    %186 = arith.addf %184, %185 : vector<16x64xf32>
    %187 = arith.mulf %186, %182 : vector<16x64xf32>
    %cst_59 = arith.constant 1.42141378 : f32
    %188 = vector.broadcast %cst_59 : f32 to vector<16x64xf32>
    %189 = arith.addf %187, %188 : vector<16x64xf32>
    %190 = arith.mulf %189, %182 : vector<16x64xf32>
    %cst_60 = arith.constant -0.284496725 : f32
    %191 = vector.broadcast %cst_60 : f32 to vector<16x64xf32>
    %192 = arith.addf %190, %191 : vector<16x64xf32>
    %193 = arith.mulf %192, %182 : vector<16x64xf32>
    %cst_61 = arith.constant 0.254829586 : f32
    %194 = vector.broadcast %cst_61 : f32 to vector<16x64xf32>
    %195 = arith.addf %193, %194 : vector<16x64xf32>
    %196 = arith.mulf %195, %182 : vector<16x64xf32>
    %cst_62 = arith.constant 0.000000e+00 : f32
    %197 = vector.broadcast %cst_62 : f32 to vector<16x64xf32>
    %198 = arith.subf %197, %176 : vector<16x64xf32>
    %199 = arith.mulf %198, %176 : vector<16x64xf32>
    %200 = math.exp %199 : vector<16x64xf32>
    %201 = arith.mulf %196, %200 : vector<16x64xf32>
    %cst_63 = arith.constant 1.000000e+00 : f32
    %202 = vector.broadcast %cst_63 : f32 to vector<16x64xf32>
    %203 = arith.subf %202, %201 : vector<16x64xf32>
    %204 = arith.mulf %175, %203 : vector<16x64xf32>
    %cst_64 = arith.constant 1.000000e+00 : f32
    %205 = vector.broadcast %cst_64 : f32 to vector<16x64xf32>
    %206 = arith.addf %205, %204 : vector<16x64xf32>
    %207 = arith.mulf %168, %206 : vector<16x64xf32>
    %208 = arith.truncf %207 : vector<16x64xf32> to vector<16x64xbf16>
    %c0_65 = arith.constant 0 : index
    %c0_66 = arith.constant 0 : index
    %c0_67 = arith.constant 0 : index
    %209 = vector.load %arg7[%c0_65, %c0_66, %c0_67] : memref<3x64x32xbf16, #tpu.memory_space<vmem>>, vector<1x64x32xbf16>
    %210 = vector.shape_cast %209 : vector<1x64x32xbf16> to vector<64x32xbf16>
    %cst_68 = arith.constant dense<0.000000e+00> : vector<16x32xf32>
    %211 = tpu.matmul %208, %210, %cst_68 {dimension_numbers = #tpu.dot_dimension_numbers<[1], [0], [0], [1], [0, 0, 1, 1], [], []>} : vector<16x64xbf16>, vector<64x32xbf16>, vector<16x32xf32> -> vector<16x32xf32>
    %212 = arith.addf %138, %211 : vector<16x32xf32>
    %213 = vector.broadcast %10 : vector<1x32xf32> to vector<16x32xf32>
    %214 = arith.addf %212, %213 : vector<16x32xf32>
    %c1 = arith.constant 1 : index
    %c0_69 = arith.constant 0 : index
    %c0_70 = arith.constant 0 : index
    %215 = vector.load %arg2[%c1, %c0_69, %c0_70] : memref<3x6x32xf32, #tpu.memory_space<vmem>>, vector<1x6x32xf32>
    %216 = vector.shape_cast %215 : vector<1x6x32xf32> to vector<6x32xf32>
    %217 = vector.extract_strided_slice %216 {offsets = [0, 0], sizes = [1, 32], strides = [1, 1]} : vector<6x32xf32> to vector<1x32xf32>
    %218 = vector.extract_strided_slice %216 {offsets = [1, 0], sizes = [1, 32], strides = [1, 1]} : vector<6x32xf32> to vector<1x32xf32>
    %219 = vector.extract_strided_slice %216 {offsets = [2, 0], sizes = [1, 32], strides = [1, 1]} : vector<6x32xf32> to vector<1x32xf32>
    %220 = vector.extract_strided_slice %216 {offsets = [3, 0], sizes = [1, 32], strides = [1, 1]} : vector<6x32xf32> to vector<1x32xf32>
    %221 = vector.extract_strided_slice %216 {offsets = [4, 0], sizes = [1, 32], strides = [1, 1]} : vector<6x32xf32> to vector<1x32xf32>
    %222 = vector.extract_strided_slice %216 {offsets = [5, 0], sizes = [1, 32], strides = [1, 1]} : vector<6x32xf32> to vector<1x32xf32>
    %cst_71 = arith.constant dense<0.000000e+00> : vector<16xf32>
    %223 = vector.multi_reduction <add>, %214, %cst_71 [1] : vector<16x32xf32> to vector<16xf32>
    %224 = vector.shape_cast %223 : vector<16xf32> to vector<16x1xf32>
    %cst_72 = arith.constant 3.200000e+01 : f32
    %225 = vector.broadcast %cst_72 : f32 to vector<16x1xf32>
    %226 = arith.divf %224, %225 : vector<16x1xf32>
    %227 = vector.broadcast %226 : vector<16x1xf32> to vector<16x32xf32>
    %228 = arith.subf %214, %227 : vector<16x32xf32>
    %229 = arith.mulf %228, %228 : vector<16x32xf32>
    %cst_73 = arith.constant dense<0.000000e+00> : vector<16xf32>
    %230 = vector.multi_reduction <add>, %229, %cst_73 [1] : vector<16x32xf32> to vector<16xf32>
    %231 = vector.shape_cast %230 : vector<16xf32> to vector<16x1xf32>
    %cst_74 = arith.constant 3.200000e+01 : f32
    %232 = vector.broadcast %cst_74 : f32 to vector<16x1xf32>
    %233 = arith.divf %231, %232 : vector<16x1xf32>
    %cst_75 = arith.constant 9.99999974E-6 : f32
    %234 = vector.broadcast %cst_75 : f32 to vector<16x1xf32>
    %235 = arith.addf %233, %234 : vector<16x1xf32>
    %236 = math.rsqrt %235 : vector<16x1xf32>
    %237 = vector.broadcast %236 : vector<16x1xf32> to vector<16x32xf32>
    %238 = arith.mulf %228, %237 : vector<16x32xf32>
    %239 = vector.broadcast %217 : vector<1x32xf32> to vector<16x32xf32>
    %240 = arith.mulf %238, %239 : vector<16x32xf32>
    %241 = vector.broadcast %218 : vector<1x32xf32> to vector<16x32xf32>
    %242 = arith.addf %240, %241 : vector<16x32xf32>
    %243 = arith.truncf %242 : vector<16x32xf32> to vector<16x32xbf16>
    %c1_76 = arith.constant 1 : index
    %c0_77 = arith.constant 0 : index
    %c0_78 = arith.constant 0 : index
    %244 = vector.load %arg3[%c1_76, %c0_77, %c0_78] : memref<3x32x96xbf16, #tpu.memory_space<vmem>>, vector<1x32x96xbf16>
    %245 = vector.shape_cast %244 : vector<1x32x96xbf16> to vector<32x96xbf16>
    %cst_79 = arith.constant dense<0.000000e+00> : vector<16x96xf32>
    %246 = tpu.matmul %243, %245, %cst_79 {dimension_numbers = #tpu.dot_dimension_numbers<[1], [0], [0], [1], [0, 0, 1, 1], [], []>} : vector<16x32xbf16>, vector<32x96xbf16>, vector<16x96xf32> -> vector<16x96xf32>
    %247 = vector.extract_strided_slice %246 {offsets = [0, 0], sizes = [16, 8], strides = [1, 1]} : vector<16x96xf32> to vector<16x8xf32>
    %248 = vector.shape_cast %247 : vector<16x8xf32> to vector<2x8x8xf32>
    %249 = arith.truncf %248 : vector<2x8x8xf32> to vector<2x8x8xbf16>
    %250 = vector.extract_strided_slice %246 {offsets = [0, 32], sizes = [16, 8], strides = [1, 1]} : vector<16x96xf32> to vector<16x8xf32>
    %251 = vector.shape_cast %250 : vector<16x8xf32> to vector<2x8x8xf32>
    %252 = arith.truncf %251 : vector<2x8x8xf32> to vector<2x8x8xbf16>
    %253 = vector.extract_strided_slice %246 {offsets = [0, 64], sizes = [16, 8], strides = [1, 1]} : vector<16x96xf32> to vector<16x8xf32>
    %254 = vector.shape_cast %253 : vector<16x8xf32> to vector<2x8x8xf32>
    %255 = arith.truncf %254 : vector<2x8x8xf32> to vector<2x8x8xbf16>
    "tpu.trace_start"() <{level = 10 : i32, message = "bqe,bke->bqk"}> : () -> ()
    %cst_80 = arith.constant dense<0.000000e+00> : vector<2x8x8xf32>
    %256 = tpu.matmul %249, %252, %cst_80 {dimension_numbers = #tpu.dot_dimension_numbers<[2], [2], [1], [1], [0, 0, 0, 1, 1, 1], [0], [0]>} : vector<2x8x8xbf16>, vector<2x8x8xbf16>, vector<2x8x8xf32> -> vector<2x8x8xf32>
    "tpu.trace_stop"() : () -> ()
    %cst_81 = arith.constant 0.353553385 : f32
    %257 = vector.broadcast %cst_81 : f32 to vector<2x8x8xf32>
    %258 = arith.mulf %256, %257 : vector<2x8x8xf32>
    %cst_82 = arith.constant dense<0xFF800000> : vector<2x8xf32>
    %259 = vector.multi_reduction <maximumf>, %258, %cst_82 [2] : vector<2x8x8xf32> to vector<2x8xf32>
    %260 = vector.shape_cast %259 : vector<2x8xf32> to vector<2x8x1xf32>
    %261 = vector.broadcast %260 : vector<2x8x1xf32> to vector<2x8x8xf32>
    %262 = arith.subf %258, %261 : vector<2x8x8xf32>
    %263 = math.exp %262 : vector<2x8x8xf32>
    %cst_83 = arith.constant dense<0.000000e+00> : vector<2x8xf32>
    %264 = vector.multi_reduction <add>, %263, %cst_83 [2] : vector<2x8x8xf32> to vector<2x8xf32>
    %265 = vector.shape_cast %264 : vector<2x8xf32> to vector<2x8x1xf32>
    %266 = vector.broadcast %265 : vector<2x8x1xf32> to vector<2x8x8xf32>
    %267 = arith.divf %263, %266 : vector<2x8x8xf32>
    %268 = arith.truncf %267 : vector<2x8x8xf32> to vector<2x8x8xbf16>
    "tpu.trace_start"() <{level = 10 : i32, message = "bqk,bke->bqe"}> : () -> ()
    %cst_84 = arith.constant dense<0.000000e+00> : vector<2x8x8xf32>
    %269 = tpu.matmul %268, %255, %cst_84 {dimension_numbers = #tpu.dot_dimension_numbers<[2], [1], [1], [2], [0, 0, 0, 1, 1, 2], [0], [0]>} : vector<2x8x8xbf16>, vector<2x8x8xbf16>, vector<2x8x8xf32> -> vector<2x8x8xf32>
    "tpu.trace_stop"() : () -> ()
    %270 = arith.truncf %269 : vector<2x8x8xf32> to vector<2x8x8xbf16>
    %271 = vector.extract_strided_slice %246 {offsets = [0, 8], sizes = [16, 8], strides = [1, 1]} : vector<16x96xf32> to vector<16x8xf32>
    %272 = vector.shape_cast %271 : vector<16x8xf32> to vector<2x8x8xf32>
    %273 = arith.truncf %272 : vector<2x8x8xf32> to vector<2x8x8xbf16>
    %274 = vector.extract_strided_slice %246 {offsets = [0, 40], sizes = [16, 8], strides = [1, 1]} : vector<16x96xf32> to vector<16x8xf32>
    %275 = vector.shape_cast %274 : vector<16x8xf32> to vector<2x8x8xf32>
    %276 = arith.truncf %275 : vector<2x8x8xf32> to vector<2x8x8xbf16>
    %277 = vector.extract_strided_slice %246 {offsets = [0, 72], sizes = [16, 8], strides = [1, 1]} : vector<16x96xf32> to vector<16x8xf32>
    %278 = vector.shape_cast %277 : vector<16x8xf32> to vector<2x8x8xf32>
    %279 = arith.truncf %278 : vector<2x8x8xf32> to vector<2x8x8xbf16>
    "tpu.trace_start"() <{level = 10 : i32, message = "bqe,bke->bqk"}> : () -> ()
    %cst_85 = arith.constant dense<0.000000e+00> : vector<2x8x8xf32>
    %280 = tpu.matmul %273, %276, %cst_85 {dimension_numbers = #tpu.dot_dimension_numbers<[2], [2], [1], [1], [0, 0, 0, 1, 1, 1], [0], [0]>} : vector<2x8x8xbf16>, vector<2x8x8xbf16>, vector<2x8x8xf32> -> vector<2x8x8xf32>
    "tpu.trace_stop"() : () -> ()
    %cst_86 = arith.constant 0.353553385 : f32
    %281 = vector.broadcast %cst_86 : f32 to vector<2x8x8xf32>
    %282 = arith.mulf %280, %281 : vector<2x8x8xf32>
    %cst_87 = arith.constant dense<0xFF800000> : vector<2x8xf32>
    %283 = vector.multi_reduction <maximumf>, %282, %cst_87 [2] : vector<2x8x8xf32> to vector<2x8xf32>
    %284 = vector.shape_cast %283 : vector<2x8xf32> to vector<2x8x1xf32>
    %285 = vector.broadcast %284 : vector<2x8x1xf32> to vector<2x8x8xf32>
    %286 = arith.subf %282, %285 : vector<2x8x8xf32>
    %287 = math.exp %286 : vector<2x8x8xf32>
    %cst_88 = arith.constant dense<0.000000e+00> : vector<2x8xf32>
    %288 = vector.multi_reduction <add>, %287, %cst_88 [2] : vector<2x8x8xf32> to vector<2x8xf32>
    %289 = vector.shape_cast %288 : vector<2x8xf32> to vector<2x8x1xf32>
    %290 = vector.broadcast %289 : vector<2x8x1xf32> to vector<2x8x8xf32>
    %291 = arith.divf %287, %290 : vector<2x8x8xf32>
    %292 = arith.truncf %291 : vector<2x8x8xf32> to vector<2x8x8xbf16>
    "tpu.trace_start"() <{level = 10 : i32, message = "bqk,bke->bqe"}> : () -> ()
    %cst_89 = arith.constant dense<0.000000e+00> : vector<2x8x8xf32>
    %293 = tpu.matmul %292, %279, %cst_89 {dimension_numbers = #tpu.dot_dimension_numbers<[2], [1], [1], [2], [0, 0, 0, 1, 1, 2], [0], [0]>} : vector<2x8x8xbf16>, vector<2x8x8xbf16>, vector<2x8x8xf32> -> vector<2x8x8xf32>
    "tpu.trace_stop"() : () -> ()
    %294 = arith.truncf %293 : vector<2x8x8xf32> to vector<2x8x8xbf16>
    %295 = vector.extract_strided_slice %246 {offsets = [0, 16], sizes = [16, 8], strides = [1, 1]} : vector<16x96xf32> to vector<16x8xf32>
    %296 = vector.shape_cast %295 : vector<16x8xf32> to vector<2x8x8xf32>
    %297 = arith.truncf %296 : vector<2x8x8xf32> to vector<2x8x8xbf16>
    %298 = vector.extract_strided_slice %246 {offsets = [0, 48], sizes = [16, 8], strides = [1, 1]} : vector<16x96xf32> to vector<16x8xf32>
    %299 = vector.shape_cast %298 : vector<16x8xf32> to vector<2x8x8xf32>
    %300 = arith.truncf %299 : vector<2x8x8xf32> to vector<2x8x8xbf16>
    %301 = vector.extract_strided_slice %246 {offsets = [0, 80], sizes = [16, 8], strides = [1, 1]} : vector<16x96xf32> to vector<16x8xf32>
    %302 = vector.shape_cast %301 : vector<16x8xf32> to vector<2x8x8xf32>
    %303 = arith.truncf %302 : vector<2x8x8xf32> to vector<2x8x8xbf16>
    "tpu.trace_start"() <{level = 10 : i32, message = "bqe,bke->bqk"}> : () -> ()
    %cst_90 = arith.constant dense<0.000000e+00> : vector<2x8x8xf32>
    %304 = tpu.matmul %297, %300, %cst_90 {dimension_numbers = #tpu.dot_dimension_numbers<[2], [2], [1], [1], [0, 0, 0, 1, 1, 1], [0], [0]>} : vector<2x8x8xbf16>, vector<2x8x8xbf16>, vector<2x8x8xf32> -> vector<2x8x8xf32>
    "tpu.trace_stop"() : () -> ()
    %cst_91 = arith.constant 0.353553385 : f32
    %305 = vector.broadcast %cst_91 : f32 to vector<2x8x8xf32>
    %306 = arith.mulf %304, %305 : vector<2x8x8xf32>
    %cst_92 = arith.constant dense<0xFF800000> : vector<2x8xf32>
    %307 = vector.multi_reduction <maximumf>, %306, %cst_92 [2] : vector<2x8x8xf32> to vector<2x8xf32>
    %308 = vector.shape_cast %307 : vector<2x8xf32> to vector<2x8x1xf32>
    %309 = vector.broadcast %308 : vector<2x8x1xf32> to vector<2x8x8xf32>
    %310 = arith.subf %306, %309 : vector<2x8x8xf32>
    %311 = math.exp %310 : vector<2x8x8xf32>
    %cst_93 = arith.constant dense<0.000000e+00> : vector<2x8xf32>
    %312 = vector.multi_reduction <add>, %311, %cst_93 [2] : vector<2x8x8xf32> to vector<2x8xf32>
    %313 = vector.shape_cast %312 : vector<2x8xf32> to vector<2x8x1xf32>
    %314 = vector.broadcast %313 : vector<2x8x1xf32> to vector<2x8x8xf32>
    %315 = arith.divf %311, %314 : vector<2x8x8xf32>
    %316 = arith.truncf %315 : vector<2x8x8xf32> to vector<2x8x8xbf16>
    "tpu.trace_start"() <{level = 10 : i32, message = "bqk,bke->bqe"}> : () -> ()
    %cst_94 = arith.constant dense<0.000000e+00> : vector<2x8x8xf32>
    %317 = tpu.matmul %316, %303, %cst_94 {dimension_numbers = #tpu.dot_dimension_numbers<[2], [1], [1], [2], [0, 0, 0, 1, 1, 2], [0], [0]>} : vector<2x8x8xbf16>, vector<2x8x8xbf16>, vector<2x8x8xf32> -> vector<2x8x8xf32>
    "tpu.trace_stop"() : () -> ()
    %318 = arith.truncf %317 : vector<2x8x8xf32> to vector<2x8x8xbf16>
    %319 = vector.extract_strided_slice %246 {offsets = [0, 24], sizes = [16, 8], strides = [1, 1]} : vector<16x96xf32> to vector<16x8xf32>
    %320 = vector.shape_cast %319 : vector<16x8xf32> to vector<2x8x8xf32>
    %321 = arith.truncf %320 : vector<2x8x8xf32> to vector<2x8x8xbf16>
    %322 = vector.extract_strided_slice %246 {offsets = [0, 56], sizes = [16, 8], strides = [1, 1]} : vector<16x96xf32> to vector<16x8xf32>
    %323 = vector.shape_cast %322 : vector<16x8xf32> to vector<2x8x8xf32>
    %324 = arith.truncf %323 : vector<2x8x8xf32> to vector<2x8x8xbf16>
    %325 = vector.extract_strided_slice %246 {offsets = [0, 88], sizes = [16, 8], strides = [1, 1]} : vector<16x96xf32> to vector<16x8xf32>
    %326 = vector.shape_cast %325 : vector<16x8xf32> to vector<2x8x8xf32>
    %327 = arith.truncf %326 : vector<2x8x8xf32> to vector<2x8x8xbf16>
    "tpu.trace_start"() <{level = 10 : i32, message = "bqe,bke->bqk"}> : () -> ()
    %cst_95 = arith.constant dense<0.000000e+00> : vector<2x8x8xf32>
    %328 = tpu.matmul %321, %324, %cst_95 {dimension_numbers = #tpu.dot_dimension_numbers<[2], [2], [1], [1], [0, 0, 0, 1, 1, 1], [0], [0]>} : vector<2x8x8xbf16>, vector<2x8x8xbf16>, vector<2x8x8xf32> -> vector<2x8x8xf32>
    "tpu.trace_stop"() : () -> ()
    %cst_96 = arith.constant 0.353553385 : f32
    %329 = vector.broadcast %cst_96 : f32 to vector<2x8x8xf32>
    %330 = arith.mulf %328, %329 : vector<2x8x8xf32>
    %cst_97 = arith.constant dense<0xFF800000> : vector<2x8xf32>
    %331 = vector.multi_reduction <maximumf>, %330, %cst_97 [2] : vector<2x8x8xf32> to vector<2x8xf32>
    %332 = vector.shape_cast %331 : vector<2x8xf32> to vector<2x8x1xf32>
    %333 = vector.broadcast %332 : vector<2x8x1xf32> to vector<2x8x8xf32>
    %334 = arith.subf %330, %333 : vector<2x8x8xf32>
    %335 = math.exp %334 : vector<2x8x8xf32>
    %cst_98 = arith.constant dense<0.000000e+00> : vector<2x8xf32>
    %336 = vector.multi_reduction <add>, %335, %cst_98 [2] : vector<2x8x8xf32> to vector<2x8xf32>
    %337 = vector.shape_cast %336 : vector<2x8xf32> to vector<2x8x1xf32>
    %338 = vector.broadcast %337 : vector<2x8x1xf32> to vector<2x8x8xf32>
    %339 = arith.divf %335, %338 : vector<2x8x8xf32>
    %340 = arith.truncf %339 : vector<2x8x8xf32> to vector<2x8x8xbf16>
    "tpu.trace_start"() <{level = 10 : i32, message = "bqk,bke->bqe"}> : () -> ()
    %cst_99 = arith.constant dense<0.000000e+00> : vector<2x8x8xf32>
    %341 = tpu.matmul %340, %327, %cst_99 {dimension_numbers = #tpu.dot_dimension_numbers<[2], [1], [1], [2], [0, 0, 0, 1, 1, 2], [0], [0]>} : vector<2x8x8xbf16>, vector<2x8x8xbf16>, vector<2x8x8xf32> -> vector<2x8x8xf32>
    "tpu.trace_stop"() : () -> ()
    %342 = arith.truncf %341 : vector<2x8x8xf32> to vector<2x8x8xbf16>
    %343 = tpu.concatenate %270, %294, %318, %342 in 2 : vector<2x8x8xbf16>, vector<2x8x8xbf16>, vector<2x8x8xbf16>, vector<2x8x8xbf16> -> vector<2x8x32xbf16>
    %344 = vector.shape_cast %343 : vector<2x8x32xbf16> to vector<16x32xbf16>
    %c1_100 = arith.constant 1 : index
    %c0_101 = arith.constant 0 : index
    %c0_102 = arith.constant 0 : index
    %345 = vector.load %arg4[%c1_100, %c0_101, %c0_102] : memref<3x32x32xbf16, #tpu.memory_space<vmem>>, vector<1x32x32xbf16>
    %346 = vector.shape_cast %345 : vector<1x32x32xbf16> to vector<32x32xbf16>
    %cst_103 = arith.constant dense<0.000000e+00> : vector<16x32xf32>
    %347 = tpu.matmul %344, %346, %cst_103 {dimension_numbers = #tpu.dot_dimension_numbers<[1], [0], [0], [1], [0, 0, 1, 1], [], []>} : vector<16x32xbf16>, vector<32x32xbf16>, vector<16x32xf32> -> vector<16x32xf32>
    %348 = arith.addf %214, %347 : vector<16x32xf32>
    %349 = vector.broadcast %219 : vector<1x32xf32> to vector<16x32xf32>
    %350 = arith.addf %348, %349 : vector<16x32xf32>
    %cst_104 = arith.constant dense<0.000000e+00> : vector<16xf32>
    %351 = vector.multi_reduction <add>, %350, %cst_104 [1] : vector<16x32xf32> to vector<16xf32>
    %352 = vector.shape_cast %351 : vector<16xf32> to vector<16x1xf32>
    %cst_105 = arith.constant 3.200000e+01 : f32
    %353 = vector.broadcast %cst_105 : f32 to vector<16x1xf32>
    %354 = arith.divf %352, %353 : vector<16x1xf32>
    %355 = vector.broadcast %354 : vector<16x1xf32> to vector<16x32xf32>
    %356 = arith.subf %350, %355 : vector<16x32xf32>
    %357 = arith.mulf %356, %356 : vector<16x32xf32>
    %cst_106 = arith.constant dense<0.000000e+00> : vector<16xf32>
    %358 = vector.multi_reduction <add>, %357, %cst_106 [1] : vector<16x32xf32> to vector<16xf32>
    %359 = vector.shape_cast %358 : vector<16xf32> to vector<16x1xf32>
    %cst_107 = arith.constant 3.200000e+01 : f32
    %360 = vector.broadcast %cst_107 : f32 to vector<16x1xf32>
    %361 = arith.divf %359, %360 : vector<16x1xf32>
    %cst_108 = arith.constant 9.99999974E-6 : f32
    %362 = vector.broadcast %cst_108 : f32 to vector<16x1xf32>
    %363 = arith.addf %361, %362 : vector<16x1xf32>
    %364 = math.rsqrt %363 : vector<16x1xf32>
    %365 = vector.broadcast %364 : vector<16x1xf32> to vector<16x32xf32>
    %366 = arith.mulf %356, %365 : vector<16x32xf32>
    %367 = vector.broadcast %220 : vector<1x32xf32> to vector<16x32xf32>
    %368 = arith.mulf %366, %367 : vector<16x32xf32>
    %369 = vector.broadcast %221 : vector<1x32xf32> to vector<16x32xf32>
    %370 = arith.addf %368, %369 : vector<16x32xf32>
    %371 = arith.truncf %370 : vector<16x32xf32> to vector<16x32xbf16>
    %c1_109 = arith.constant 1 : index
    %c0_110 = arith.constant 0 : index
    %c0_111 = arith.constant 0 : index
    %372 = vector.load %arg5[%c1_109, %c0_110, %c0_111] : memref<3x32x64xbf16, #tpu.memory_space<vmem>>, vector<1x32x64xbf16>
    %373 = vector.shape_cast %372 : vector<1x32x64xbf16> to vector<32x64xbf16>
    %cst_112 = arith.constant dense<0.000000e+00> : vector<16x64xf32>
    %374 = tpu.matmul %371, %373, %cst_112 {dimension_numbers = #tpu.dot_dimension_numbers<[1], [0], [0], [1], [0, 0, 1, 1], [], []>} : vector<16x32xbf16>, vector<32x64xbf16>, vector<16x64xf32> -> vector<16x64xf32>
    %c1_113 = arith.constant 1 : index
    %c0_114 = arith.constant 0 : index
    %c0_115 = arith.constant 0 : index
    %375 = vector.load %arg6[%c1_113, %c0_114, %c0_115] : memref<3x1x64xf32, #tpu.memory_space<vmem>>, vector<1x1x64xf32>
    %376 = vector.shape_cast %375 : vector<1x1x64xf32> to vector<1x64xf32>
    %377 = vector.broadcast %376 : vector<1x64xf32> to vector<16x64xf32>
    %378 = arith.addf %374, %377 : vector<16x64xf32>
    %cst_116 = arith.constant 5.000000e-01 : f32
    %379 = vector.broadcast %cst_116 : f32 to vector<16x64xf32>
    %380 = arith.mulf %379, %378 : vector<16x64xf32>
    %cst_117 = arith.constant 0.707106769 : f32
    %381 = vector.broadcast %cst_117 : f32 to vector<16x64xf32>
    %382 = arith.mulf %378, %381 : vector<16x64xf32>
    %cst_118 = arith.constant 0.000000e+00 : f32
    %383 = vector.broadcast %cst_118 : f32 to vector<16x64xf32>
    %384 = arith.cmpf oge, %382, %383 : vector<16x64xf32>
    %cst_119 = arith.constant 1.000000e+00 : f32
    %cst_120 = arith.constant -1.000000e+00 : f32
    %385 = vector.broadcast %cst_119 : f32 to vector<16x64xf32>
    %386 = vector.broadcast %cst_120 : f32 to vector<16x64xf32>
    %387 = arith.select %384, %385, %386 : vector<16x64xi1>, vector<16x64xf32>
    %388 = math.absf %382 : vector<16x64xf32>
    %cst_121 = arith.constant 0.327591091 : f32
    %389 = vector.broadcast %cst_121 : f32 to vector<16x64xf32>
    %390 = arith.mulf %389, %388 : vector<16x64xf32>
    %cst_122 = arith.constant 1.000000e+00 : f32
    %391 = vector.broadcast %cst_122 : f32 to vector<16x64xf32>
    %392 = arith.addf %391, %390 : vector<16x64xf32>
    %cst_123 = arith.constant 1.000000e+00 : f32
    %393 = vector.broadcast %cst_123 : f32 to vector<16x64xf32>
    %394 = arith.divf %393, %392 : vector<16x64xf32>
    %cst_124 = arith.constant 1.06140542 : f32
    %395 = vector.broadcast %cst_124 : f32 to vector<16x64xf32>
    %396 = arith.mulf %395, %394 : vector<16x64xf32>
    %cst_125 = arith.constant -1.45315206 : f32
    %397 = vector.broadcast %cst_125 : f32 to vector<16x64xf32>
    %398 = arith.addf %396, %397 : vector<16x64xf32>
    %399 = arith.mulf %398, %394 : vector<16x64xf32>
    %cst_126 = arith.constant 1.42141378 : f32
    %400 = vector.broadcast %cst_126 : f32 to vector<16x64xf32>
    %401 = arith.addf %399, %400 : vector<16x64xf32>
    %402 = arith.mulf %401, %394 : vector<16x64xf32>
    %cst_127 = arith.constant -0.284496725 : f32
    %403 = vector.broadcast %cst_127 : f32 to vector<16x64xf32>
    %404 = arith.addf %402, %403 : vector<16x64xf32>
    %405 = arith.mulf %404, %394 : vector<16x64xf32>
    %cst_128 = arith.constant 0.254829586 : f32
    %406 = vector.broadcast %cst_128 : f32 to vector<16x64xf32>
    %407 = arith.addf %405, %406 : vector<16x64xf32>
    %408 = arith.mulf %407, %394 : vector<16x64xf32>
    %cst_129 = arith.constant 0.000000e+00 : f32
    %409 = vector.broadcast %cst_129 : f32 to vector<16x64xf32>
    %410 = arith.subf %409, %388 : vector<16x64xf32>
    %411 = arith.mulf %410, %388 : vector<16x64xf32>
    %412 = math.exp %411 : vector<16x64xf32>
    %413 = arith.mulf %408, %412 : vector<16x64xf32>
    %cst_130 = arith.constant 1.000000e+00 : f32
    %414 = vector.broadcast %cst_130 : f32 to vector<16x64xf32>
    %415 = arith.subf %414, %413 : vector<16x64xf32>
    %416 = arith.mulf %387, %415 : vector<16x64xf32>
    %cst_131 = arith.constant 1.000000e+00 : f32
    %417 = vector.broadcast %cst_131 : f32 to vector<16x64xf32>
    %418 = arith.addf %417, %416 : vector<16x64xf32>
    %419 = arith.mulf %380, %418 : vector<16x64xf32>
    %420 = arith.truncf %419 : vector<16x64xf32> to vector<16x64xbf16>
    %c1_132 = arith.constant 1 : index
    %c0_133 = arith.constant 0 : index
    %c0_134 = arith.constant 0 : index
    %421 = vector.load %arg7[%c1_132, %c0_133, %c0_134] : memref<3x64x32xbf16, #tpu.memory_space<vmem>>, vector<1x64x32xbf16>
    %422 = vector.shape_cast %421 : vector<1x64x32xbf16> to vector<64x32xbf16>
    %cst_135 = arith.constant dense<0.000000e+00> : vector<16x32xf32>
    %423 = tpu.matmul %420, %422, %cst_135 {dimension_numbers = #tpu.dot_dimension_numbers<[1], [0], [0], [1], [0, 0, 1, 1], [], []>} : vector<16x64xbf16>, vector<64x32xbf16>, vector<16x32xf32> -> vector<16x32xf32>
    %424 = arith.addf %350, %423 : vector<16x32xf32>
    %425 = vector.broadcast %222 : vector<1x32xf32> to vector<16x32xf32>
    %426 = arith.addf %424, %425 : vector<16x32xf32>
    %427 = arith.truncf %426 : vector<16x32xf32> to vector<16x32xbf16>
    %c0_136 = arith.constant 0 : index
    %c0_137 = arith.constant 0 : index
    %c0_138 = arith.constant 0 : index
    %428 = vector.load %arg8[%c0_136, %c0_137, %c0_138] : memref<1x8x8xbf16, #tpu.memory_space<vmem>>, vector<1x8x8xbf16>
    %429 = vector.shape_cast %428 : vector<1x8x8xbf16> to vector<8x8xbf16>
    %c0_139 = arith.constant 0 : index
    %c0_140 = arith.constant 0 : index
    %c0_141 = arith.constant 0 : index
    %430 = vector.load %arg9[%c0_139, %c0_140, %c0_141] : memref<1x8x8xbf16, #tpu.memory_space<vmem>>, vector<1x8x8xbf16>
    %431 = vector.shape_cast %430 : vector<1x8x8xbf16> to vector<8x8xbf16>
    %c0_142 = arith.constant 0 : index
    %c0_143 = arith.constant 0 : index
    %c0_144 = arith.constant 0 : index
    %432 = vector.load %arg10[%c0_142, %c0_143, %c0_144] : memref<1x8x1xf32, #tpu.memory_space<vmem>>, vector<1x8x1xf32>
    %433 = vector.shape_cast %432 : vector<1x8x1xf32> to vector<8x1xf32>
    %434 = vector.shape_cast %427 : vector<16x32xbf16> to vector<2x8x32xbf16>
    %435 = vector.shape_cast %2 : vector<16x32xbf16> to vector<2x8x32xbf16>
    %436 = vector.extract_strided_slice %434 {offsets = [0, 0, 0], sizes = [1, 8, 32], strides = [1, 1, 1]} : vector<2x8x32xbf16> to vector<1x8x32xbf16>
    %437 = vector.shape_cast %436 : vector<1x8x32xbf16> to vector<8x32xbf16>
    %cst_145 = arith.constant dense<0.000000e+00> : vector<8x32xf32>
    %438 = tpu.matmul %429, %437, %cst_145 {dimension_numbers = #tpu.dot_dimension_numbers<[1], [0], [0], [1], [0, 0, 1, 1], [], []>} : vector<8x8xbf16>, vector<8x32xbf16>, vector<8x32xf32> -> vector<8x32xf32>
    %439 = vector.extract_strided_slice %435 {offsets = [0, 0, 0], sizes = [1, 8, 32], strides = [1, 1, 1]} : vector<2x8x32xbf16> to vector<1x8x32xbf16>
    %440 = vector.shape_cast %439 : vector<1x8x32xbf16> to vector<8x32xbf16>
    %cst_146 = arith.constant dense<0.000000e+00> : vector<8x32xf32>
    %441 = tpu.matmul %431, %440, %cst_146 {dimension_numbers = #tpu.dot_dimension_numbers<[1], [0], [0], [1], [0, 0, 1, 1], [], []>} : vector<8x8xbf16>, vector<8x32xbf16>, vector<8x32xf32> -> vector<8x32xf32>
    %442 = arith.addf %438, %441 : vector<8x32xf32>
    %443 = vector.broadcast %433 : vector<8x1xf32> to vector<8x32xf32>
    %444 = arith.addf %442, %443 : vector<8x32xf32>
    %445 = vector.extract_strided_slice %434 {offsets = [1, 0, 0], sizes = [1, 8, 32], strides = [1, 1, 1]} : vector<2x8x32xbf16> to vector<1x8x32xbf16>
    %446 = vector.shape_cast %445 : vector<1x8x32xbf16> to vector<8x32xbf16>
    %cst_147 = arith.constant dense<0.000000e+00> : vector<8x32xf32>
    %447 = tpu.matmul %429, %446, %cst_147 {dimension_numbers = #tpu.dot_dimension_numbers<[1], [0], [0], [1], [0, 0, 1, 1], [], []>} : vector<8x8xbf16>, vector<8x32xbf16>, vector<8x32xf32> -> vector<8x32xf32>
    %448 = vector.extract_strided_slice %435 {offsets = [1, 0, 0], sizes = [1, 8, 32], strides = [1, 1, 1]} : vector<2x8x32xbf16> to vector<1x8x32xbf16>
    %449 = vector.shape_cast %448 : vector<1x8x32xbf16> to vector<8x32xbf16>
    %cst_148 = arith.constant dense<0.000000e+00> : vector<8x32xf32>
    %450 = tpu.matmul %431, %449, %cst_148 {dimension_numbers = #tpu.dot_dimension_numbers<[1], [0], [0], [1], [0, 0, 1, 1], [], []>} : vector<8x8xbf16>, vector<8x32xbf16>, vector<8x32xf32> -> vector<8x32xf32>
    %451 = arith.addf %447, %450 : vector<8x32xf32>
    %452 = vector.broadcast %433 : vector<8x1xf32> to vector<8x32xf32>
    %453 = arith.addf %451, %452 : vector<8x32xf32>
    %454 = tpu.concatenate %444, %453 in 0 : vector<8x32xf32>, vector<8x32xf32> -> vector<16x32xf32>
    %c2 = arith.constant 2 : index
    %c0_149 = arith.constant 0 : index
    %c0_150 = arith.constant 0 : index
    %455 = vector.load %arg2[%c2, %c0_149, %c0_150] : memref<3x6x32xf32, #tpu.memory_space<vmem>>, vector<1x6x32xf32>
    %456 = vector.shape_cast %455 : vector<1x6x32xf32> to vector<6x32xf32>
    %457 = vector.extract_strided_slice %456 {offsets = [0, 0], sizes = [1, 32], strides = [1, 1]} : vector<6x32xf32> to vector<1x32xf32>
    %458 = vector.extract_strided_slice %456 {offsets = [1, 0], sizes = [1, 32], strides = [1, 1]} : vector<6x32xf32> to vector<1x32xf32>
    %459 = vector.extract_strided_slice %456 {offsets = [2, 0], sizes = [1, 32], strides = [1, 1]} : vector<6x32xf32> to vector<1x32xf32>
    %460 = vector.extract_strided_slice %456 {offsets = [3, 0], sizes = [1, 32], strides = [1, 1]} : vector<6x32xf32> to vector<1x32xf32>
    %461 = vector.extract_strided_slice %456 {offsets = [4, 0], sizes = [1, 32], strides = [1, 1]} : vector<6x32xf32> to vector<1x32xf32>
    %462 = vector.extract_strided_slice %456 {offsets = [5, 0], sizes = [1, 32], strides = [1, 1]} : vector<6x32xf32> to vector<1x32xf32>
    %cst_151 = arith.constant dense<0.000000e+00> : vector<16xf32>
    %463 = vector.multi_reduction <add>, %454, %cst_151 [1] : vector<16x32xf32> to vector<16xf32>
    %464 = vector.shape_cast %463 : vector<16xf32> to vector<16x1xf32>
    %cst_152 = arith.constant 3.200000e+01 : f32
    %465 = vector.broadcast %cst_152 : f32 to vector<16x1xf32>
    %466 = arith.divf %464, %465 : vector<16x1xf32>
    %467 = vector.broadcast %466 : vector<16x1xf32> to vector<16x32xf32>
    %468 = arith.subf %454, %467 : vector<16x32xf32>
    %469 = arith.mulf %468, %468 : vector<16x32xf32>
    %cst_153 = arith.constant dense<0.000000e+00> : vector<16xf32>
    %470 = vector.multi_reduction <add>, %469, %cst_153 [1] : vector<16x32xf32> to vector<16xf32>
    %471 = vector.shape_cast %470 : vector<16xf32> to vector<16x1xf32>
    %cst_154 = arith.constant 3.200000e+01 : f32
    %472 = vector.broadcast %cst_154 : f32 to vector<16x1xf32>
    %473 = arith.divf %471, %472 : vector<16x1xf32>
    %cst_155 = arith.constant 9.99999974E-6 : f32
    %474 = vector.broadcast %cst_155 : f32 to vector<16x1xf32>
    %475 = arith.addf %473, %474 : vector<16x1xf32>
    %476 = math.rsqrt %475 : vector<16x1xf32>
    %477 = vector.broadcast %476 : vector<16x1xf32> to vector<16x32xf32>
    %478 = arith.mulf %468, %477 : vector<16x32xf32>
    %479 = vector.broadcast %457 : vector<1x32xf32> to vector<16x32xf32>
    %480 = arith.mulf %478, %479 : vector<16x32xf32>
    %481 = vector.broadcast %458 : vector<1x32xf32> to vector<16x32xf32>
    %482 = arith.addf %480, %481 : vector<16x32xf32>
    %483 = arith.truncf %482 : vector<16x32xf32> to vector<16x32xbf16>
    %c2_156 = arith.constant 2 : index
    %c0_157 = arith.constant 0 : index
    %c0_158 = arith.constant 0 : index
    %484 = vector.load %arg3[%c2_156, %c0_157, %c0_158] : memref<3x32x96xbf16, #tpu.memory_space<vmem>>, vector<1x32x96xbf16>
    %485 = vector.shape_cast %484 : vector<1x32x96xbf16> to vector<32x96xbf16>
    %cst_159 = arith.constant dense<0.000000e+00> : vector<16x96xf32>
    %486 = tpu.matmul %483, %485, %cst_159 {dimension_numbers = #tpu.dot_dimension_numbers<[1], [0], [0], [1], [0, 0, 1, 1], [], []>} : vector<16x32xbf16>, vector<32x96xbf16>, vector<16x96xf32> -> vector<16x96xf32>
    %487 = vector.extract_strided_slice %486 {offsets = [0, 0], sizes = [16, 8], strides = [1, 1]} : vector<16x96xf32> to vector<16x8xf32>
    %488 = vector.shape_cast %487 : vector<16x8xf32> to vector<2x8x8xf32>
    %489 = arith.truncf %488 : vector<2x8x8xf32> to vector<2x8x8xbf16>
    %490 = vector.extract_strided_slice %486 {offsets = [0, 32], sizes = [16, 8], strides = [1, 1]} : vector<16x96xf32> to vector<16x8xf32>
    %491 = vector.shape_cast %490 : vector<16x8xf32> to vector<2x8x8xf32>
    %492 = arith.truncf %491 : vector<2x8x8xf32> to vector<2x8x8xbf16>
    %493 = vector.extract_strided_slice %486 {offsets = [0, 64], sizes = [16, 8], strides = [1, 1]} : vector<16x96xf32> to vector<16x8xf32>
    %494 = vector.shape_cast %493 : vector<16x8xf32> to vector<2x8x8xf32>
    %495 = arith.truncf %494 : vector<2x8x8xf32> to vector<2x8x8xbf16>
    "tpu.trace_start"() <{level = 10 : i32, message = "bqe,bke->bqk"}> : () -> ()
    %cst_160 = arith.constant dense<0.000000e+00> : vector<2x8x8xf32>
    %496 = tpu.matmul %489, %492, %cst_160 {dimension_numbers = #tpu.dot_dimension_numbers<[2], [2], [1], [1], [0, 0, 0, 1, 1, 1], [0], [0]>} : vector<2x8x8xbf16>, vector<2x8x8xbf16>, vector<2x8x8xf32> -> vector<2x8x8xf32>
    "tpu.trace_stop"() : () -> ()
    %cst_161 = arith.constant 0.353553385 : f32
    %497 = vector.broadcast %cst_161 : f32 to vector<2x8x8xf32>
    %498 = arith.mulf %496, %497 : vector<2x8x8xf32>
    %cst_162 = arith.constant dense<0xFF800000> : vector<2x8xf32>
    %499 = vector.multi_reduction <maximumf>, %498, %cst_162 [2] : vector<2x8x8xf32> to vector<2x8xf32>
    %500 = vector.shape_cast %499 : vector<2x8xf32> to vector<2x8x1xf32>
    %501 = vector.broadcast %500 : vector<2x8x1xf32> to vector<2x8x8xf32>
    %502 = arith.subf %498, %501 : vector<2x8x8xf32>
    %503 = math.exp %502 : vector<2x8x8xf32>
    %cst_163 = arith.constant dense<0.000000e+00> : vector<2x8xf32>
    %504 = vector.multi_reduction <add>, %503, %cst_163 [2] : vector<2x8x8xf32> to vector<2x8xf32>
    %505 = vector.shape_cast %504 : vector<2x8xf32> to vector<2x8x1xf32>
    %506 = vector.broadcast %505 : vector<2x8x1xf32> to vector<2x8x8xf32>
    %507 = arith.divf %503, %506 : vector<2x8x8xf32>
    %508 = arith.truncf %507 : vector<2x8x8xf32> to vector<2x8x8xbf16>
    "tpu.trace_start"() <{level = 10 : i32, message = "bqk,bke->bqe"}> : () -> ()
    %cst_164 = arith.constant dense<0.000000e+00> : vector<2x8x8xf32>
    %509 = tpu.matmul %508, %495, %cst_164 {dimension_numbers = #tpu.dot_dimension_numbers<[2], [1], [1], [2], [0, 0, 0, 1, 1, 2], [0], [0]>} : vector<2x8x8xbf16>, vector<2x8x8xbf16>, vector<2x8x8xf32> -> vector<2x8x8xf32>
    "tpu.trace_stop"() : () -> ()
    %510 = arith.truncf %509 : vector<2x8x8xf32> to vector<2x8x8xbf16>
    %511 = vector.extract_strided_slice %486 {offsets = [0, 8], sizes = [16, 8], strides = [1, 1]} : vector<16x96xf32> to vector<16x8xf32>
    %512 = vector.shape_cast %511 : vector<16x8xf32> to vector<2x8x8xf32>
    %513 = arith.truncf %512 : vector<2x8x8xf32> to vector<2x8x8xbf16>
    %514 = vector.extract_strided_slice %486 {offsets = [0, 40], sizes = [16, 8], strides = [1, 1]} : vector<16x96xf32> to vector<16x8xf32>
    %515 = vector.shape_cast %514 : vector<16x8xf32> to vector<2x8x8xf32>
    %516 = arith.truncf %515 : vector<2x8x8xf32> to vector<2x8x8xbf16>
    %517 = vector.extract_strided_slice %486 {offsets = [0, 72], sizes = [16, 8], strides = [1, 1]} : vector<16x96xf32> to vector<16x8xf32>
    %518 = vector.shape_cast %517 : vector<16x8xf32> to vector<2x8x8xf32>
    %519 = arith.truncf %518 : vector<2x8x8xf32> to vector<2x8x8xbf16>
    "tpu.trace_start"() <{level = 10 : i32, message = "bqe,bke->bqk"}> : () -> ()
    %cst_165 = arith.constant dense<0.000000e+00> : vector<2x8x8xf32>
    %520 = tpu.matmul %513, %516, %cst_165 {dimension_numbers = #tpu.dot_dimension_numbers<[2], [2], [1], [1], [0, 0, 0, 1, 1, 1], [0], [0]>} : vector<2x8x8xbf16>, vector<2x8x8xbf16>, vector<2x8x8xf32> -> vector<2x8x8xf32>
    "tpu.trace_stop"() : () -> ()
    %cst_166 = arith.constant 0.353553385 : f32
    %521 = vector.broadcast %cst_166 : f32 to vector<2x8x8xf32>
    %522 = arith.mulf %520, %521 : vector<2x8x8xf32>
    %cst_167 = arith.constant dense<0xFF800000> : vector<2x8xf32>
    %523 = vector.multi_reduction <maximumf>, %522, %cst_167 [2] : vector<2x8x8xf32> to vector<2x8xf32>
    %524 = vector.shape_cast %523 : vector<2x8xf32> to vector<2x8x1xf32>
    %525 = vector.broadcast %524 : vector<2x8x1xf32> to vector<2x8x8xf32>
    %526 = arith.subf %522, %525 : vector<2x8x8xf32>
    %527 = math.exp %526 : vector<2x8x8xf32>
    %cst_168 = arith.constant dense<0.000000e+00> : vector<2x8xf32>
    %528 = vector.multi_reduction <add>, %527, %cst_168 [2] : vector<2x8x8xf32> to vector<2x8xf32>
    %529 = vector.shape_cast %528 : vector<2x8xf32> to vector<2x8x1xf32>
    %530 = vector.broadcast %529 : vector<2x8x1xf32> to vector<2x8x8xf32>
    %531 = arith.divf %527, %530 : vector<2x8x8xf32>
    %532 = arith.truncf %531 : vector<2x8x8xf32> to vector<2x8x8xbf16>
    "tpu.trace_start"() <{level = 10 : i32, message = "bqk,bke->bqe"}> : () -> ()
    %cst_169 = arith.constant dense<0.000000e+00> : vector<2x8x8xf32>
    %533 = tpu.matmul %532, %519, %cst_169 {dimension_numbers = #tpu.dot_dimension_numbers<[2], [1], [1], [2], [0, 0, 0, 1, 1, 2], [0], [0]>} : vector<2x8x8xbf16>, vector<2x8x8xbf16>, vector<2x8x8xf32> -> vector<2x8x8xf32>
    "tpu.trace_stop"() : () -> ()
    %534 = arith.truncf %533 : vector<2x8x8xf32> to vector<2x8x8xbf16>
    %535 = vector.extract_strided_slice %486 {offsets = [0, 16], sizes = [16, 8], strides = [1, 1]} : vector<16x96xf32> to vector<16x8xf32>
    %536 = vector.shape_cast %535 : vector<16x8xf32> to vector<2x8x8xf32>
    %537 = arith.truncf %536 : vector<2x8x8xf32> to vector<2x8x8xbf16>
    %538 = vector.extract_strided_slice %486 {offsets = [0, 48], sizes = [16, 8], strides = [1, 1]} : vector<16x96xf32> to vector<16x8xf32>
    %539 = vector.shape_cast %538 : vector<16x8xf32> to vector<2x8x8xf32>
    %540 = arith.truncf %539 : vector<2x8x8xf32> to vector<2x8x8xbf16>
    %541 = vector.extract_strided_slice %486 {offsets = [0, 80], sizes = [16, 8], strides = [1, 1]} : vector<16x96xf32> to vector<16x8xf32>
    %542 = vector.shape_cast %541 : vector<16x8xf32> to vector<2x8x8xf32>
    %543 = arith.truncf %542 : vector<2x8x8xf32> to vector<2x8x8xbf16>
    "tpu.trace_start"() <{level = 10 : i32, message = "bqe,bke->bqk"}> : () -> ()
    %cst_170 = arith.constant dense<0.000000e+00> : vector<2x8x8xf32>
    %544 = tpu.matmul %537, %540, %cst_170 {dimension_numbers = #tpu.dot_dimension_numbers<[2], [2], [1], [1], [0, 0, 0, 1, 1, 1], [0], [0]>} : vector<2x8x8xbf16>, vector<2x8x8xbf16>, vector<2x8x8xf32> -> vector<2x8x8xf32>
    "tpu.trace_stop"() : () -> ()
    %cst_171 = arith.constant 0.353553385 : f32
    %545 = vector.broadcast %cst_171 : f32 to vector<2x8x8xf32>
    %546 = arith.mulf %544, %545 : vector<2x8x8xf32>
    %cst_172 = arith.constant dense<0xFF800000> : vector<2x8xf32>
    %547 = vector.multi_reduction <maximumf>, %546, %cst_172 [2] : vector<2x8x8xf32> to vector<2x8xf32>
    %548 = vector.shape_cast %547 : vector<2x8xf32> to vector<2x8x1xf32>
    %549 = vector.broadcast %548 : vector<2x8x1xf32> to vector<2x8x8xf32>
    %550 = arith.subf %546, %549 : vector<2x8x8xf32>
    %551 = math.exp %550 : vector<2x8x8xf32>
    %cst_173 = arith.constant dense<0.000000e+00> : vector<2x8xf32>
    %552 = vector.multi_reduction <add>, %551, %cst_173 [2] : vector<2x8x8xf32> to vector<2x8xf32>
    %553 = vector.shape_cast %552 : vector<2x8xf32> to vector<2x8x1xf32>
    %554 = vector.broadcast %553 : vector<2x8x1xf32> to vector<2x8x8xf32>
    %555 = arith.divf %551, %554 : vector<2x8x8xf32>
    %556 = arith.truncf %555 : vector<2x8x8xf32> to vector<2x8x8xbf16>
    "tpu.trace_start"() <{level = 10 : i32, message = "bqk,bke->bqe"}> : () -> ()
    %cst_174 = arith.constant dense<0.000000e+00> : vector<2x8x8xf32>
    %557 = tpu.matmul %556, %543, %cst_174 {dimension_numbers = #tpu.dot_dimension_numbers<[2], [1], [1], [2], [0, 0, 0, 1, 1, 2], [0], [0]>} : vector<2x8x8xbf16>, vector<2x8x8xbf16>, vector<2x8x8xf32> -> vector<2x8x8xf32>
    "tpu.trace_stop"() : () -> ()
    %558 = arith.truncf %557 : vector<2x8x8xf32> to vector<2x8x8xbf16>
    %559 = vector.extract_strided_slice %486 {offsets = [0, 24], sizes = [16, 8], strides = [1, 1]} : vector<16x96xf32> to vector<16x8xf32>
    %560 = vector.shape_cast %559 : vector<16x8xf32> to vector<2x8x8xf32>
    %561 = arith.truncf %560 : vector<2x8x8xf32> to vector<2x8x8xbf16>
    %562 = vector.extract_strided_slice %486 {offsets = [0, 56], sizes = [16, 8], strides = [1, 1]} : vector<16x96xf32> to vector<16x8xf32>
    %563 = vector.shape_cast %562 : vector<16x8xf32> to vector<2x8x8xf32>
    %564 = arith.truncf %563 : vector<2x8x8xf32> to vector<2x8x8xbf16>
    %565 = vector.extract_strided_slice %486 {offsets = [0, 88], sizes = [16, 8], strides = [1, 1]} : vector<16x96xf32> to vector<16x8xf32>
    %566 = vector.shape_cast %565 : vector<16x8xf32> to vector<2x8x8xf32>
    %567 = arith.truncf %566 : vector<2x8x8xf32> to vector<2x8x8xbf16>
    "tpu.trace_start"() <{level = 10 : i32, message = "bqe,bke->bqk"}> : () -> ()
    %cst_175 = arith.constant dense<0.000000e+00> : vector<2x8x8xf32>
    %568 = tpu.matmul %561, %564, %cst_175 {dimension_numbers = #tpu.dot_dimension_numbers<[2], [2], [1], [1], [0, 0, 0, 1, 1, 1], [0], [0]>} : vector<2x8x8xbf16>, vector<2x8x8xbf16>, vector<2x8x8xf32> -> vector<2x8x8xf32>
    "tpu.trace_stop"() : () -> ()
    %cst_176 = arith.constant 0.353553385 : f32
    %569 = vector.broadcast %cst_176 : f32 to vector<2x8x8xf32>
    %570 = arith.mulf %568, %569 : vector<2x8x8xf32>
    %cst_177 = arith.constant dense<0xFF800000> : vector<2x8xf32>
    %571 = vector.multi_reduction <maximumf>, %570, %cst_177 [2] : vector<2x8x8xf32> to vector<2x8xf32>
    %572 = vector.shape_cast %571 : vector<2x8xf32> to vector<2x8x1xf32>
    %573 = vector.broadcast %572 : vector<2x8x1xf32> to vector<2x8x8xf32>
    %574 = arith.subf %570, %573 : vector<2x8x8xf32>
    %575 = math.exp %574 : vector<2x8x8xf32>
    %cst_178 = arith.constant dense<0.000000e+00> : vector<2x8xf32>
    %576 = vector.multi_reduction <add>, %575, %cst_178 [2] : vector<2x8x8xf32> to vector<2x8xf32>
    %577 = vector.shape_cast %576 : vector<2x8xf32> to vector<2x8x1xf32>
    %578 = vector.broadcast %577 : vector<2x8x1xf32> to vector<2x8x8xf32>
    %579 = arith.divf %575, %578 : vector<2x8x8xf32>
    %580 = arith.truncf %579 : vector<2x8x8xf32> to vector<2x8x8xbf16>
    "tpu.trace_start"() <{level = 10 : i32, message = "bqk,bke->bqe"}> : () -> ()
    %cst_179 = arith.constant dense<0.000000e+00> : vector<2x8x8xf32>
    %581 = tpu.matmul %580, %567, %cst_179 {dimension_numbers = #tpu.dot_dimension_numbers<[2], [1], [1], [2], [0, 0, 0, 1, 1, 2], [0], [0]>} : vector<2x8x8xbf16>, vector<2x8x8xbf16>, vector<2x8x8xf32> -> vector<2x8x8xf32>
    "tpu.trace_stop"() : () -> ()
    %582 = arith.truncf %581 : vector<2x8x8xf32> to vector<2x8x8xbf16>
    %583 = tpu.concatenate %510, %534, %558, %582 in 2 : vector<2x8x8xbf16>, vector<2x8x8xbf16>, vector<2x8x8xbf16>, vector<2x8x8xbf16> -> vector<2x8x32xbf16>
    %584 = vector.shape_cast %583 : vector<2x8x32xbf16> to vector<16x32xbf16>
    %c2_180 = arith.constant 2 : index
    %c0_181 = arith.constant 0 : index
    %c0_182 = arith.constant 0 : index
    %585 = vector.load %arg4[%c2_180, %c0_181, %c0_182] : memref<3x32x32xbf16, #tpu.memory_space<vmem>>, vector<1x32x32xbf16>
    %586 = vector.shape_cast %585 : vector<1x32x32xbf16> to vector<32x32xbf16>
    %cst_183 = arith.constant dense<0.000000e+00> : vector<16x32xf32>
    %587 = tpu.matmul %584, %586, %cst_183 {dimension_numbers = #tpu.dot_dimension_numbers<[1], [0], [0], [1], [0, 0, 1, 1], [], []>} : vector<16x32xbf16>, vector<32x32xbf16>, vector<16x32xf32> -> vector<16x32xf32>
    %588 = arith.addf %454, %587 : vector<16x32xf32>
    %589 = vector.broadcast %459 : vector<1x32xf32> to vector<16x32xf32>
    %590 = arith.addf %588, %589 : vector<16x32xf32>
    %cst_184 = arith.constant dense<0.000000e+00> : vector<16xf32>
    %591 = vector.multi_reduction <add>, %590, %cst_184 [1] : vector<16x32xf32> to vector<16xf32>
    %592 = vector.shape_cast %591 : vector<16xf32> to vector<16x1xf32>
    %cst_185 = arith.constant 3.200000e+01 : f32
    %593 = vector.broadcast %cst_185 : f32 to vector<16x1xf32>
    %594 = arith.divf %592, %593 : vector<16x1xf32>
    %595 = vector.broadcast %594 : vector<16x1xf32> to vector<16x32xf32>
    %596 = arith.subf %590, %595 : vector<16x32xf32>
    %597 = arith.mulf %596, %596 : vector<16x32xf32>
    %cst_186 = arith.constant dense<0.000000e+00> : vector<16xf32>
    %598 = vector.multi_reduction <add>, %597, %cst_186 [1] : vector<16x32xf32> to vector<16xf32>
    %599 = vector.shape_cast %598 : vector<16xf32> to vector<16x1xf32>
    %cst_187 = arith.constant 3.200000e+01 : f32
    %600 = vector.broadcast %cst_187 : f32 to vector<16x1xf32>
    %601 = arith.divf %599, %600 : vector<16x1xf32>
    %cst_188 = arith.constant 9.99999974E-6 : f32
    %602 = vector.broadcast %cst_188 : f32 to vector<16x1xf32>
    %603 = arith.addf %601, %602 : vector<16x1xf32>
    %604 = math.rsqrt %603 : vector<16x1xf32>
    %605 = vector.broadcast %604 : vector<16x1xf32> to vector<16x32xf32>
    %606 = arith.mulf %596, %605 : vector<16x32xf32>
    %607 = vector.broadcast %460 : vector<1x32xf32> to vector<16x32xf32>
    %608 = arith.mulf %606, %607 : vector<16x32xf32>
    %609 = vector.broadcast %461 : vector<1x32xf32> to vector<16x32xf32>
    %610 = arith.addf %608, %609 : vector<16x32xf32>
    %611 = arith.truncf %610 : vector<16x32xf32> to vector<16x32xbf16>
    %c2_189 = arith.constant 2 : index
    %c0_190 = arith.constant 0 : index
    %c0_191 = arith.constant 0 : index
    %612 = vector.load %arg5[%c2_189, %c0_190, %c0_191] : memref<3x32x64xbf16, #tpu.memory_space<vmem>>, vector<1x32x64xbf16>
    %613 = vector.shape_cast %612 : vector<1x32x64xbf16> to vector<32x64xbf16>
    %cst_192 = arith.constant dense<0.000000e+00> : vector<16x64xf32>
    %614 = tpu.matmul %611, %613, %cst_192 {dimension_numbers = #tpu.dot_dimension_numbers<[1], [0], [0], [1], [0, 0, 1, 1], [], []>} : vector<16x32xbf16>, vector<32x64xbf16>, vector<16x64xf32> -> vector<16x64xf32>
    %c2_193 = arith.constant 2 : index
    %c0_194 = arith.constant 0 : index
    %c0_195 = arith.constant 0 : index
    %615 = vector.load %arg6[%c2_193, %c0_194, %c0_195] : memref<3x1x64xf32, #tpu.memory_space<vmem>>, vector<1x1x64xf32>
    %616 = vector.shape_cast %615 : vector<1x1x64xf32> to vector<1x64xf32>
    %617 = vector.broadcast %616 : vector<1x64xf32> to vector<16x64xf32>
    %618 = arith.addf %614, %617 : vector<16x64xf32>
    %cst_196 = arith.constant 5.000000e-01 : f32
    %619 = vector.broadcast %cst_196 : f32 to vector<16x64xf32>
    %620 = arith.mulf %619, %618 : vector<16x64xf32>
    %cst_197 = arith.constant 0.707106769 : f32
    %621 = vector.broadcast %cst_197 : f32 to vector<16x64xf32>
    %622 = arith.mulf %618, %621 : vector<16x64xf32>
    %cst_198 = arith.constant 0.000000e+00 : f32
    %623 = vector.broadcast %cst_198 : f32 to vector<16x64xf32>
    %624 = arith.cmpf oge, %622, %623 : vector<16x64xf32>
    %cst_199 = arith.constant 1.000000e+00 : f32
    %cst_200 = arith.constant -1.000000e+00 : f32
    %625 = vector.broadcast %cst_199 : f32 to vector<16x64xf32>
    %626 = vector.broadcast %cst_200 : f32 to vector<16x64xf32>
    %627 = arith.select %624, %625, %626 : vector<16x64xi1>, vector<16x64xf32>
    %628 = math.absf %622 : vector<16x64xf32>
    %cst_201 = arith.constant 0.327591091 : f32
    %629 = vector.broadcast %cst_201 : f32 to vector<16x64xf32>
    %630 = arith.mulf %629, %628 : vector<16x64xf32>
    %cst_202 = arith.constant 1.000000e+00 : f32
    %631 = vector.broadcast %cst_202 : f32 to vector<16x64xf32>
    %632 = arith.addf %631, %630 : vector<16x64xf32>
    %cst_203 = arith.constant 1.000000e+00 : f32
    %633 = vector.broadcast %cst_203 : f32 to vector<16x64xf32>
    %634 = arith.divf %633, %632 : vector<16x64xf32>
    %cst_204 = arith.constant 1.06140542 : f32
    %635 = vector.broadcast %cst_204 : f32 to vector<16x64xf32>
    %636 = arith.mulf %635, %634 : vector<16x64xf32>
    %cst_205 = arith.constant -1.45315206 : f32
    %637 = vector.broadcast %cst_205 : f32 to vector<16x64xf32>
    %638 = arith.addf %636, %637 : vector<16x64xf32>
    %639 = arith.mulf %638, %634 : vector<16x64xf32>
    %cst_206 = arith.constant 1.42141378 : f32
    %640 = vector.broadcast %cst_206 : f32 to vector<16x64xf32>
    %641 = arith.addf %639, %640 : vector<16x64xf32>
    %642 = arith.mulf %641, %634 : vector<16x64xf32>
    %cst_207 = arith.constant -0.284496725 : f32
    %643 = vector.broadcast %cst_207 : f32 to vector<16x64xf32>
    %644 = arith.addf %642, %643 : vector<16x64xf32>
    %645 = arith.mulf %644, %634 : vector<16x64xf32>
    %cst_208 = arith.constant 0.254829586 : f32
    %646 = vector.broadcast %cst_208 : f32 to vector<16x64xf32>
    %647 = arith.addf %645, %646 : vector<16x64xf32>
    %648 = arith.mulf %647, %634 : vector<16x64xf32>
    %cst_209 = arith.constant 0.000000e+00 : f32
    %649 = vector.broadcast %cst_209 : f32 to vector<16x64xf32>
    %650 = arith.subf %649, %628 : vector<16x64xf32>
    %651 = arith.mulf %650, %628 : vector<16x64xf32>
    %652 = math.exp %651 : vector<16x64xf32>
    %653 = arith.mulf %648, %652 : vector<16x64xf32>
    %cst_210 = arith.constant 1.000000e+00 : f32
    %654 = vector.broadcast %cst_210 : f32 to vector<16x64xf32>
    %655 = arith.subf %654, %653 : vector<16x64xf32>
    %656 = arith.mulf %627, %655 : vector<16x64xf32>
    %cst_211 = arith.constant 1.000000e+00 : f32
    %657 = vector.broadcast %cst_211 : f32 to vector<16x64xf32>
    %658 = arith.addf %657, %656 : vector<16x64xf32>
    %659 = arith.mulf %620, %658 : vector<16x64xf32>
    %660 = arith.truncf %659 : vector<16x64xf32> to vector<16x64xbf16>
    %c2_212 = arith.constant 2 : index
    %c0_213 = arith.constant 0 : index
    %c0_214 = arith.constant 0 : index
    %661 = vector.load %arg7[%c2_212, %c0_213, %c0_214] : memref<3x64x32xbf16, #tpu.memory_space<vmem>>, vector<1x64x32xbf16>
    %662 = vector.shape_cast %661 : vector<1x64x32xbf16> to vector<64x32xbf16>
    %cst_215 = arith.constant dense<0.000000e+00> : vector<16x32xf32>
    %663 = tpu.matmul %660, %662, %cst_215 {dimension_numbers = #tpu.dot_dimension_numbers<[1], [0], [0], [1], [0, 0, 1, 1], [], []>} : vector<16x64xbf16>, vector<64x32xbf16>, vector<16x32xf32> -> vector<16x32xf32>
    %664 = arith.addf %590, %663 : vector<16x32xf32>
    %665 = vector.broadcast %462 : vector<1x32xf32> to vector<16x32xf32>
    %666 = arith.addf %664, %665 : vector<16x32xf32>
    %667 = vector.shape_cast %666 : vector<16x32xf32> to vector<2x8x32xf32>
    %c0_216 = arith.constant 0 : index
    %c0_217 = arith.constant 0 : index
    %c0_218 = arith.constant 0 : index
    %668 = vector.load %arg11[%c0_216, %c0_217, %c0_218] : memref<2x8x32xf32, #tpu.memory_space<vmem>>, vector<2x8x32xf32>
    tpu.vector_store %arg11[%c0_216, %c0_217, %c0_218], %667 {strides = array<i32>} : memref<2x8x32xf32, #tpu.memory_space<vmem>>, vector<2x8x32xf32>,
    return
  }
  func.func @transform_0(%arg0: i32) -> (i32, i32, i32) {
    %c0_i32 = arith.constant 0 : i32
    %c0_i32_0 = arith.constant 0 : i32
    %c0_i32_1 = arith.constant 0 : i32
    return %arg0, %c0_i32, %c0_i32_0 : i32, i32, i32
  }
  func.func @transform_1(%arg0: i32) -> (i32, i32, i32) {
    %c0_i32 = arith.constant 0 : i32
    %c0_i32_0 = arith.constant 0 : i32
    %c0_i32_1 = arith.constant 0 : i32
    %c0_i32_2 = arith.constant 0 : i32
    return %c0_i32, %c0_i32_0, %c0_i32_1 : i32, i32, i32
  }
  func.func @transform_2(%arg0: i32) -> (i32, i32, i32) {
    %c0_i32 = arith.constant 0 : i32
    %c0_i32_0 = arith.constant 0 : i32
    %c0_i32_1 = arith.constant 0 : i32
    %c0_i32_2 = arith.constant 0 : i32
    return %c0_i32, %c0_i32_0, %c0_i32_1 : i32, i32, i32
  }
  func.func @transform_3(%arg0: i32) -> (i32, i32, i32) {
    %c0_i32 = arith.constant 0 : i32
    %c0_i32_0 = arith.constant 0 : i32
    %c0_i32_1 = arith.constant 0 : i32
    %c0_i32_2 = arith.constant 0 : i32
    return %c0_i32, %c0_i32_0, %c0_i32_1 : i32, i32, i32
  }
  func.func @transform_4(%arg0: i32) -> (i32, i32, i32) {
    %c0_i32 = arith.constant 0 : i32
    %c0_i32_0 = arith.constant 0 : i32
    %c0_i32_1 = arith.constant 0 : i32
    %c0_i32_2 = arith.constant 0 : i32
    return %c0_i32, %c0_i32_0, %c0_i32_1 : i32, i32, i32
  }
  func.func @transform_5(%arg0: i32) -> (i32, i32, i32) {
    %c0_i32 = arith.constant 0 : i32
    %c0_i32_0 = arith.constant 0 : i32
    %c0_i32_1 = arith.constant 0 : i32
    %c0_i32_2 = arith.constant 0 : i32
    return %c0_i32, %c0_i32_0, %c0_i32_1 : i32, i32, i32
  }
  func.func @transform_6(%arg0: i32) -> (i32, i32, i32) {
    %c0_i32 = arith.constant 0 : i32
    %c0_i32_0 = arith.constant 0 : i32
    %c0_i32_1 = arith.constant 0 : i32
    %c0_i32_2 = arith.constant 0 : i32
    return %c0_i32, %c0_i32_0, %c0_i32_1 : i32, i32, i32
  }
  func.func @transform_7(%arg0: i32) -> (i32, i32, i32) {
    %c0_i32 = arith.constant 0 : i32
    %c0_i32_0 = arith.constant 0 : i32
    %c0_i32_1 = arith.constant 0 : i32
    %c0_i32_2 = arith.constant 0 : i32
    return %c0_i32, %c0_i32_0, %c0_i32_1 : i32, i32, i32
  }
  func.func @transform_8(%arg0: i32) -> (i32, i32, i32) {
    %c0_i32 = arith.constant 0 : i32
    %c0_i32_0 = arith.constant 0 : i32
    %c0_i32_1 = arith.constant 0 : i32
    %c0_i32_2 = arith.constant 0 : i32
    return %c0_i32, %c0_i32_0, %c0_i32_1 : i32, i32, i32
  }
  func.func @transform_9(%arg0: i32) -> (i32, i32, i32) {
    %c0_i32 = arith.constant 0 : i32
    %c0_i32_0 = arith.constant 0 : i32
    %c0_i32_1 = arith.constant 0 : i32
    %c0_i32_2 = arith.constant 0 : i32
    return %c0_i32, %c0_i32_0, %c0_i32_1 : i32, i32, i32
  }
  func.func @transform_10(%arg0: i32) -> (i32, i32, i32) {
    %c0_i32 = arith.constant 0 : i32
    %c0_i32_0 = arith.constant 0 : i32
    %c0_i32_1 = arith.constant 0 : i32
    return %arg0, %c0_i32, %c0_i32_0 : i32, i32, i32
  }
}

</mosaic_0001>

<llo_original>
// kernel: tpu_custom_call.1
$region0: #{tpu_custom_call.1}
  #allocation0 [shape = 'u32[]', space=smem, size = 0x4, offset = 0x4, fixed_abs, tag = 'smem constant byte address 0x4 - core index']
  #allocation1 [shape = 'u32[144,128]{1,0:T(1,128)}', space=vmem, size = 0x12000, scoped, tag = 'internal scratch']
  %s0 = inlined_call_operand.hbm [shape: f32[2,8,32], index: 0, kind: input, shape index: {}]
  %s1 = inlined_call_operand.hbm [shape: f32[3,6,32], index: 1, kind: input, shape index: {}]
  %s2 = inlined_call_operand.vmem [shape: bf16[3,32,96], index: 2, kind: input, shape index: {}]
  %s3 = inlined_call_operand.vmem [shape: bf16[3,32,32], index: 3, kind: input, shape index: {}]
  %s4 = inlined_call_operand.vmem [shape: bf16[3,32,64], index: 4, kind: input, shape index: {}]
  %s5 = inlined_call_operand.vmem [shape: f32[3,1,64], index: 5, kind: input, shape index: {}]
  %s6 = inlined_call_operand.vmem [shape: bf16[3,64,32], index: 6, kind: input, shape index: {}]
  %s7 = inlined_call_operand.vmem [shape: bf16[1,8,8], index: 7, kind: input, shape index: {}]
  %s8 = inlined_call_operand.vmem [shape: bf16[1,8,8], index: 8, kind: input, shape index: {}]
  %s9 = inlined_call_operand.vmem [shape: f32[1,8,1], index: 9, kind: input, shape index: {}]
  %s10 = inlined_call_operand.hbm [shape: f32[2,8,32], index: 10, kind: output, shape index: {}]
  %s11 = sld [smem:[#allocation0]]
  $region58: #{tpu_custom_call.1} parent=0
    _
  %s13 = ssub.s32 1, %s11
  %s14 = scalar_select 0, %s13, %s11
  $region1: #{tpu_custom_call.1} parent=0
    #allocation2 [shape = 'u8[8192]{0}', space=vmem, size = 0x2000, scoped, tag = 'input window, operand 0, single buffered']
    #allocation3 [shape = 's32[1]{0}', space=sflag, size = 0x4, scoped, tag = 'scoped memory for tpu_custom_call.1']
    #allocation4 [shape = 's32[1]{0}', space=sflag, size = 0x4, scoped, tag = 'scoped memory for tpu_custom_call.1']
    #allocation5 [shape = 'u8[12288]{0}', space=vmem, size = 0x3000, scoped, tag = 'input window, operand 1, single buffered']
    #allocation6 [shape = 's32[1]{0}', space=sflag, size = 0x4, scoped, tag = 'scoped memory for tpu_custom_call.1']
    #allocation7 [shape = 'u8[8192]{0}', space=vmem, size = 0x2000, scoped, tag = 'output window, operand 0, single buffered']
    %15 = vsyncpa [#allocation3], 0
    %16 = vsyncpa [#allocation6], 0
    %17 = vsyncpa [#allocation4], 0
    // Predicated region
    $region2: #{tpu_custom_call.1} parent=1 // pred_check
      _
    $region3: #{tpu_custom_call.1} parent=1 // pred_check_branch
      %19 = sbr.rel (0) target = $region5
    $region4: #{tpu_custom_call.1} parent=1 // pred_region
      %s21 = ssub.s32 256, 256
      %22 = vsyncadd [#allocation3], %s21
      %s23 = sshll.u32 [#allocation2], 4
      %s24 = int_to_ptr.vmem [resolvable:$true] %s23
      %29 = dma.hbm_to_vmem [thread:$0]  %s0, 256, %s24, [#allocation3], 128, 128, 8
    $region5: #{tpu_custom_call.1} parent=1 // pred_fallthru
      _
    // Predicated region
    $region6: #{tpu_custom_call.1} parent=1 // pred_check
      _
    $region7: #{tpu_custom_call.1} parent=1 // pred_check_branch
      %31 = sbr.rel (0) target = $region9
    $region8: #{tpu_custom_call.1} parent=1 // pred_region
      %s33 = ssub.s32 384, 384
      %34 = vsyncadd [#allocation6], %s33
      %s35 = sshll.u32 [#allocation5], 4
      %s36 = int_to_ptr.vmem [resolvable:$true] %s35
      %41 = dma.hbm_to_vmem [thread:$0]  %s1, 384, %s36, [#allocation6], 128, 128, 8
    $region9: #{tpu_custom_call.1} parent=1 // pred_fallthru
      _
    // Predicated region
    $region10: #{tpu_custom_call.1} parent=1 // pred_check
      _
    $region11: #{tpu_custom_call.1} parent=1 // pred_check_branch
      %43 = sbr.rel (0) target = $region13
    $region12: #{tpu_custom_call.1} parent=1 // pred_region
      _
    $region13: #{tpu_custom_call.1} parent=1 // pred_fallthru
      _
    // Predicated region
    $region14: #{tpu_custom_call.1} parent=1 // pred_check
      _
    $region15: #{tpu_custom_call.1} parent=1 // pred_check_branch
      %45 = sbr.rel (0) target = $region17
    $region16: #{tpu_custom_call.1} parent=1 // pred_region
      _
    $region17: #{tpu_custom_call.1} parent=1 // pred_fallthru
      _
    // Predicated region
    $region18: #{tpu_custom_call.1} parent=1 // pred_check
      _
    $region19: #{tpu_custom_call.1} parent=1 // pred_check_branch
      %47 = sbr.rel (0) target = $region21
    $region20: #{tpu_custom_call.1} parent=1 // pred_region
      _
    $region21: #{tpu_custom_call.1} parent=1 // pred_fallthru
      _
    // Predicated region
    $region22: #{tpu_custom_call.1} parent=1 // pred_check
      _
    $region23: #{tpu_custom_call.1} parent=1 // pred_check_branch
      %49 = sbr.rel (0) target = $region25
    $region24: #{tpu_custom_call.1} parent=1 // pred_region
      _
    $region25: #{tpu_custom_call.1} parent=1 // pred_fallthru
      _
    // Predicated region
    $region26: #{tpu_custom_call.1} parent=1 // pred_check
      _
    $region27: #{tpu_custom_call.1} parent=1 // pred_check_branch
      %51 = sbr.rel (0) target = $region29
    $region28: #{tpu_custom_call.1} parent=1 // pred_region
      _
    $region29: #{tpu_custom_call.1} parent=1 // pred_fallthru
      _
    // Predicated region
    $region30: #{tpu_custom_call.1} parent=1 // pred_check
      _
    $region31: #{tpu_custom_call.1} parent=1 // pred_check_branch
      %53 = sbr.rel (0) target = $region33
    $region32: #{tpu_custom_call.1} parent=1 // pred_region
      _
    $region33: #{tpu_custom_call.1} parent=1 // pred_fallthru
      _
    // Predicated region
    $region34: #{tpu_custom_call.1} parent=1 // pred_check
      _
    $region35: #{tpu_custom_call.1} parent=1 // pred_check_branch
      %55 = sbr.rel (0) target = $region37
    $region36: #{tpu_custom_call.1} parent=1 // pred_region
      _
    $region37: #{tpu_custom_call.1} parent=1 // pred_fallthru
      _
    // Predicated region
    $region38: #{tpu_custom_call.1} parent=1 // pred_check
      _
    $region39: #{tpu_custom_call.1} parent=1 // pred_check_branch
      %57 = sbr.rel (0) target = $region41
    $region40: #{tpu_custom_call.1} parent=1 // pred_region
      _
    $region41: #{tpu_custom_call.1} parent=1 // pred_fallthru
      _
    // Predicated region
    $region42: #{tpu_custom_call.1} parent=1 // pred_check
      _
    $region43: #{tpu_custom_call.1} parent=1 // pred_check_branch
      %59 = sbr.rel (0) target = $region45
    $region44: #{tpu_custom_call.1} parent=1 // pred_region
      %60 = dma.done [#allocation3], 256
    $region45: #{tpu_custom_call.1} parent=1 // pred_fallthru
      _
    // Predicated region
    $region46: #{tpu_custom_call.1} parent=1 // pred_check
      _
    $region47: #{tpu_custom_call.1} parent=1 // pred_check_branch
      %62 = sbr.rel (0) target = $region49
    $region48: #{tpu_custom_call.1} parent=1 // pred_region
      %63 = dma.done [#allocation6], 384
    $region49: #{tpu_custom_call.1} parent=1 // pred_fallthru
      _
    %v65 = vld [vmem:[#allocation2] sm:$0xff]
    %v66 = vld [vmem:[#allocation2 + $0x8] sm:$0xff]
    %v67 = vpack.c.bf16 %v66, %v65
    %v68 = vld [vmem:[#allocation5] sm:$0x3f]
    %vm69 = vcmask 261120
    %v70 = vsel %vm69, %v65, 0.0
    %71 = vadd.xlane.f32.xlu0 %v70
    %v72 = vpop.xlane.xlu0 %71
    %v73 = vsel %vm69, %v66, 0.0
    %74 = vadd.xlane.f32.xlu0 %v73
    %v75 = vpop.xlane.xlu0 %74
    %v76 = vrcp.pop 32.0
    %v77 = vmul.f32 %v72, %v76
    %v78 = vmul.f32 %v75, %v76
    %v79 = vsub.f32 %v65, %v77
    %v80 = vsub.f32 %v66, %v78
    %v81 = vmul.f32 %v79, %v79
    %v82 = vmul.f32 %v80, %v80
    %v83 = vsel %vm69, %v81, 0.0
    %84 = vadd.xlane.f32.xlu0 %v83
    %v85 = vpop.xlane.xlu0 %84
    %v86 = vsel %vm69, %v82, 0.0
    %87 = vadd.xlane.f32.xlu0 %v86
    %v88 = vpop.xlane.xlu0 %87
    %v89 = vmul.f32 %v85, %v76
    %v90 = vmul.f32 %v88, %v76
    %v91 = vadd.f32 %v89, 1e-05
    %v92 = vadd.f32 %v90, 1e-05
    %v93 = vrsqrt.pop %v91
    %v94 = vrsqrt.pop %v92
    %v95 = vmul.f32 %v79, %v93
    %v96 = vmul.f32 %v80, %v94
    %v97 = vlaneseq
    %v98 = vshrl.u32 %v97, 7
    %v99 = vsub.s32 0, %v98
    %v100 = vrot.slane %v68, %v99
    %v101 = vmul.f32 %v95, %v100
    %v102 = vmul.f32 %v96, %v100
    %v103 = vlaneseq
    %v104 = vshrl.u32 %v103, 7
    %v105 = vsub.s32 1, %v104
    %v106 = vrot.slane %v68, %v105
    %v107 = vadd.f32 %v101, %v106
    %v108 = vadd.f32 %v102, %v106
    %v109 = vpack.c.bf16 %v108, %v107
    %v110 = vld [vmem:[%s2] sm:$0xf]
    %v111 = vld [vmem:[%s2 + $0x4] sm:$0xf]
    %v112 = vld [vmem:[%s2 + $0x8] sm:$0xf]
    %v113 = vld [vmem:[%s2 + $0xc] sm:$0xf]
    %v118 = vunpack.c.l.b16 %v110
    %v119 = vunpack.c.l.b16 %v111
    %v120 = vunpack.c.l.b16 %v112
    %v121 = vunpack.c.l.b16 %v113
    %v122 = vpack.c.b16 %v119, %v118
    %v123 = vpack.c.b16 %v121, %v120
    %v127 = vsel %vm69, %v109, 0
    %129 = vmatprep.subr.bf16.mxu0 0
    %130 = vmatpush1.bf16.msra.mxu0 %v122
    %131 = vmatprep.subr.bf16.mxu0 0
    %132 = vmatpush1.bf16.msra.mxu0 %v123
    %133 = vmatprep.subr.bf16.mxu0 0
    %134 = vmatpush1.bf16.msra.mxu0 0
    %135 = vmatprep.subr.bf16.mxu0 0
    %136 = vmatpush1.bf16.msra.mxu0 0
    %137 = vmatprep.subr.bf16.mxu0 0
    %138 = vmatpush1.bf16.msra.mxu0 0
    %139 = vmatprep.subr.bf16.mxu0 0
    %140 = vmatpush1.bf16.msra.mxu0 0
    %141 = vmatprep.subr.bf16.mxu0 0
    %142 = vmatpush1.bf16.msra.mxu0 0
    %143 = vmatprep.subr.bf16.mxu0 0
    %144 = vmatpush1.bf16.msra.mxu0 0
    %145 = vmatprep.subr.bf16.mxu0 0
    %146 = vmatpush1.bf16.msra.mxu0 0
    %147 = vmatprep.subr.bf16.mxu0 0
    %148 = vmatpush1.bf16.msra.mxu0 0
    %149 = vmatprep.subr.bf16.mxu0 0
    %150 = vmatpush1.bf16.msra.mxu0 0
    %151 = vmatprep.subr.bf16.mxu0 0
    %152 = vmatpush1.bf16.msra.mxu0 0
    %153 = vmatprep.subr.bf16.mxu0 0
    %154 = vmatpush1.bf16.msra.mxu0 0
    %155 = vmatprep.subr.bf16.mxu0 0
    %156 = vmatpush1.bf16.msra.mxu0 0
    %157 = vmatprep.subr.bf16.mxu0 0
    %158 = vmatpush1.bf16.msra.mxu0 0
    %159 = vmatprep.subr.bf16.mxu0 0
    %160 = vmatpush1.bf16.msra.mxu0 0
    %161 = vmatprep.mubr.bf16.mxu0 0
    %162 = vmatmul.mubr.bf16.gmra.mrb[0].mxu0 %v127
    %v163 = vpop.f32.mrb[0].mxu0
    %v164 = vadd.f32 0.0, %v163
    %v165 = vpop.f32.mrb[0].mxu0
    %v166 = vpop.f32.mrb[0].mxu0
    %v167 = vadd.f32 0.0, %v166
    %v168 = vpop.f32.mrb[0].mxu0
    %169 = vdwg.mxu0
    %v170 = vpack.c.bf16 %v164, %v164
    %v171 = vpack.c.bf16 %v167, %v167
    %173 = vrot.lane.b32.xlu0 %v170, 96
    %v174 = vpop.permute.xlu0 %173
    %vm175 = vcmask 64512
    %v177 = vsel %vm175, %v170, 0
    %v180 = vsel %vm175, %v174, 0
    %182 = vmatprep.subr.bf16.mxu0 0
    %183 = vmatpush1.bf16.xpose.msra.mxu0 %v180
    %184 = vmatprep.subr.bf16.mxu0 0
    %185 = vmatpush1.bf16.xpose.msra.mxu0 0
    %186 = vmatprep.subr.bf16.mxu0 0
    %187 = vmatpush1.bf16.xpose.msra.mxu0 0
    %188 = vmatprep.subr.bf16.mxu0 0
    %189 = vmatpush1.bf16.xpose.msra.mxu0 0
    %190 = vmatprep.subr.bf16.mxu0 0
    %191 = vmatpush1.bf16.xpose.msra.mxu0 0
    %192 = vmatprep.subr.bf16.mxu0 0
    %193 = vmatpush1.bf16.xpose.msra.mxu0 0
    %194 = vmatprep.subr.bf16.mxu0 0
    %195 = vmatpush1.bf16.xpose.msra.mxu0 0
    %196 = vmatprep.subr.bf16.mxu0 0
    %197 = vmatpush1.bf16.xpose.msra.mxu0 0
    %198 = vmatprep.subr.bf16.mxu0 0
    %199 = vmatpush1.bf16.xpose.msra.mxu0 0
    %200 = vmatprep.subr.bf16.mxu0 0
    %201 = vmatpush1.bf16.xpose.msra.mxu0 0
    %202 = vmatprep.subr.bf16.mxu0 0
    %203 = vmatpush1.bf16.xpose.msra.mxu0 0
    %204 = vmatprep.subr.bf16.mxu0 0
    %205 = vmatpush1.bf16.xpose.msra.mxu0 0
    %206 = vmatprep.subr.bf16.mxu0 0
    %207 = vmatpush1.bf16.xpose.msra.mxu0 0
    %208 = vmatprep.subr.bf16.mxu0 0
    %209 = vmatpush1.bf16.xpose.msra.mxu0 0
    %210 = vmatprep.subr.bf16.mxu0 0
    %211 = vmatpush1.bf16.xpose.msra.mxu0 0
    %212 = vmatprep.subr.bf16.mxu0 0
    %213 = vmatpush1.bf16.xpose.msra.mxu0 0
    %214 = vmatprep.mubr.bf16.mxu0 0
    %215 = vmatmul.mubr.bf16.gmra.mrb[0].mxu0 %v177
    %v216 = vpop.f32.mrb[0].mxu0
    %v217 = vadd.f32 0.0, %v216
    %v218 = vpop.f32.mrb[0].mxu0
    %v219 = vpop.f32.mrb[0].mxu0
    %v220 = vpop.f32.mrb[0].mxu0
    %221 = vdwg.mxu0
    %223 = vrot.lane.b32.xlu0 %v171, 96
    %v224 = vpop.permute.xlu0 %223
    %v226 = vsel %vm175, %v171, 0
    %v229 = vsel %vm175, %v224, 0
    %231 = vmatprep.subr.bf16.mxu0 0
    %232 = vmatpush1.bf16.xpose.msra.mxu0 %v229
    %233 = vmatprep.subr.bf16.mxu0 0
    %234 = vmatpush1.bf16.xpose.msra.mxu0 0
    %235 = vmatprep.subr.bf16.mxu0 0
    %236 = vmatpush1.bf16.xpose.msra.mxu0 0
    %237 = vmatprep.subr.bf16.mxu0 0
    %238 = vmatpush1.bf16.xpose.msra.mxu0 0
    %239 = vmatprep.subr.bf16.mxu0 0
    %240 = vmatpush1.bf16.xpose.msra.mxu0 0
    %241 = vmatprep.subr.bf16.mxu0 0
    %242 = vmatpush1.bf16.xpose.msra.mxu0 0
    %243 = vmatprep.subr.bf16.mxu0 0
    %244 = vmatpush1.bf16.xpose.msra.mxu0 0
    %245 = vmatprep.subr.bf16.mxu0 0
    %246 = vmatpush1.bf16.xpose.msra.mxu0 0
    %247 = vmatprep.subr.bf16.mxu0 0
    %248 = vmatpush1.bf16.xpose.msra.mxu0 0
    %249 = vmatprep.subr.bf16.mxu0 0
    %250 = vmatpush1.bf16.xpose.msra.mxu0 0
    %251 = vmatprep.subr.bf16.mxu0 0
    %252 = vmatpush1.bf16.xpose.msra.mxu0 0
    %253 = vmatprep.subr.bf16.mxu0 0
    %254 = vmatpush1.bf16.xpose.msra.mxu0 0
    %255 = vmatprep.subr.bf16.mxu0 0
    %256 = vmatpush1.bf16.xpose.msra.mxu0 0
    %257 = vmatprep.subr.bf16.mxu0 0
    %258 = vmatpush1.bf16.xpose.msra.mxu0 0
    %259 = vmatprep.subr.bf16.mxu0 0
    %260 = vmatpush1.bf16.xpose.msra.mxu0 0
    %261 = vmatprep.subr.bf16.mxu0 0
    %262 = vmatpush1.bf16.xpose.msra.mxu0 0
    %263 = vmatprep.mubr.bf16.mxu0 0
    %264 = vmatmul.mubr.bf16.gmra.mrb[0].mxu0 %v226
    %v265 = vpop.f32.mrb[0].mxu0
    %v266 = vadd.f32 0.0, %v265
    %v267 = vpop.f32.mrb[0].mxu0
    %v268 = vpop.f32.mrb[0].mxu0
    %v269 = vpop.f32.mrb[0].mxu0
    %270 = vdwg.mxu0
    %v271 = vmul.f32 %v217, 0.35355338
    %v272 = vmul.f32 %v266, 0.35355338
    %v273 = vsel %vm175, %v271, -inf
    %274 = vmax.xlane.f32.xlu0 %v273
    %v275 = vpop.xlane.xlu0 %274
    %v276 = vsel %vm175, %v272, -inf
    %277 = vmax.xlane.f32.xlu0 %v276
    %v278 = vpop.xlane.xlu0 %277
    %v279 = vsub.f32 %v271, %v275
    %v280 = vsub.f32 %v272, %v278
    %v281 = vmul.f32 %v279, 1.442695
    %v282 = vpow.pop %v281
    %v283 = vmul.f32 %v280, 1.442695
    %v284 = vpow.pop %v283
    %v285 = vsel %vm175, %v282, 0.0
    %286 = vadd.xlane.f32.xlu0 %v285
    %v287 = vpop.xlane.xlu0 %286
    %v288 = vsel %vm175, %v284, 0.0
    %289 = vadd.xlane.f32.xlu0 %v288
    %v290 = vpop.xlane.xlu0 %289
    %v291 = vrcp.pop %v287
    %v292 = vmul.f32 %v282, %v291
    %v293 = vrcp.pop %v290
    %v294 = vmul.f32 %v284, %v293
    %v295 = vpack.c.bf16 %v292, %v292
    %v296 = vpack.c.bf16 %v294, %v294
    %297 = vrot.lane.b32.xlu0 %v170, 64
    %v298 = vpop.permute.xlu0 %297
    %v300 = vsel %vm175, %v295, 0
    %vm302 = vcmask 1043456
    %v304 = vsel %vm302, %v298, 0
    %306 = vmatprep.subr.bf16.mxu0 0
    %307 = vmatpush1.bf16.msra.mxu0 %v304
    %308 = vmatprep.subr.bf16.mxu0 0
    %309 = vmatpush1.bf16.msra.mxu0 0
    %310 = vmatprep.subr.bf16.mxu0 0
    %311 = vmatpush1.bf16.msra.mxu0 0
    %312 = vmatprep.subr.bf16.mxu0 0
    %313 = vmatpush1.bf16.msra.mxu0 0
    %314 = vmatprep.subr.bf16.mxu0 0
    %315 = vmatpush1.bf16.msra.mxu0 0
    %316 = vmatprep.subr.bf16.mxu0 0
    %317 = vmatpush1.bf16.msra.mxu0 0
    %318 = vmatprep.subr.bf16.mxu0 0
    %319 = vmatpush1.bf16.msra.mxu0 0
    %320 = vmatprep.subr.bf16.mxu0 0
    %321 = vmatpush1.bf16.msra.mxu0 0
    %322 = vmatprep.subr.bf16.mxu0 0
    %323 = vmatpush1.bf16.msra.mxu0 0
    %324 = vmatprep.subr.bf16.mxu0 0
    %325 = vmatpush1.bf16.msra.mxu0 0
    %326 = vmatprep.subr.bf16.mxu0 0
    %327 = vmatpush1.bf16.msra.mxu0 0
    %328 = vmatprep.subr.bf16.mxu0 0
    %329 = vmatpush1.bf16.msra.mxu0 0
    %330 = vmatprep.subr.bf16.mxu0 0
    %331 = vmatpush1.bf16.msra.mxu0 0
    %332 = vmatprep.subr.bf16.mxu0 0
    %333 = vmatpush1.bf16.msra.mxu0 0
    %334 = vmatprep.subr.bf16.mxu0 0
    %335 = vmatpush1.bf16.msra.mxu0 0
    %336 = vmatprep.subr.bf16.mxu0 0
    %337 = vmatpush1.bf16.msra.mxu0 0
    %338 = vmatprep.mubr.bf16.mxu0 0
    %339 = vmatmul.mubr.bf16.gmra.mrb[0].mxu0 %v300
    %v340 = vpop.f32.mrb[0].mxu0
    %v341 = vadd.f32 0.0, %v340
    %v342 = vpop.f32.mrb[0].mxu0
    %v343 = vpop.f32.mrb[0].mxu0
    %v344 = vpop.f32.mrb[0].mxu0
    %345 = vdwg.mxu0
    %346 = vrot.lane.b32.xlu0 %v171, 64
    %v347 = vpop.permute.xlu0 %346
    %v349 = vsel %vm175, %v296, 0
    %v352 = vsel %vm302, %v347, 0
    %354 = vmatprep.subr.bf16.mxu0 0
    %355 = vmatpush1.bf16.msra.mxu0 %v352
    %356 = vmatprep.subr.bf16.mxu0 0
    %357 = vmatpush1.bf16.msra.mxu0 0
    %358 = vmatprep.subr.bf16.mxu0 0
    %359 = vmatpush1.bf16.msra.mxu0 0
    %360 = vmatprep.subr.bf16.mxu0 0
    %361 = vmatpush1.bf16.msra.mxu0 0
    %362 = vmatprep.subr.bf16.mxu0 0
    %363 = vmatpush1.bf16.msra.mxu0 0
    %364 = vmatprep.subr.bf16.mxu0 0
    %365 = vmatpush1.bf16.msra.mxu0 0
    %366 = vmatprep.subr.bf16.mxu0 0
    %367 = vmatpush1.bf16.msra.mxu0 0
    %368 = vmatprep.subr.bf16.mxu0 0
    %369 = vmatpush1.bf16.msra.mxu0 0
    %370 = vmatprep.subr.bf16.mxu0 0
    %371 = vmatpush1.bf16.msra.mxu0 0
    %372 = vmatprep.subr.bf16.mxu0 0
    %373 = vmatpush1.bf16.msra.mxu0 0
    %374 = vmatprep.subr.bf16.mxu0 0
    %375 = vmatpush1.bf16.msra.mxu0 0
    %376 = vmatprep.subr.bf16.mxu0 0
    %377 = vmatpush1.bf16.msra.mxu0 0
    %378 = vmatprep.subr.bf16.mxu0 0
    %379 = vmatpush1.bf16.msra.mxu0 0
    %380 = vmatprep.subr.bf16.mxu0 0
    %381 = vmatpush1.bf16.msra.mxu0 0
    %382 = vmatprep.subr.bf16.mxu0 0
    %383 = vmatpush1.bf16.msra.mxu0 0
    %384 = vmatprep.subr.bf16.mxu0 0
    %385 = vmatpush1.bf16.msra.mxu0 0
    %386 = vmatprep.mubr.bf16.mxu0 0
    %387 = vmatmul.mubr.bf16.gmra.mrb[0].mxu0 %v349
    %v388 = vpop.f32.mrb[0].mxu0
    %v389 = vadd.f32 0.0, %v388
    %v390 = vpop.f32.mrb[0].mxu0
    %v391 = vpop.f32.mrb[0].mxu0
    %v392 = vpop.f32.mrb[0].mxu0
    %393 = vdwg.mxu0
    %v394 = vpack.c.bf16 %v341, %v341
    %v395 = vpack.c.bf16 %v389, %v389
    %396 = vrot.lane.b32.xlu0 %v170, 120
    %v397 = vpop.permute.xlu0 %396
    %398 = vrot.lane.b32.xlu0 %v170, 88
    %v399 = vpop.permute.xlu0 %398
    %v401 = vsel %vm175, %v397, 0
    %v404 = vsel %vm175, %v399, 0
    %406 = vmatprep.subr.bf16.mxu0 0
    %407 = vmatpush1.bf16.xpose.msra.mxu0 %v404
    %408 = vmatprep.subr.bf16.mxu0 0
    %409 = vmatpush1.bf16.xpose.msra.mxu0 0
    %410 = vmatprep.subr.bf16.mxu0 0
    %411 = vmatpush1.bf16.xpose.msra.mxu0 0
    %412 = vmatprep.subr.bf16.mxu0 0
    %413 = vmatpush1.bf16.xpose.msra.mxu0 0
    %414 = vmatprep.subr.bf16.mxu0 0
    %415 = vmatpush1.bf16.xpose.msra.mxu0 0
    %416 = vmatprep.subr.bf16.mxu0 0
    %417 = vmatpush1.bf16.xpose.msra.mxu0 0
    %418 = vmatprep.subr.bf16.mxu0 0
    %419 = vmatpush1.bf16.xpose.msra.mxu0 0
    %420 = vmatprep.subr.bf16.mxu0 0
    %421 = vmatpush1.bf16.xpose.msra.mxu0 0
    %422 = vmatprep.subr.bf16.mxu0 0
    %423 = vmatpush1.bf16.xpose.msra.mxu0 0
    %424 = vmatprep.subr.bf16.mxu0 0
    %425 = vmatpush1.bf16.xpose.msra.mxu0 0
    %426 = vmatprep.subr.bf16.mxu0 0
    %427 = vmatpush1.bf16.xpose.msra.mxu0 0
    %428 = vmatprep.subr.bf16.mxu0 0
    %429 = vmatpush1.bf16.xpose.msra.mxu0 0
    %430 = vmatprep.subr.bf16.mxu0 0
    %431 = vmatpush1.bf16.xpose.msra.mxu0 0
    %432 = vmatprep.subr.bf16.mxu0 0
    %433 = vmatpush1.bf16.xpose.msra.mxu0 0
    %434 = vmatprep.subr.bf16.mxu0 0
    %435 = vmatpush1.bf16.xpose.msra.mxu0 0
    %436 = vmatprep.subr.bf16.mxu0 0
    %437 = vmatpush1.bf16.xpose.msra.mxu0 0
    %438 = vmatprep.mubr.bf16.mxu0 0
    %439 = vmatmul.mubr.bf16.gmra.mrb[0].mxu0 %v401
    %v440 = vpop.f32.mrb[0].mxu0
    %v441 = vadd.f32 0.0, %v440
    %v442 = vpop.f32.mrb[0].mxu0
    %v443 = vpop.f32.mrb[0].mxu0
    %v444 = vpop.f32.mrb[0].mxu0
    %445 = vdwg.mxu0
    %446 = vrot.lane.b32.xlu0 %v171, 120
    %v447 = vpop.permute.xlu0 %446
    %448 = vrot.lane.b32.xlu0 %v171, 88
    %v449 = vpop.permute.xlu0 %448
    %v451 = vsel %vm175, %v447, 0
    %v454 = vsel %vm175, %v449, 0
    %456 = vmatprep.subr.bf16.mxu0 0
    %457 = vmatpush1.bf16.xpose.msra.mxu0 %v454
    %458 = vmatprep.subr.bf16.mxu0 0
    %459 = vmatpush1.bf16.xpose.msra.mxu0 0
    %460 = vmatprep.subr.bf16.mxu0 0
    %461 = vmatpush1.bf16.xpose.msra.mxu0 0
    %462 = vmatprep.subr.bf16.mxu0 0
    %463 = vmatpush1.bf16.xpose.msra.mxu0 0
    %464 = vmatprep.subr.bf16.mxu0 0
    %465 = vmatpush1.bf16.xpose.msra.mxu0 0
    %466 = vmatprep.subr.bf16.mxu0 0
    %467 = vmatpush1.bf16.xpose.msra.mxu0 0
    %468 = vmatprep.subr.bf16.mxu0 0
    %469 = vmatpush1.bf16.xpose.msra.mxu0 0
    %470 = vmatprep.subr.bf16.mxu0 0
    %471 = vmatpush1.bf16.xpose.msra.mxu0 0
    %472 = vmatprep.subr.bf16.mxu0 0
    %473 = vmatpush1.bf16.xpose.msra.mxu0 0
    %474 = vmatprep.subr.bf16.mxu0 0
    %475 = vmatpush1.bf16.xpose.msra.mxu0 0
    %476 = vmatprep.subr.bf16.mxu0 0
    %477 = vmatpush1.bf16.xpose.msra.mxu0 0
    %478 = vmatprep.subr.bf16.mxu0 0
    %479 = vmatpush1.bf16.xpose.msra.mxu0 0
    %480 = vmatprep.subr.bf16.mxu0 0
    %481 = vmatpush1.bf16.xpose.msra.mxu0 0
    %482 = vmatprep.subr.bf16.mxu0 0
    %483 = vmatpush1.bf16.xpose.msra.mxu0 0
    %484 = vmatprep.subr.bf16.mxu0 0
    %485 = vmatpush1.bf16.xpose.msra.mxu0 0
    %486 = vmatprep.subr.bf16.mxu0 0
    %487 = vmatpush1.bf16.xpose.msra.mxu0 0
    %488 = vmatprep.mubr.bf16.mxu0 0
    %489 = vmatmul.mubr.bf16.gmra.mrb[0].mxu0 %v451
    %v490 = vpop.f32.mrb[0].mxu0
    %v491 = vadd.f32 0.0, %v490
    %v492 = vpop.f32.mrb[0].mxu0
    %v493 = vpop.f32.mrb[0].mxu0
    %v494 = vpop.f32.mrb[0].mxu0
    %495 = vdwg.mxu0
    %v496 = vmul.f32 %v441, 0.35355338
    %v497 = vmul.f32 %v491, 0.35355338
    %v498 = vsel %vm175, %v496, -inf
    %499 = vmax.xlane.f32.xlu0 %v498
    %v500 = vpop.xlane.xlu0 %499
    %v501 = vsel %vm175, %v497, -inf
    %502 = vmax.xlane.f32.xlu0 %v501
    %v503 = vpop.xlane.xlu0 %502
    %v504 = vsub.f32 %v496, %v500
    %v505 = vsub.f32 %v497, %v503
    %v506 = vmul.f32 %v504, 1.442695
    %v507 = vpow.pop %v506
    %v508 = vmul.f32 %v505, 1.442695
    %v509 = vpow.pop %v508
    %v510 = vsel %vm175, %v507, 0.0
    %511 = vadd.xlane.f32.xlu0 %v510
    %v512 = vpop.xlane.xlu0 %511
    %v513 = vsel %vm175, %v509, 0.0
    %514 = vadd.xlane.f32.xlu0 %v513
    %v515 = vpop.xlane.xlu0 %514
    %v516 = vrcp.pop %v512
    %v517 = vmul.f32 %v507, %v516
    %v518 = vrcp.pop %v515
    %v519 = vmul.f32 %v509, %v518
    %v520 = vpack.c.bf16 %v517, %v517
    %v521 = vpack.c.bf16 %v519, %v519
    %522 = vrot.lane.b32.xlu0 %v170, 56
    %v523 = vpop.permute.xlu0 %522
    %v525 = vsel %vm175, %v520, 0
    %v528 = vsel %vm302, %v523, 0
    %530 = vmatprep.subr.bf16.mxu0 0
    %531 = vmatpush1.bf16.msra.mxu0 %v528
    %532 = vmatprep.subr.bf16.mxu0 0
    %533 = vmatpush1.bf16.msra.mxu0 0
    %534 = vmatprep.subr.bf16.mxu0 0
    %535 = vmatpush1.bf16.msra.mxu0 0
    %536 = vmatprep.subr.bf16.mxu0 0
    %537 = vmatpush1.bf16.msra.mxu0 0
    %538 = vmatprep.subr.bf16.mxu0 0
    %539 = vmatpush1.bf16.msra.mxu0 0
    %540 = vmatprep.subr.bf16.mxu0 0
    %541 = vmatpush1.bf16.msra.mxu0 0
    %542 = vmatprep.subr.bf16.mxu0 0
    %543 = vmatpush1.bf16.msra.mxu0 0
    %544 = vmatprep.subr.bf16.mxu0 0
    %545 = vmatpush1.bf16.msra.mxu0 0
    %546 = vmatprep.subr.bf16.mxu0 0
    %547 = vmatpush1.bf16.msra.mxu0 0
    %548 = vmatprep.subr.bf16.mxu0 0
    %549 = vmatpush1.bf16.msra.mxu0 0
    %550 = vmatprep.subr.bf16.mxu0 0
    %551 = vmatpush1.bf16.msra.mxu0 0
    %552 = vmatprep.subr.bf16.mxu0 0
    %553 = vmatpush1.bf16.msra.mxu0 0
    %554 = vmatprep.subr.bf16.mxu0 0
    %555 = vmatpush1.bf16.msra.mxu0 0
    %556 = vmatprep.subr.bf16.mxu0 0
    %557 = vmatpush1.bf16.msra.mxu0 0
    %558 = vmatprep.subr.bf16.mxu0 0
    %559 = vmatpush1.bf16.msra.mxu0 0
    %560 = vmatprep.subr.bf16.mxu0 0
    %561 = vmatpush1.bf16.msra.mxu0 0
    %562 = vmatprep.mubr.bf16.mxu0 0
    %563 = vmatmul.mubr.bf16.gmra.mrb[0].mxu0 %v525
    %v564 = vpop.f32.mrb[0].mxu0
    %v565 = vadd.f32 0.0, %v564
    %v566 = vpop.f32.mrb[0].mxu0
    %v567 = vpop.f32.mrb[0].mxu0
    %v568 = vpop.f32.mrb[0].mxu0
    %569 = vdwg.mxu0
    %570 = vrot.lane.b32.xlu0 %v171, 56
    %v571 = vpop.permute.xlu0 %570
    %v573 = vsel %vm175, %v521, 0
    %v576 = vsel %vm302, %v571, 0
    %578 = vmatprep.subr.bf16.mxu0 0
    %579 = vmatpush1.bf16.msra.mxu0 %v576
    %580 = vmatprep.subr.bf16.mxu0 0
    %581 = vmatpush1.bf16.msra.mxu0 0
    %582 = vmatprep.subr.bf16.mxu0 0
    %583 = vmatpush1.bf16.msra.mxu0 0
    %584 = vmatprep.subr.bf16.mxu0 0
    %585 = vmatpush1.bf16.msra.mxu0 0
    %586 = vmatprep.subr.bf16.mxu0 0
    %587 = vmatpush1.bf16.msra.mxu0 0
    %588 = vmatprep.subr.bf16.mxu0 0
    %589 = vmatpush1.bf16.msra.mxu0 0
    %590 = vmatprep.subr.bf16.mxu0 0
    %591 = vmatpush1.bf16.msra.mxu0 0
    %592 = vmatprep.subr.bf16.mxu0 0
    %593 = vmatpush1.bf16.msra.mxu0 0
    %594 = vmatprep.subr.bf16.mxu0 0
    %595 = vmatpush1.bf16.msra.mxu0 0
    %596 = vmatprep.subr.bf16.mxu0 0
    %597 = vmatpush1.bf16.msra.mxu0 0
    %598 = vmatprep.subr.bf16.mxu0 0
    %599 = vmatpush1.bf16.msra.mxu0 0
    %600 = vmatprep.subr.bf16.mxu0 0
    %601 = vmatpush1.bf16.msra.mxu0 0
    %602 = vmatprep.subr.bf16.mxu0 0
    %603 = vmatpush1.bf16.msra.mxu0 0
    %604 = vmatprep.subr.bf16.mxu0 0
    %605 = vmatpush1.bf16.msra.mxu0 0
    %606 = vmatprep.subr.bf16.mxu0 0
    %607 = vmatpush1.bf16.msra.mxu0 0
    %608 = vmatprep.subr.bf16.mxu0 0
    %609 = vmatpush1.bf16.msra.mxu0 0
    %610 = vmatprep.mubr.bf16.mxu0 0
    %611 = vmatmul.mubr.bf16.gmra.mrb[0].mxu0 %v573
    %v612 = vpop.f32.mrb[0].mxu0
    %v613 = vadd.f32 0.0, %v612
    %v614 = vpop.f32.mrb[0].mxu0
    %v615 = vpop.f32.mrb[0].mxu0
    %v616 = vpop.f32.mrb[0].mxu0
    %617 = vdwg.mxu0
    %v618 = vpack.c.bf16 %v565, %v565
    %v619 = vpack.c.bf16 %v613, %v613
    %620 = vrot.lane.b32.xlu0 %v170, 112
    %v621 = vpop.permute.xlu0 %620
    %622 = vrot.lane.b32.xlu0 %v170, 80
    %v623 = vpop.permute.xlu0 %622
    %v625 = vsel %vm175, %v621, 0
    %v628 = vsel %vm175, %v623, 0
    %630 = vmatprep.subr.bf16.mxu0 0
    %631 = vmatpush1.bf16.xpose.msra.mxu0 %v628
    %632 = vmatprep.subr.bf16.mxu0 0
    %633 = vmatpush1.bf16.xpose.msra.mxu0 0
    %634 = vmatprep.subr.bf16.mxu0 0
    %635 = vmatpush1.bf16.xpose.msra.mxu0 0
    %636 = vmatprep.subr.bf16.mxu0 0
    %637 = vmatpush1.bf16.xpose.msra.mxu0 0
    %638 = vmatprep.subr.bf16.mxu0 0
    %639 = vmatpush1.bf16.xpose.msra.mxu0 0
    %640 = vmatprep.subr.bf16.mxu0 0
    %641 = vmatpush1.bf16.xpose.msra.mxu0 0
    %642 = vmatprep.subr.bf16.mxu0 0
    %643 = vmatpush1.bf16.xpose.msra.mxu0 0
    %644 = vmatprep.subr.bf16.mxu0 0
    %645 = vmatpush1.bf16.xpose.msra.mxu0 0
    %646 = vmatprep.subr.bf16.mxu0 0
    %647 = vmatpush1.bf16.xpose.msra.mxu0 0
    %648 = vmatprep.subr.bf16.mxu0 0
    %649 = vmatpush1.bf16.xpose.msra.mxu0 0
    %650 = vmatprep.subr.bf16.mxu0 0
    %651 = vmatpush1.bf16.xpose.msra.mxu0 0
    %652 = vmatprep.subr.bf16.mxu0 0
    %653 = vmatpush1.bf16.xpose.msra.mxu0 0
    %654 = vmatprep.subr.bf16.mxu0 0
    %655 = vmatpush1.bf16.xpose.msra.mxu0 0
    %656 = vmatprep.subr.bf16.mxu0 0
    %657 = vmatpush1.bf16.xpose.msra.mxu0 0
    %658 = vmatprep.subr.bf16.mxu0 0
    %659 = vmatpush1.bf16.xpose.msra.mxu0 0
    %660 = vmatprep.subr.bf16.mxu0 0
    %661 = vmatpush1.bf16.xpose.msra.mxu0 0
    %662 = vmatprep.mubr.bf16.mxu0 0
    %663 = vmatmul.mubr.bf16.gmra.mrb[0].mxu0 %v625
    %v664 = vpop.f32.mrb[0].mxu0
    %v665 = vadd.f32 0.0, %v664
    %v666 = vpop.f32.mrb[0].mxu0
    %v667 = vpop.f32.mrb[0].mxu0
    %v668 = vpop.f32.mrb[0].mxu0
    %669 = vdwg.mxu0
    %670 = vrot.lane.b32.xlu0 %v171, 112
    %v671 = vpop.permute.xlu0 %670
    %672 = vrot.lane.b32.xlu0 %v171, 80
    %v673 = vpop.permute.xlu0 %672
    %v675 = vsel %vm175, %v671, 0
    %v678 = vsel %vm175, %v673, 0
    %680 = vmatprep.subr.bf16.mxu0 0
    %681 = vmatpush1.bf16.xpose.msra.mxu0 %v678
    %682 = vmatprep.subr.bf16.mxu0 0
    %683 = vmatpush1.bf16.xpose.msra.mxu0 0
    %684 = vmatprep.subr.bf16.mxu0 0
    %685 = vmatpush1.bf16.xpose.msra.mxu0 0
    %686 = vmatprep.subr.bf16.mxu0 0
    %687 = vmatpush1.bf16.xpose.msra.mxu0 0
    %688 = vmatprep.subr.bf16.mxu0 0
    %689 = vmatpush1.bf16.xpose.msra.mxu0 0
    %690 = vmatprep.subr.bf16.mxu0 0
    %691 = vmatpush1.bf16.xpose.msra.mxu0 0
    %692 = vmatprep.subr.bf16.mxu0 0
    %693 = vmatpush1.bf16.xpose.msra.mxu0 0
    %694 = vmatprep.subr.bf16.mxu0 0
    %695 = vmatpush1.bf16.xpose.msra.mxu0 0
    %696 = vmatprep.subr.bf16.mxu0 0
    %697 = vmatpush1.bf16.xpose.msra.mxu0 0
    %698 = vmatprep.subr.bf16.mxu0 0
    %699 = vmatpush1.bf16.xpose.msra.mxu0 0
    %700 = vmatprep.subr.bf16.mxu0 0
    %701 = vmatpush1.bf16.xpose.msra.mxu0 0
    %702 = vmatprep.subr.bf16.mxu0 0
    %703 = vmatpush1.bf16.xpose.msra.mxu0 0
    %704 = vmatprep.subr.bf16.mxu0 0
    %705 = vmatpush1.bf16.xpose.msra.mxu0 0
    %706 = vmatprep.subr.bf16.mxu0 0
    %707 = vmatpush1.bf16.xpose.msra.mxu0 0
    %708 = vmatprep.subr.bf16.mxu0 0
    %709 = vmatpush1.bf16.xpose.msra.mxu0 0
    %710 = vmatprep.subr.bf16.mxu0 0
    %711 = vmatpush1.bf16.xpose.msra.mxu0 0
    %712 = vmatprep.mubr.bf16.mxu0 0
    %713 = vmatmul.mubr.bf16.gmra.mrb[0].mxu0 %v675
    %v714 = vpop.f32.mrb[0].mxu0
    %v715 = vadd.f32 0.0, %v714
    %v716 = vpop.f32.mrb[0].mxu0
    %v717 = vpop.f32.mrb[0].mxu0
    %v718 = vpop.f32.mrb[0].mxu0
    %719 = vdwg.mxu0
    %v720 = vmul.f32 %v665, 0.35355338
    %v721 = vmul.f32 %v715, 0.35355338
    %v722 = vsel %vm175, %v720, -inf
    %723 = vmax.xlane.f32.xlu0 %v722
    %v724 = vpop.xlane.xlu0 %723
    %v725 = vsel %vm175, %v721, -inf
    %726 = vmax.xlane.f32.xlu0 %v725
    %v727 = vpop.xlane.xlu0 %726
    %v728 = vsub.f32 %v720, %v724
    %v729 = vsub.f32 %v721, %v727
    %v730 = vmul.f32 %v728, 1.442695
    %v731 = vpow.pop %v730
    %v732 = vmul.f32 %v729, 1.442695
    %v733 = vpow.pop %v732
    %v734 = vsel %vm175, %v731, 0.0
    %735 = vadd.xlane.f32.xlu0 %v734
    %v736 = vpop.xlane.xlu0 %735
    %v737 = vsel %vm175, %v733, 0.0
    %738 = vadd.xlane.f32.xlu0 %v737
    %v739 = vpop.xlane.xlu0 %738
    %v740 = vrcp.pop %v736
    %v741 = vmul.f32 %v731, %v740
    %v742 = vrcp.pop %v739
    %v743 = vmul.f32 %v733, %v742
    %v744 = vpack.c.bf16 %v741, %v741
    %v745 = vpack.c.bf16 %v743, %v743
    %746 = vrot.lane.b32.xlu0 %v170, 48
    %v747 = vpop.permute.xlu0 %746
    %v749 = vsel %vm175, %v744, 0
    %v752 = vsel %vm302, %v747, 0
    %754 = vmatprep.subr.bf16.mxu0 0
    %755 = vmatpush1.bf16.msra.mxu0 %v752
    %756 = vmatprep.subr.bf16.mxu0 0
    %757 = vmatpush1.bf16.msra.mxu0 0
    %758 = vmatprep.subr.bf16.mxu0 0
    %759 = vmatpush1.bf16.msra.mxu0 0
    %760 = vmatprep.subr.bf16.mxu0 0
    %761 = vmatpush1.bf16.msra.mxu0 0
    %762 = vmatprep.subr.bf16.mxu0 0
    %763 = vmatpush1.bf16.msra.mxu0 0
    %764 = vmatprep.subr.bf16.mxu0 0
    %765 = vmatpush1.bf16.msra.mxu0 0
    %766 = vmatprep.subr.bf16.mxu0 0
    %767 = vmatpush1.bf16.msra.mxu0 0
    %768 = vmatprep.subr.bf16.mxu0 0
    %769 = vmatpush1.bf16.msra.mxu0 0
    %770 = vmatprep.subr.bf16.mxu0 0
    %771 = vmatpush1.bf16.msra.mxu0 0
    %772 = vmatprep.subr.bf16.mxu0 0
    %773 = vmatpush1.bf16.msra.mxu0 0
    %774 = vmatprep.subr.bf16.mxu0 0
    %775 = vmatpush1.bf16.msra.mxu0 0
    %776 = vmatprep.subr.bf16.mxu0 0
    %777 = vmatpush1.bf16.msra.mxu0 0
    %778 = vmatprep.subr.bf16.mxu0 0
    %779 = vmatpush1.bf16.msra.mxu0 0
    %780 = vmatprep.subr.bf16.mxu0 0
    %781 = vmatpush1.bf16.msra.mxu0 0
    %782 = vmatprep.subr.bf16.mxu0 0
    %783 = vmatpush1.bf16.msra.mxu0 0
    %784 = vmatprep.subr.bf16.mxu0 0
    %785 = vmatpush1.bf16.msra.mxu0 0
    %786 = vmatprep.mubr.bf16.mxu0 0
    %787 = vmatmul.mubr.bf16.gmra.mrb[0].mxu0 %v749
    %v788 = vpop.f32.mrb[0].mxu0
    %v789 = vadd.f32 0.0, %v788
    %v790 = vpop.f32.mrb[0].mxu0
    %v791 = vpop.f32.mrb[0].mxu0
    %v792 = vpop.f32.mrb[0].mxu0
    %793 = vdwg.mxu0
    %794 = vrot.lane.b32.xlu0 %v171, 48
    %v795 = vpop.permute.xlu0 %794
    %v797 = vsel %vm175, %v745, 0
    %v800 = vsel %vm302, %v795, 0
    %802 = vmatprep.subr.bf16.mxu0 0
    %803 = vmatpush1.bf16.msra.mxu0 %v800
    %804 = vmatprep.subr.bf16.mxu0 0
    %805 = vmatpush1.bf16.msra.mxu0 0
    %806 = vmatprep.subr.bf16.mxu0 0
    %807 = vmatpush1.bf16.msra.mxu0 0
    %808 = vmatprep.subr.bf16.mxu0 0
    %809 = vmatpush1.bf16.msra.mxu0 0
    %810 = vmatprep.subr.bf16.mxu0 0
    %811 = vmatpush1.bf16.msra.mxu0 0
    %812 = vmatprep.subr.bf16.mxu0 0
    %813 = vmatpush1.bf16.msra.mxu0 0
    %814 = vmatprep.subr.bf16.mxu0 0
    %815 = vmatpush1.bf16.msra.mxu0 0
    %816 = vmatprep.subr.bf16.mxu0 0
    %817 = vmatpush1.bf16.msra.mxu0 0
    %818 = vmatprep.subr.bf16.mxu0 0
    %819 = vmatpush1.bf16.msra.mxu0 0
    %820 = vmatprep.subr.bf16.mxu0 0
    %821 = vmatpush1.bf16.msra.mxu0 0
    %822 = vmatprep.subr.bf16.mxu0 0
    %823 = vmatpush1.bf16.msra.mxu0 0
    %824 = vmatprep.subr.bf16.mxu0 0
    %825 = vmatpush1.bf16.msra.mxu0 0
    %826 = vmatprep.subr.bf16.mxu0 0
    %827 = vmatpush1.bf16.msra.mxu0 0
    %828 = vmatprep.subr.bf16.mxu0 0
    %829 = vmatpush1.bf16.msra.mxu0 0
    %830 = vmatprep.subr.bf16.mxu0 0
    %831 = vmatpush1.bf16.msra.mxu0 0
    %832 = vmatprep.subr.bf16.mxu0 0
    %833 = vmatpush1.bf16.msra.mxu0 0
    %834 = vmatprep.mubr.bf16.mxu0 0
    %835 = vmatmul.mubr.bf16.gmra.mrb[0].mxu0 %v797
    %v836 = vpop.f32.mrb[0].mxu0
    %v837 = vadd.f32 0.0, %v836
    %v838 = vpop.f32.mrb[0].mxu0
    %v839 = vpop.f32.mrb[0].mxu0
    %v840 = vpop.f32.mrb[0].mxu0
    %841 = vdwg.mxu0
    %v842 = vpack.c.bf16 %v789, %v789
    %v843 = vpack.c.bf16 %v837, %v837
    %844 = vrot.lane.b32.xlu0 %v170, 104
    %v845 = vpop.permute.xlu0 %844
    %846 = vrot.lane.b32.xlu0 %v170, 72
    %v847 = vpop.permute.xlu0 %846
    %v849 = vsel %vm175, %v845, 0
    %v852 = vsel %vm175, %v847, 0
    %854 = vmatprep.subr.bf16.mxu0 0
    %855 = vmatpush1.bf16.xpose.msra.mxu0 %v852
    %856 = vmatprep.subr.bf16.mxu0 0
    %857 = vmatpush1.bf16.xpose.msra.mxu0 0
    %858 = vmatprep.subr.bf16.mxu0 0
    %859 = vmatpush1.bf16.xpose.msra.mxu0 0
    %860 = vmatprep.subr.bf16.mxu0 0
    %861 = vmatpush1.bf16.xpose.msra.mxu0 0
    %862 = vmatprep.subr.bf16.mxu0 0
    %863 = vmatpush1.bf16.xpose.msra.mxu0 0
    %864 = vmatprep.subr.bf16.mxu0 0
    %865 = vmatpush1.bf16.xpose.msra.mxu0 0
    %866 = vmatprep.subr.bf16.mxu0 0
    %867 = vmatpush1.bf16.xpose.msra.mxu0 0
    %868 = vmatprep.subr.bf16.mxu0 0
    %869 = vmatpush1.bf16.xpose.msra.mxu0 0
    %870 = vmatprep.subr.bf16.mxu0 0
    %871 = vmatpush1.bf16.xpose.msra.mxu0 0
    %872 = vmatprep.subr.bf16.mxu0 0
    %873 = vmatpush1.bf16.xpose.msra.mxu0 0
    %874 = vmatprep.subr.bf16.mxu0 0
    %875 = vmatpush1.bf16.xpose.msra.mxu0 0
    %876 = vmatprep.subr.bf16.mxu0 0
    %877 = vmatpush1.bf16.xpose.msra.mxu0 0
    %878 = vmatprep.subr.bf16.mxu0 0
    %879 = vmatpush1.bf16.xpose.msra.mxu0 0
    %880 = vmatprep.subr.bf16.mxu0 0
    %881 = vmatpush1.bf16.xpose.msra.mxu0 0
    %882 = vmatprep.subr.bf16.mxu0 0
    %883 = vmatpush1.bf16.xpose.msra.mxu0 0
    %884 = vmatprep.subr.bf16.mxu0 0
    %885 = vmatpush1.bf16.xpose.msra.mxu0 0
    %886 = vmatprep.mubr.bf16.mxu0 0
    %887 = vmatmul.mubr.bf16.gmra.mrb[0].mxu0 %v849
    %v888 = vpop.f32.mrb[0].mxu0
    %v889 = vadd.f32 0.0, %v888
    %v890 = vpop.f32.mrb[0].mxu0
    %v891 = vpop.f32.mrb[0].mxu0
    %v892 = vpop.f32.mrb[0].mxu0
    %893 = vdwg.mxu0
    %894 = vrot.lane.b32.xlu0 %v171, 104
    %v895 = vpop.permute.xlu0 %894
    %896 = vrot.lane.b32.xlu0 %v171, 72
    %v897 = vpop.permute.xlu0 %896
    %v899 = vsel %vm175, %v895, 0
    %v902 = vsel %vm175, %v897, 0
    %904 = vmatprep.subr.bf16.mxu0 0
    %905 = vmatpush1.bf16.xpose.msra.mxu0 %v902
    %906 = vmatprep.subr.bf16.mxu0 0
    %907 = vmatpush1.bf16.xpose.msra.mxu0 0
    %908 = vmatprep.subr.bf16.mxu0 0
    %909 = vmatpush1.bf16.xpose.msra.mxu0 0
    %910 = vmatprep.subr.bf16.mxu0 0
    %911 = vmatpush1.bf16.xpose.msra.mxu0 0
    %912 = vmatprep.subr.bf16.mxu0 0
    %913 = vmatpush1.bf16.xpose.msra.mxu0 0
    %914 = vmatprep.subr.bf16.mxu0 0
    %915 = vmatpush1.bf16.xpose.msra.mxu0 0
    %916 = vmatprep.subr.bf16.mxu0 0
    %917 = vmatpush1.bf16.xpose.msra.mxu0 0
    %918 = vmatprep.subr.bf16.mxu0 0
    %919 = vmatpush1.bf16.xpose.msra.mxu0 0
    %920 = vmatprep.subr.bf16.mxu0 0
    %921 = vmatpush1.bf16.xpose.msra.mxu0 0
    %922 = vmatprep.subr.bf16.mxu0 0
    %923 = vmatpush1.bf16.xpose.msra.mxu0 0
    %924 = vmatprep.subr.bf16.mxu0 0
    %925 = vmatpush1.bf16.xpose.msra.mxu0 0
    %926 = vmatprep.subr.bf16.mxu0 0
    %927 = vmatpush1.bf16.xpose.msra.mxu0 0
    %928 = vmatprep.subr.bf16.mxu0 0
    %929 = vmatpush1.bf16.xpose.msra.mxu0 0
    %930 = vmatprep.subr.bf16.mxu0 0
    %931 = vmatpush1.bf16.xpose.msra.mxu0 0
    %932 = vmatprep.subr.bf16.mxu0 0
    %933 = vmatpush1.bf16.xpose.msra.mxu0 0
    %934 = vmatprep.subr.bf16.mxu0 0
    %935 = vmatpush1.bf16.xpose.msra.mxu0 0
    %936 = vmatprep.mubr.bf16.mxu0 0
    %937 = vmatmul.mubr.bf16.gmra.mrb[0].mxu0 %v899
    %v938 = vpop.f32.mrb[0].mxu0
    %v939 = vadd.f32 0.0, %v938
    %v940 = vpop.f32.mrb[0].mxu0
    %v941 = vpop.f32.mrb[0].mxu0
    %v942 = vpop.f32.mrb[0].mxu0
    %943 = vdwg.mxu0
    %v944 = vmul.f32 %v889, 0.35355338
    %v945 = vmul.f32 %v939, 0.35355338
    %v946 = vsel %vm175, %v944, -inf
    %947 = vmax.xlane.f32.xlu0 %v946
    %v948 = vpop.xlane.xlu0 %947
    %v949 = vsel %vm175, %v945, -inf
    %950 = vmax.xlane.f32.xlu0 %v949
    %v951 = vpop.xlane.xlu0 %950
    %v952 = vsub.f32 %v944, %v948
    %v953 = vsub.f32 %v945, %v951
    %v954 = vmul.f32 %v952, 1.442695
    %v955 = vpow.pop %v954
    %v956 = vmul.f32 %v953, 1.442695
    %v957 = vpow.pop %v956
    %v958 = vsel %vm175, %v955, 0.0
    %959 = vadd.xlane.f32.xlu0 %v958
    %v960 = vpop.xlane.xlu0 %959
    %v961 = vsel %vm175, %v957, 0.0
    %962 = vadd.xlane.f32.xlu0 %v961
    %v963 = vpop.xlane.xlu0 %962
    %v964 = vrcp.pop %v960
    %v965 = vmul.f32 %v955, %v964
    %v966 = vrcp.pop %v963
    %v967 = vmul.f32 %v957, %v966
    %v968 = vpack.c.bf16 %v965, %v965
    %v969 = vpack.c.bf16 %v967, %v967
    %970 = vrot.lane.b32.xlu0 %v170, 40
    %v971 = vpop.permute.xlu0 %970
    %v973 = vsel %vm175, %v968, 0
    %v976 = vsel %vm302, %v971, 0
    %978 = vmatprep.subr.bf16.mxu0 0
    %979 = vmatpush1.bf16.msra.mxu0 %v976
    %980 = vmatprep.subr.bf16.mxu0 0
    %981 = vmatpush1.bf16.msra.mxu0 0
    %982 = vmatprep.subr.bf16.mxu0 0
    %983 = vmatpush1.bf16.msra.mxu0 0
    %984 = vmatprep.subr.bf16.mxu0 0
    %985 = vmatpush1.bf16.msra.mxu0 0
    %986 = vmatprep.subr.bf16.mxu0 0
    %987 = vmatpush1.bf16.msra.mxu0 0
    %988 = vmatprep.subr.bf16.mxu0 0
    %989 = vmatpush1.bf16.msra.mxu0 0
    %990 = vmatprep.subr.bf16.mxu0 0
    %991 = vmatpush1.bf16.msra.mxu0 0
    %992 = vmatprep.subr.bf16.mxu0 0
    %993 = vmatpush1.bf16.msra.mxu0 0
    %994 = vmatprep.subr.bf16.mxu0 0
    %995 = vmatpush1.bf16.msra.mxu0 0
    %996 = vmatprep.subr.bf16.mxu0 0
    %997 = vmatpush1.bf16.msra.mxu0 0
    %998 = vmatprep.subr.bf16.mxu0 0
    %999 = vmatpush1.bf16.msra.mxu0 0
    %1000 = vmatprep.subr.bf16.mxu0 0
    %1001 = vmatpush1.bf16.msra.mxu0 0
    %1002 = vmatprep.subr.bf16.mxu0 0
    %1003 = vmatpush1.bf16.msra.mxu0 0
    %1004 = vmatprep.subr.bf16.mxu0 0
    %1005 = vmatpush1.bf16.msra.mxu0 0
    %1006 = vmatprep.subr.bf16.mxu0 0
    %1007 = vmatpush1.bf16.msra.mxu0 0
    %1008 = vmatprep.subr.bf16.mxu0 0
    %1009 = vmatpush1.bf16.msra.mxu0 0
    %1010 = vmatprep.mubr.bf16.mxu0 0
    %1011 = vmatmul.mubr.bf16.gmra.mrb[0].mxu0 %v973
    %v1012 = vpop.f32.mrb[0].mxu0
    %v1013 = vadd.f32 0.0, %v1012
    %v1014 = vpop.f32.mrb[0].mxu0
    %v1015 = vpop.f32.mrb[0].mxu0
    %v1016 = vpop.f32.mrb[0].mxu0
    %1017 = vdwg.mxu0
    %1018 = vrot.lane.b32.xlu0 %v171, 40
    %v1019 = vpop.permute.xlu0 %1018
    %v1021 = vsel %vm175, %v969, 0
    %v1024 = vsel %vm302, %v1019, 0
    %1026 = vmatprep.subr.bf16.mxu0 0
    %1027 = vmatpush1.bf16.msra.mxu0 %v1024
    %1028 = vmatprep.subr.bf16.mxu0 0
    %1029 = vmatpush1.bf16.msra.mxu0 0
    %1030 = vmatprep.subr.bf16.mxu0 0
    %1031 = vmatpush1.bf16.msra.mxu0 0
    %1032 = vmatprep.subr.bf16.mxu0 0
    %1033 = vmatpush1.bf16.msra.mxu0 0
    %1034 = vmatprep.subr.bf16.mxu0 0
    %1035 = vmatpush1.bf16.msra.mxu0 0
    %1036 = vmatprep.subr.bf16.mxu0 0
    %1037 = vmatpush1.bf16.msra.mxu0 0
    %1038 = vmatprep.subr.bf16.mxu0 0
    %1039 = vmatpush1.bf16.msra.mxu0 0
    %1040 = vmatprep.subr.bf16.mxu0 0
    %1041 = vmatpush1.bf16.msra.mxu0 0
    %1042 = vmatprep.subr.bf16.mxu0 0
    %1043 = vmatpush1.bf16.msra.mxu0 0
    %1044 = vmatprep.subr.bf16.mxu0 0
    %1045 = vmatpush1.bf16.msra.mxu0 0
    %1046 = vmatprep.subr.bf16.mxu0 0
    %1047 = vmatpush1.bf16.msra.mxu0 0
    %1048 = vmatprep.subr.bf16.mxu0 0
    %1049 = vmatpush1.bf16.msra.mxu0 0
    %1050 = vmatprep.subr.bf16.mxu0 0
    %1051 = vmatpush1.bf16.msra.mxu0 0
    %1052 = vmatprep.subr.bf16.mxu0 0
    %1053 = vmatpush1.bf16.msra.mxu0 0
    %1054 = vmatprep.subr.bf16.mxu0 0
    %1055 = vmatpush1.bf16.msra.mxu0 0
    %1056 = vmatprep.subr.bf16.mxu0 0
    %1057 = vmatpush1.bf16.msra.mxu0 0
    %1058 = vmatprep.mubr.bf16.mxu0 0
    %1059 = vmatmul.mubr.bf16.gmra.mrb[0].mxu0 %v1021
    %v1060 = vpop.f32.mrb[0].mxu0
    %v1061 = vadd.f32 0.0, %v1060
    %v1062 = vpop.f32.mrb[0].mxu0
    %v1063 = vpop.f32.mrb[0].mxu0
    %v1064 = vpop.f32.mrb[0].mxu0
    %1065 = vdwg.mxu0
    %v1066 = vpack.c.bf16 %v1013, %v1013
    %v1067 = vpack.c.bf16 %v1061, %v1061
    %1070 = vrot.lane.b32.xlu0 %v618, 8
    %v1071 = vpop.permute.xlu0 %1070
    %1072 = vrot.lane.b32.xlu0 %v619, 8
    %v1073 = vpop.permute.xlu0 %1072
    %1076 = vrot.lane.b32.xlu0 %v842, 16
    %v1077 = vpop.permute.xlu0 %1076
    %1078 = vrot.lane.b32.xlu0 %v843, 16
    %v1079 = vpop.permute.xlu0 %1078
    %1082 = vrot.lane.b32.xlu0 %v1066, 24
    %v1083 = vpop.permute.xlu0 %1082
    %1084 = vrot.lane.b32.xlu0 %v1067, 24
    %v1085 = vpop.permute.xlu0 %1084
    %v1088 = vsel %vm175, %v394, %v1071
    %v1091 = vsel %vm175, %v395, %v1073
    %vm1092 = vcmask 130048
    %v1094 = vsel %vm1092, %v1088, %v1077
    %v1096 = vsel %vm1092, %v1091, %v1079
    %vm1097 = vcmask 195584
    %v1099 = vsel %vm1097, %v1094, %v1083
    %v1101 = vsel %vm1097, %v1096, %v1085
    %v1102 = vld [vmem:[%s3] sm:$0xf]
    %v1103 = vld [vmem:[%s3 + $0x4] sm:$0xf]
    %v1104 = vld [vmem:[%s3 + $0x8] sm:$0xf]
    %v1105 = vld [vmem:[%s3 + $0xc] sm:$0xf]
    %v1108 = vunpack.c.l.b16 %v1099
    %v1109 = vunpack.c.l.b16 %v1101
    %v1110 = vpack.c.b16 %v1109, %v1108
    %v1115 = vunpack.c.l.b16 %v1102
    %v1116 = vunpack.c.l.b16 %v1103
    %v1117 = vunpack.c.l.b16 %v1104
    %v1118 = vunpack.c.l.b16 %v1105
    %v1119 = vpack.c.b16 %v1116, %v1115
    %v1120 = vpack.c.b16 %v1118, %v1117
    %v1124 = vsel %vm69, %v1110, 0
    %1126 = vmatprep.subr.bf16.mxu0 0
    %1127 = vmatpush1.bf16.msra.mxu0 %v1119
    %1128 = vmatprep.subr.bf16.mxu0 0
    %1129 = vmatpush1.bf16.msra.mxu0 %v1120
    %1130 = vmatprep.subr.bf16.mxu0 0
    %1131 = vmatpush1.bf16.msra.mxu0 0
    %1132 = vmatprep.subr.bf16.mxu0 0
    %1133 = vmatpush1.bf16.msra.mxu0 0
    %1134 = vmatprep.subr.bf16.mxu0 0
    %1135 = vmatpush1.bf16.msra.mxu0 0
    %1136 = vmatprep.subr.bf16.mxu0 0
    %1137 = vmatpush1.bf16.msra.mxu0 0
    %1138 = vmatprep.subr.bf16.mxu0 0
    %1139 = vmatpush1.bf16.msra.mxu0 0
    %1140 = vmatprep.subr.bf16.mxu0 0
    %1141 = vmatpush1.bf16.msra.mxu0 0
    %1142 = vmatprep.subr.bf16.mxu0 0
    %1143 = vmatpush1.bf16.msra.mxu0 0
    %1144 = vmatprep.subr.bf16.mxu0 0
    %1145 = vmatpush1.bf16.msra.mxu0 0
    %1146 = vmatprep.subr.bf16.mxu0 0
    %1147 = vmatpush1.bf16.msra.mxu0 0
    %1148 = vmatprep.subr.bf16.mxu0 0
    %1149 = vmatpush1.bf16.msra.mxu0 0
    %1150 = vmatprep.subr.bf16.mxu0 0
    %1151 = vmatpush1.bf16.msra.mxu0 0
    %1152 = vmatprep.subr.bf16.mxu0 0
    %1153 = vmatpush1.bf16.msra.mxu0 0
    %1154 = vmatprep.subr.bf16.mxu0 0
    %1155 = vmatpush1.bf16.msra.mxu0 0
    %1156 = vmatprep.subr.bf16.mxu0 0
    %1157 = vmatpush1.bf16.msra.mxu0 0
    %1158 = vmatprep.mubr.bf16.mxu0 0
    %1159 = vmatmul.mubr.bf16.gmra.mrb[0].mxu0 %v1124
    %v1160 = vpop.f32.mrb[0].mxu0
    %v1161 = vadd.f32 0.0, %v1160
    %v1162 = vpop.f32.mrb[0].mxu0
    %v1163 = vpop.f32.mrb[0].mxu0
    %v1164 = vadd.f32 0.0, %v1163
    %v1165 = vpop.f32.mrb[0].mxu0
    %1166 = vdwg.mxu0
    %v1167 = vadd.f32 %v65, %v1161
    %v1168 = vadd.f32 %v66, %v1164
    %v1169 = vlaneseq
    %v1170 = vshrl.u32 %v1169, 7
    %v1171 = vsub.s32 2, %v1170
    %v1172 = vrot.slane %v68, %v1171
    %v1173 = vadd.f32 %v1167, %v1172
    %v1174 = vadd.f32 %v1168, %v1172
    %v1175 = vsel %vm69, %v1173, 0.0
    %1176 = vadd.xlane.f32.xlu0 %v1175
    %v1177 = vpop.xlane.xlu0 %1176
    %v1178 = vsel %vm69, %v1174, 0.0
    %1179 = vadd.xlane.f32.xlu0 %v1178
    %v1180 = vpop.xlane.xlu0 %1179
    %v1181 = vmul.f32 %v1177, %v76
    %v1182 = vmul.f32 %v1180, %v76
    %v1183 = vsub.f32 %v1173, %v1181
    %v1184 = vsub.f32 %v1174, %v1182
    %v1185 = vmul.f32 %v1183, %v1183
    %v1186 = vmul.f32 %v1184, %v1184
    %v1187 = vsel %vm69, %v1185, 0.0
    %1188 = vadd.xlane.f32.xlu0 %v1187
    %v1189 = vpop.xlane.xlu0 %1188
    %v1190 = vsel %vm69, %v1186, 0.0
    %1191 = vadd.xlane.f32.xlu0 %v1190
    %v1192 = vpop.xlane.xlu0 %1191
    %v1193 = vmul.f32 %v1189, %v76
    %v1194 = vmul.f32 %v1192, %v76
    %v1195 = vadd.f32 %v1193, 1e-05
    %v1196 = vadd.f32 %v1194, 1e-05
    %v1197 = vrsqrt.pop %v1195
    %v1198 = vrsqrt.pop %v1196
    %v1199 = vmul.f32 %v1183, %v1197
    %v1200 = vmul.f32 %v1184, %v1198
    %v1201 = vlaneseq
    %v1202 = vshrl.u32 %v1201, 7
    %v1203 = vsub.s32 3, %v1202
    %v1204 = vrot.slane %v68, %v1203
    %v1205 = vmul.f32 %v1199, %v1204
    %v1206 = vmul.f32 %v1200, %v1204
    %v1207 = vlaneseq
    %v1208 = vshrl.u32 %v1207, 7
    %v1209 = vsub.s32 4, %v1208
    %v1210 = vrot.slane %v68, %v1209
    %v1211 = vadd.f32 %v1205, %v1210
    %v1212 = vadd.f32 %v1206, %v1210
    %v1213 = vpack.c.bf16 %v1212, %v1211
    %v1214 = vld [vmem:[%s4] sm:$0xf]
    %v1215 = vld [vmem:[%s4 + $0x4] sm:$0xf]
    %v1216 = vld [vmem:[%s4 + $0x8] sm:$0xf]
    %v1217 = vld [vmem:[%s4 + $0xc] sm:$0xf]
    %v1218 = vld [vmem:[%s5] sm:$0x1]
    %v1220 = vlaneseq
    %v1221 = vshrl.u32 %v1220, 7
    %v1222 = vsub.s32 0, %v1221
    %v1223 = vrot.slane %v1218, %v1222
    %v1229 = vunpack.c.l.b16 %v1214
    %v1230 = vunpack.c.l.b16 %v1215
    %v1231 = vunpack.c.l.b16 %v1216
    %v1232 = vunpack.c.l.b16 %v1217
    %v1233 = vpack.c.b16 %v1230, %v1229
    %v1234 = vpack.c.b16 %v1232, %v1231
    %v1238 = vsel %vm69, %v1213, 0
    %1240 = vmatprep.subr.bf16.mxu0 0
    %1241 = vmatpush1.bf16.msra.mxu0 %v1233
    %1242 = vmatprep.subr.bf16.mxu0 0
    %1243 = vmatpush1.bf16.msra.mxu0 %v1234
    %1244 = vmatprep.subr.bf16.mxu0 0
    %1245 = vmatpush1.bf16.msra.mxu0 0
    %1246 = vmatprep.subr.bf16.mxu0 0
    %1247 = vmatpush1.bf16.msra.mxu0 0
    %1248 = vmatprep.subr.bf16.mxu0 0
    %1249 = vmatpush1.bf16.msra.mxu0 0
    %1250 = vmatprep.subr.bf16.mxu0 0
    %1251 = vmatpush1.bf16.msra.mxu0 0
    %1252 = vmatprep.subr.bf16.mxu0 0
    %1253 = vmatpush1.bf16.msra.mxu0 0
    %1254 = vmatprep.subr.bf16.mxu0 0
    %1255 = vmatpush1.bf16.msra.mxu0 0
    %1256 = vmatprep.subr.bf16.mxu0 0
    %1257 = vmatpush1.bf16.msra.mxu0 0
    %1258 = vmatprep.subr.bf16.mxu0 0
    %1259 = vmatpush1.bf16.msra.mxu0 0
    %1260 = vmatprep.subr.bf16.mxu0 0
    %1261 = vmatpush1.bf16.msra.mxu0 0
    %1262 = vmatprep.subr.bf16.mxu0 0
    %1263 = vmatpush1.bf16.msra.mxu0 0
    %1264 = vmatprep.subr.bf16.mxu0 0
    %1265 = vmatpush1.bf16.msra.mxu0 0
    %1266 = vmatprep.subr.bf16.mxu0 0
    %1267 = vmatpush1.bf16.msra.mxu0 0
    %1268 = vmatprep.subr.bf16.mxu0 0
    %1269 = vmatpush1.bf16.msra.mxu0 0
    %1270 = vmatprep.subr.bf16.mxu0 0
    %1271 = vmatpush1.bf16.msra.mxu0 0
    %1272 = vmatprep.mubr.bf16.mxu0 0
    %1273 = vmatmul.mubr.bf16.gmra.mrb[0].mxu0 %v1238
    %v1274 = vpop.f32.mrb[0].mxu0
    %v1275 = vadd.f32 %v1223, %v1274
    %v1276 = vpop.f32.mrb[0].mxu0
    %v1277 = vpop.f32.mrb[0].mxu0
    %v1278 = vadd.f32 %v1223, %v1277
    %v1279 = vpop.f32.mrb[0].mxu0
    %1280 = vdwg.mxu0
    %v1281 = vmul.f32 %v1275, 0.5
    %v1282 = vmul.f32 %v1278, 0.5
    %v1283 = vmul.f32 %v1275, 0.70710677
    %v1284 = vmul.f32 %v1278, 0.70710677
    %vm1285 = vcmp.ge.f32.partialorder %v1283, 0.0
    %vm1286 = vcmp.ge.f32.partialorder %v1284, 0.0
    %v1287 = vsel %vm1285, 1.0, -1.0
    %v1288 = vsel %vm1286, 1.0, -1.0
    %v1289 = vand.u32 2147483647, %v1283
    %v1290 = vand.u32 2147483647, %v1284
    %v1291 = vmul.f32 %v1289, 0.3275911
    %v1292 = vmul.f32 %v1290, 0.3275911
    %v1293 = vadd.f32 %v1291, 1.0
    %v1294 = vadd.f32 %v1292, 1.0
    %v1295 = vrcp.pop %v1293
    %v1296 = vmul.f32 1.0, %v1295
    %v1297 = vrcp.pop %v1294
    %v1298 = vmul.f32 1.0, %v1297
    %v1299 = vmul.f32 %v1296, 1.0614054
    %v1300 = vmul.f32 %v1298, 1.0614054
    %v1301 = vadd.f32 %v1299, -1.4531521
    %v1302 = vadd.f32 %v1300, -1.4531521
    %v1303 = vmul.f32 %v1301, %v1296
    %v1304 = vmul.f32 %v1302, %v1298
    %v1305 = vadd.f32 %v1303, 1.4214138
    %v1306 = vadd.f32 %v1304, 1.4214138
    %v1307 = vmul.f32 %v1305, %v1296
    %v1308 = vmul.f32 %v1306, %v1298
    %v1309 = vadd.f32 %v1307, -0.28449672
    %v1310 = vadd.f32 %v1308, -0.28449672
    %v1311 = vmul.f32 %v1309, %v1296
    %v1312 = vmul.f32 %v1310, %v1298
    %v1313 = vadd.f32 %v1311, 0.2548296
    %v1314 = vadd.f32 %v1312, 0.2548296
    %v1315 = vmul.f32 %v1313, %v1296
    %v1316 = vmul.f32 %v1314, %v1298
    %v1317 = vsub.f32 0.0, %v1289
    %v1318 = vsub.f32 0.0, %v1290
    %v1319 = vmul.f32 %v1317, %v1289
    %v1320 = vmul.f32 %v1318, %v1290
    %v1321 = vmul.f32 %v1319, 1.442695
    %v1322 = vpow.pop %v1321
    %v1323 = vmul.f32 %v1320, 1.442695
    %v1324 = vpow.pop %v1323
    %v1325 = vmul.f32 %v1315, %v1322
    %v1326 = vmul.f32 %v1316, %v1324
    %v1327 = vsub.f32 1.0, %v1325
    %v1328 = vsub.f32 1.0, %v1326
    %v1329 = vmul.f32 %v1287, %v1327
    %v1330 = vmul.f32 %v1288, %v1328
    %v1331 = vadd.f32 %v1329, 1.0
    %v1332 = vadd.f32 %v1330, 1.0
    %v1333 = vmul.f32 %v1281, %v1331
    %v1334 = vmul.f32 %v1282, %v1332
    %v1335 = vpack.c.bf16 %v1334, %v1333
    %v1336 = vld [vmem:[%s6] sm:$0xf]
    %v1337 = vld [vmem:[%s6 + $0x4] sm:$0xf]
    %v1338 = vld [vmem:[%s6 + $0x8] sm:$0xf]
    %v1339 = vld [vmem:[%s6 + $0xc] sm:$0xf]
    %v1340 = vld [vmem:[%s6 + $0x10] sm:$0xf]
    %v1341 = vld [vmem:[%s6 + $0x14] sm:$0xf]
    %v1342 = vld [vmem:[%s6 + $0x18] sm:$0xf]
    %v1343 = vld [vmem:[%s6 + $0x1c] sm:$0xf]
    %v1352 = vunpack.c.l.b16 %v1336
    %v1353 = vunpack.c.l.b16 %v1337
    %v1354 = vunpack.c.l.b16 %v1338
    %v1355 = vunpack.c.l.b16 %v1339
    %v1356 = vunpack.c.l.b16 %v1340
    %v1357 = vunpack.c.l.b16 %v1341
    %v1358 = vunpack.c.l.b16 %v1342
    %v1359 = vunpack.c.l.b16 %v1343
    %v1360 = vpack.c.b16 %v1353, %v1352
    %v1361 = vpack.c.b16 %v1355, %v1354
    %v1362 = vpack.c.b16 %v1357, %v1356
    %v1363 = vpack.c.b16 %v1359, %v1358
    %vm1368 = vcmask 523264
    %v1370 = vsel %vm1368, %v1335, 0
    %1372 = vmatprep.subr.bf16.mxu0 0
    %1373 = vmatpush1.bf16.msra.mxu0 %v1360
    %1374 = vmatprep.subr.bf16.mxu0 0
    %1375 = vmatpush1.bf16.msra.mxu0 %v1361
    %1376 = vmatprep.subr.bf16.mxu0 0
    %1377 = vmatpush1.bf16.msra.mxu0 %v1362
    %1378 = vmatprep.subr.bf16.mxu0 0
    %1379 = vmatpush1.bf16.msra.mxu0 %v1363
    %1380 = vmatprep.subr.bf16.mxu0 0
    %1381 = vmatpush1.bf16.msra.mxu0 0
    %1382 = vmatprep.subr.bf16.mxu0 0
    %1383 = vmatpush1.bf16.msra.mxu0 0
    %1384 = vmatprep.subr.bf16.mxu0 0
    %1385 = vmatpush1.bf16.msra.mxu0 0
    %1386 = vmatprep.subr.bf16.mxu0 0
    %1387 = vmatpush1.bf16.msra.mxu0 0
    %1388 = vmatprep.subr.bf16.mxu0 0
    %1389 = vmatpush1.bf16.msra.mxu0 0
    %1390 = vmatprep.subr.bf16.mxu0 0
    %1391 = vmatpush1.bf16.msra.mxu0 0
    %1392 = vmatprep.subr.bf16.mxu0 0
    %1393 = vmatpush1.bf16.msra.mxu0 0
    %1394 = vmatprep.subr.bf16.mxu0 0
    %1395 = vmatpush1.bf16.msra.mxu0 0
    %1396 = vmatprep.subr.bf16.mxu0 0
    %1397 = vmatpush1.bf16.msra.mxu0 0
    %1398 = vmatprep.subr.bf16.mxu0 0
    %1399 = vmatpush1.bf16.msra.mxu0 0
    %1400 = vmatprep.subr.bf16.mxu0 0
    %1401 = vmatpush1.bf16.msra.mxu0 0
    %1402 = vmatprep.subr.bf16.mxu0 0
    %1403 = vmatpush1.bf16.msra.mxu0 0
    %1404 = vmatprep.mubr.bf16.mxu0 0
    %1405 = vmatmul.mubr.bf16.gmra.mrb[0].mxu0 %v1370
    %v1406 = vpop.f32.mrb[0].mxu0
    %v1407 = vadd.f32 0.0, %v1406
    %v1408 = vpop.f32.mrb[0].mxu0
    %v1409 = vpop.f32.mrb[0].mxu0
    %v1410 = vadd.f32 0.0, %v1409
    %v1411 = vpop.f32.mrb[0].mxu0
    %1412 = vdwg.mxu0
    %v1413 = vadd.f32 %v1173, %v1407
    %v1414 = vadd.f32 %v1174, %v1410
    %v1415 = vlaneseq
    %v1416 = vshrl.u32 %v1415, 7
    %v1417 = vsub.s32 5, %v1416
    %v1418 = vrot.slane %v68, %v1417
    %v1419 = vadd.f32 %v1413, %v1418
    %v1420 = vadd.f32 %v1414, %v1418
    %s1421 = scalar_lea.vmem [#allocation5], 8
    %v1422 = vld [vmem:[%s1421] sm:$0x3f]
    %v1423 = vsel %vm69, %v1419, 0.0
    %1424 = vadd.xlane.f32.xlu0 %v1423
    %v1425 = vpop.xlane.xlu0 %1424
    %v1426 = vsel %vm69, %v1420, 0.0
    %1427 = vadd.xlane.f32.xlu0 %v1426
    %v1428 = vpop.xlane.xlu0 %1427
    %v1429 = vmul.f32 %v1425, %v76
    %v1430 = vmul.f32 %v1428, %v76
    %v1431 = vsub.f32 %v1419, %v1429
    %v1432 = vsub.f32 %v1420, %v1430
    %v1433 = vmul.f32 %v1431, %v1431
    %v1434 = vmul.f32 %v1432, %v1432
    %v1435 = vsel %vm69, %v1433, 0.0
    %1436 = vadd.xlane.f32.xlu0 %v1435
    %v1437 = vpop.xlane.xlu0 %1436
    %v1438 = vsel %vm69, %v1434, 0.0
    %1439 = vadd.xlane.f32.xlu0 %v1438
    %v1440 = vpop.xlane.xlu0 %1439
    %v1441 = vmul.f32 %v1437, %v76
    %v1442 = vmul.f32 %v1440, %v76
    %v1443 = vadd.f32 %v1441, 1e-05
    %v1444 = vadd.f32 %v1442, 1e-05
    %v1445 = vrsqrt.pop %v1443
    %v1446 = vrsqrt.pop %v1444
    %v1447 = vmul.f32 %v1431, %v1445
    %v1448 = vmul.f32 %v1432, %v1446
    %v1449 = vlaneseq
    %v1450 = vshrl.u32 %v1449, 7
    %v1451 = vsub.s32 0, %v1450
    %v1452 = vrot.slane %v1422, %v1451
    %v1453 = vmul.f32 %v1447, %v1452
    %v1454 = vmul.f32 %v1448, %v1452
    %v1455 = vlaneseq
    %v1456 = vshrl.u32 %v1455, 7
    %v1457 = vsub.s32 1, %v1456
    %v1458 = vrot.slane %v1422, %v1457
    %v1459 = vadd.f32 %v1453, %v1458
    %v1460 = vadd.f32 %v1454, %v1458
    %v1461 = vpack.c.bf16 %v1460, %v1459
    %s1462 = scalar_lea.vmem %s2, 16
    %v1463 = vld [vmem:[%s1462] sm:$0xf]
    %v1464 = vld [vmem:[%s1462 + $0x4] sm:$0xf]
    %v1465 = vld [vmem:[%s1462 + $0x8] sm:$0xf]
    %v1466 = vld [vmem:[%s1462 + $0xc] sm:$0xf]
    %v1471 = vunpack.c.l.b16 %v1463
    %v1472 = vunpack.c.l.b16 %v1464
    %v1473 = vunpack.c.l.b16 %v1465
    %v1474 = vunpack.c.l.b16 %v1466
    %v1475 = vpack.c.b16 %v1472, %v1471
    %v1476 = vpack.c.b16 %v1474, %v1473
    %v1480 = vsel %vm69, %v1461, 0
    %1482 = vmatprep.subr.bf16.mxu0 0
    %1483 = vmatpush1.bf16.msra.mxu0 %v1475
    %1484 = vmatprep.subr.bf16.mxu0 0
    %1485 = vmatpush1.bf16.msra.mxu0 %v1476
    %1486 = vmatprep.subr.bf16.mxu0 0
    %1487 = vmatpush1.bf16.msra.mxu0 0
    %1488 = vmatprep.subr.bf16.mxu0 0
    %1489 = vmatpush1.bf16.msra.mxu0 0
    %1490 = vmatprep.subr.bf16.mxu0 0
    %1491 = vmatpush1.bf16.msra.mxu0 0
    %1492 = vmatprep.subr.bf16.mxu0 0
    %1493 = vmatpush1.bf16.msra.mxu0 0
    %1494 = vmatprep.subr.bf16.mxu0 0
    %1495 = vmatpush1.bf16.msra.mxu0 0
    %1496 = vmatprep.subr.bf16.mxu0 0
    %1497 = vmatpush1.bf16.msra.mxu0 0
    %1498 = vmatprep.subr.bf16.mxu0 0
    %1499 = vmatpush1.bf16.msra.mxu0 0
    %1500 = vmatprep.subr.bf16.mxu0 0
    %1501 = vmatpush1.bf16.msra.mxu0 0
    %1502 = vmatprep.subr.bf16.mxu0 0
    %1503 = vmatpush1.bf16.msra.mxu0 0
    %1504 = vmatprep.subr.bf16.mxu0 0
    %1505 = vmatpush1.bf16.msra.mxu0 0
    %1506 = vmatprep.subr.bf16.mxu0 0
    %1507 = vmatpush1.bf16.msra.mxu0 0
    %1508 = vmatprep.subr.bf16.mxu0 0
    %1509 = vmatpush1.bf16.msra.mxu0 0
    %1510 = vmatprep.subr.bf16.mxu0 0
    %1511 = vmatpush1.bf16.msra.mxu0 0
    %1512 = vmatprep.subr.bf16.mxu0 0
    %1513 = vmatpush1.bf16.msra.mxu0 0
    %1514 = vmatprep.mubr.bf16.mxu0 0
    %1515 = vmatmul.mubr.bf16.gmra.mrb[0].mxu0 %v1480
    %v1516 = vpop.f32.mrb[0].mxu0
    %v1517 = vadd.f32 0.0, %v1516
    %v1518 = vpop.f32.mrb[0].mxu0
    %v1519 = vpop.f32.mrb[0].mxu0
    %v1520 = vadd.f32 0.0, %v1519
    %v1521 = vpop.f32.mrb[0].mxu0
    %1522 = vdwg.mxu0
    %v1523 = vpack.c.bf16 %v1517, %v1517
    %v1524 = vpack.c.bf16 %v1520, %v1520
    %1526 = vrot.lane.b32.xlu0 %v1523, 96
    %v1527 = vpop.permute.xlu0 %1526
    %v1529 = vsel %vm175, %v1523, 0
    %v1532 = vsel %vm175, %v1527, 0
    %1534 = vmatprep.subr.bf16.mxu0 0
    %1535 = vmatpush1.bf16.xpose.msra.mxu0 %v1532
    %1536 = vmatprep.subr.bf16.mxu0 0
    %1537 = vmatpush1.bf16.xpose.msra.mxu0 0
    %1538 = vmatprep.subr.bf16.mxu0 0
    %1539 = vmatpush1.bf16.xpose.msra.mxu0 0
    %1540 = vmatprep.subr.bf16.mxu0 0
    %1541 = vmatpush1.bf16.xpose.msra.mxu0 0
    %1542 = vmatprep.subr.bf16.mxu0 0
    %1543 = vmatpush1.bf16.xpose.msra.mxu0 0
    %1544 = vmatprep.subr.bf16.mxu0 0
    %1545 = vmatpush1.bf16.xpose.msra.mxu0 0
    %1546 = vmatprep.subr.bf16.mxu0 0
    %1547 = vmatpush1.bf16.xpose.msra.mxu0 0
    %1548 = vmatprep.subr.bf16.mxu0 0
    %1549 = vmatpush1.bf16.xpose.msra.mxu0 0
    %1550 = vmatprep.subr.bf16.mxu0 0
    %1551 = vmatpush1.bf16.xpose.msra.mxu0 0
    %1552 = vmatprep.subr.bf16.mxu0 0
    %1553 = vmatpush1.bf16.xpose.msra.mxu0 0
    %1554 = vmatprep.subr.bf16.mxu0 0
    %1555 = vmatpush1.bf16.xpose.msra.mxu0 0
    %1556 = vmatprep.subr.bf16.mxu0 0
    %1557 = vmatpush1.bf16.xpose.msra.mxu0 0
    %1558 = vmatprep.subr.bf16.mxu0 0
    %1559 = vmatpush1.bf16.xpose.msra.mxu0 0
    %1560 = vmatprep.subr.bf16.mxu0 0
    %1561 = vmatpush1.bf16.xpose.msra.mxu0 0
    %1562 = vmatprep.subr.bf16.mxu0 0
    %1563 = vmatpush1.bf16.xpose.msra.mxu0 0
    %1564 = vmatprep.subr.bf16.mxu0 0
    %1565 = vmatpush1.bf16.xpose.msra.mxu0 0
    %1566 = vmatprep.mubr.bf16.mxu0 0
    %1567 = vmatmul.mubr.bf16.gmra.mrb[0].mxu0 %v1529
    %v1568 = vpop.f32.mrb[0].mxu0
    %v1569 = vadd.f32 0.0, %v1568
    %v1570 = vpop.f32.mrb[0].mxu0
    %v1571 = vpop.f32.mrb[0].mxu0
    %v1572 = vpop.f32.mrb[0].mxu0
    %1573 = vdwg.mxu0
    %1575 = vrot.lane.b32.xlu0 %v1524, 96
    %v1576 = vpop.permute.xlu0 %1575
    %v1578 = vsel %vm175, %v1524, 0
    %v1581 = vsel %vm175, %v1576, 0
    %1583 = vmatprep.subr.bf16.mxu0 0
    %1584 = vmatpush1.bf16.xpose.msra.mxu0 %v1581
    %1585 = vmatprep.subr.bf16.mxu0 0
    %1586 = vmatpush1.bf16.xpose.msra.mxu0 0
    %1587 = vmatprep.subr.bf16.mxu0 0
    %1588 = vmatpush1.bf16.xpose.msra.mxu0 0
    %1589 = vmatprep.subr.bf16.mxu0 0
    %1590 = vmatpush1.bf16.xpose.msra.mxu0 0
    %1591 = vmatprep.subr.bf16.mxu0 0
    %1592 = vmatpush1.bf16.xpose.msra.mxu0 0
    %1593 = vmatprep.subr.bf16.mxu0 0
    %1594 = vmatpush1.bf16.xpose.msra.mxu0 0
    %1595 = vmatprep.subr.bf16.mxu0 0
    %1596 = vmatpush1.bf16.xpose.msra.mxu0 0
    %1597 = vmatprep.subr.bf16.mxu0 0
    %1598 = vmatpush1.bf16.xpose.msra.mxu0 0
    %1599 = vmatprep.subr.bf16.mxu0 0
    %1600 = vmatpush1.bf16.xpose.msra.mxu0 0
    %1601 = vmatprep.subr.bf16.mxu0 0
    %1602 = vmatpush1.bf16.xpose.msra.mxu0 0
    %1603 = vmatprep.subr.bf16.mxu0 0
    %1604 = vmatpush1.bf16.xpose.msra.mxu0 0
    %1605 = vmatprep.subr.bf16.mxu0 0
    %1606 = vmatpush1.bf16.xpose.msra.mxu0 0
    %1607 = vmatprep.subr.bf16.mxu0 0
    %1608 = vmatpush1.bf16.xpose.msra.mxu0 0
    %1609 = vmatprep.subr.bf16.mxu0 0
    %1610 = vmatpush1.bf16.xpose.msra.mxu0 0
    %1611 = vmatprep.subr.bf16.mxu0 0
    %1612 = vmatpush1.bf16.xpose.msra.mxu0 0
    %1613 = vmatprep.subr.bf16.mxu0 0
    %1614 = vmatpush1.bf16.xpose.msra.mxu0 0
    %1615 = vmatprep.mubr.bf16.mxu0 0
    %1616 = vmatmul.mubr.bf16.gmra.mrb[0].mxu0 %v1578
    %v1617 = vpop.f32.mrb[0].mxu0
    %v1618 = vadd.f32 0.0, %v1617
    %v1619 = vpop.f32.mrb[0].mxu0
    %v1620 = vpop.f32.mrb[0].mxu0
    %v1621 = vpop.f32.mrb[0].mxu0
    %1622 = vdwg.mxu0
    %v1623 = vmul.f32 %v1569, 0.35355338
    %v1624 = vmul.f32 %v1618, 0.35355338
    %v1625 = vsel %vm175, %v1623, -inf
    %1626 = vmax.xlane.f32.xlu0 %v1625
    %v1627 = vpop.xlane.xlu0 %1626
    %v1628 = vsel %vm175, %v1624, -inf
    %1629 = vmax.xlane.f32.xlu0 %v1628
    %v1630 = vpop.xlane.xlu0 %1629
    %v1631 = vsub.f32 %v1623, %v1627
    %v1632 = vsub.f32 %v1624, %v1630
    %v1633 = vmul.f32 %v1631, 1.442695
    %v1634 = vpow.pop %v1633
    %v1635 = vmul.f32 %v1632, 1.442695
    %v1636 = vpow.pop %v1635
    %v1637 = vsel %vm175, %v1634, 0.0
    %1638 = vadd.xlane.f32.xlu0 %v1637
    %v1639 = vpop.xlane.xlu0 %1638
    %v1640 = vsel %vm175, %v1636, 0.0
    %1641 = vadd.xlane.f32.xlu0 %v1640
    %v1642 = vpop.xlane.xlu0 %1641
    %v1643 = vrcp.pop %v1639
    %v1644 = vmul.f32 %v1634, %v1643
    %v1645 = vrcp.pop %v1642
    %v1646 = vmul.f32 %v1636, %v1645
    %v1647 = vpack.c.bf16 %v1644, %v1644
    %v1648 = vpack.c.bf16 %v1646, %v1646
    %1649 = vrot.lane.b32.xlu0 %v1523, 64
    %v1650 = vpop.permute.xlu0 %1649
    %v1652 = vsel %vm175, %v1647, 0
    %v1655 = vsel %vm302, %v1650, 0
    %1657 = vmatprep.subr.bf16.mxu0 0
    %1658 = vmatpush1.bf16.msra.mxu0 %v1655
    %1659 = vmatprep.subr.bf16.mxu0 0
    %1660 = vmatpush1.bf16.msra.mxu0 0
    %1661 = vmatprep.subr.bf16.mxu0 0
    %1662 = vmatpush1.bf16.msra.mxu0 0
    %1663 = vmatprep.subr.bf16.mxu0 0
    %1664 = vmatpush1.bf16.msra.mxu0 0
    %1665 = vmatprep.subr.bf16.mxu0 0
    %1666 = vmatpush1.bf16.msra.mxu0 0
    %1667 = vmatprep.subr.bf16.mxu0 0
    %1668 = vmatpush1.bf16.msra.mxu0 0
    %1669 = vmatprep.subr.bf16.mxu0 0
    %1670 = vmatpush1.bf16.msra.mxu0 0
    %1671 = vmatprep.subr.bf16.mxu0 0
    %1672 = vmatpush1.bf16.msra.mxu0 0
    %1673 = vmatprep.subr.bf16.mxu0 0
    %1674 = vmatpush1.bf16.msra.mxu0 0
    %1675 = vmatprep.subr.bf16.mxu0 0
    %1676 = vmatpush1.bf16.msra.mxu0 0
    %1677 = vmatprep.subr.bf16.mxu0 0
    %1678 = vmatpush1.bf16.msra.mxu0 0
    %1679 = vmatprep.subr.bf16.mxu0 0
    %1680 = vmatpush1.bf16.msra.mxu0 0
    %1681 = vmatprep.subr.bf16.mxu0 0
    %1682 = vmatpush1.bf16.msra.mxu0 0
    %1683 = vmatprep.subr.bf16.mxu0 0
    %1684 = vmatpush1.bf16.msra.mxu0 0
    %1685 = vmatprep.subr.bf16.mxu0 0
    %1686 = vmatpush1.bf16.msra.mxu0 0
    %1687 = vmatprep.subr.bf16.mxu0 0
    %1688 = vmatpush1.bf16.msra.mxu0 0
    %1689 = vmatprep.mubr.bf16.mxu0 0
    %1690 = vmatmul.mubr.bf16.gmra.mrb[0].mxu0 %v1652
    %v1691 = vpop.f32.mrb[0].mxu0
    %v1692 = vadd.f32 0.0, %v1691
    %v1693 = vpop.f32.mrb[0].mxu0
    %v1694 = vpop.f32.mrb[0].mxu0
    %v1695 = vpop.f32.mrb[0].mxu0
    %1696 = vdwg.mxu0
    %1697 = vrot.lane.b32.xlu0 %v1524, 64
    %v1698 = vpop.permute.xlu0 %1697
    %v1700 = vsel %vm175, %v1648, 0
    %v1703 = vsel %vm302, %v1698, 0
    %1705 = vmatprep.subr.bf16.mxu0 0
    %1706 = vmatpush1.bf16.msra.mxu0 %v1703
    %1707 = vmatprep.subr.bf16.mxu0 0
    %1708 = vmatpush1.bf16.msra.mxu0 0
    %1709 = vmatprep.subr.bf16.mxu0 0
    %1710 = vmatpush1.bf16.msra.mxu0 0
    %1711 = vmatprep.subr.bf16.mxu0 0
    %1712 = vmatpush1.bf16.msra.mxu0 0
    %1713 = vmatprep.subr.bf16.mxu0 0
    %1714 = vmatpush1.bf16.msra.mxu0 0
    %1715 = vmatprep.subr.bf16.mxu0 0
    %1716 = vmatpush1.bf16.msra.mxu0 0
    %1717 = vmatprep.subr.bf16.mxu0 0
    %1718 = vmatpush1.bf16.msra.mxu0 0
    %1719 = vmatprep.subr.bf16.mxu0 0
    %1720 = vmatpush1.bf16.msra.mxu0 0
    %1721 = vmatprep.subr.bf16.mxu0 0
    %1722 = vmatpush1.bf16.msra.mxu0 0
    %1723 = vmatprep.subr.bf16.mxu0 0
    %1724 = vmatpush1.bf16.msra.mxu0 0
    %1725 = vmatprep.subr.bf16.mxu0 0
    %1726 = vmatpush1.bf16.msra.mxu0 0
    %1727 = vmatprep.subr.bf16.mxu0 0
    %1728 = vmatpush1.bf16.msra.mxu0 0
    %1729 = vmatprep.subr.bf16.mxu0 0
    %1730 = vmatpush1.bf16.msra.mxu0 0
    %1731 = vmatprep.subr.bf16.mxu0 0
    %1732 = vmatpush1.bf16.msra.mxu0 0
    %1733 = vmatprep.subr.bf16.mxu0 0
    %1734 = vmatpush1.bf16.msra.mxu0 0
    %1735 = vmatprep.subr.bf16.mxu0 0
    %1736 = vmatpush1.bf16.msra.mxu0 0
    %1737 = vmatprep.mubr.bf16.mxu0 0
    %1738 = vmatmul.mubr.bf16.gmra.mrb[0].mxu0 %v1700
    %v1739 = vpop.f32.mrb[0].mxu0
    %v1740 = vadd.f32 0.0, %v1739
    %v1741 = vpop.f32.mrb[0].mxu0
    %v1742 = vpop.f32.mrb[0].mxu0
    %v1743 = vpop.f32.mrb[0].mxu0
    %1744 = vdwg.mxu0
    %v1745 = vpack.c.bf16 %v1692, %v1692
    %v1746 = vpack.c.bf16 %v1740, %v1740
    %1747 = vrot.lane.b32.xlu0 %v1523, 120
    %v1748 = vpop.permute.xlu0 %1747
    %1749 = vrot.lane.b32.xlu0 %v1523, 88
    %v1750 = vpop.permute.xlu0 %1749
    %v1752 = vsel %vm175, %v1748, 0
    %v1755 = vsel %vm175, %v1750, 0
    %1757 = vmatprep.subr.bf16.mxu0 0
    %1758 = vmatpush1.bf16.xpose.msra.mxu0 %v1755
    %1759 = vmatprep.subr.bf16.mxu0 0
    %1760 = vmatpush1.bf16.xpose.msra.mxu0 0
    %1761 = vmatprep.subr.bf16.mxu0 0
    %1762 = vmatpush1.bf16.xpose.msra.mxu0 0
    %1763 = vmatprep.subr.bf16.mxu0 0
    %1764 = vmatpush1.bf16.xpose.msra.mxu0 0
    %1765 = vmatprep.subr.bf16.mxu0 0
    %1766 = vmatpush1.bf16.xpose.msra.mxu0 0
    %1767 = vmatprep.subr.bf16.mxu0 0
    %1768 = vmatpush1.bf16.xpose.msra.mxu0 0
    %1769 = vmatprep.subr.bf16.mxu0 0
    %1770 = vmatpush1.bf16.xpose.msra.mxu0 0
    %1771 = vmatprep.subr.bf16.mxu0 0
    %1772 = vmatpush1.bf16.xpose.msra.mxu0 0
    %1773 = vmatprep.subr.bf16.mxu0 0
    %1774 = vmatpush1.bf16.xpose.msra.mxu0 0
    %1775 = vmatprep.subr.bf16.mxu0 0
    %1776 = vmatpush1.bf16.xpose.msra.mxu0 0
    %1777 = vmatprep.subr.bf16.mxu0 0
    %1778 = vmatpush1.bf16.xpose.msra.mxu0 0
    %1779 = vmatprep.subr.bf16.mxu0 0
    %1780 = vmatpush1.bf16.xpose.msra.mxu0 0
    %1781 = vmatprep.subr.bf16.mxu0 0
    %1782 = vmatpush1.bf16.xpose.msra.mxu0 0
    %1783 = vmatprep.subr.bf16.mxu0 0
    %1784 = vmatpush1.bf16.xpose.msra.mxu0 0
    %1785 = vmatprep.subr.bf16.mxu0 0
    %1786 = vmatpush1.bf16.xpose.msra.mxu0 0
    %1787 = vmatprep.subr.bf16.mxu0 0
    %1788 = vmatpush1.bf16.xpose.msra.mxu0 0
    %1789 = vmatprep.mubr.bf16.mxu0 0
    %1790 = vmatmul.mubr.bf16.gmra.mrb[0].mxu0 %v1752
    %v1791 = vpop.f32.mrb[0].mxu0
    %v1792 = vadd.f32 0.0, %v1791
    %v1793 = vpop.f32.mrb[0].mxu0
    %v1794 = vpop.f32.mrb[0].mxu0
    %v1795 = vpop.f32.mrb[0].mxu0
    %1796 = vdwg.mxu0
    %1797 = vrot.lane.b32.xlu0 %v1524, 120
    %v1798 = vpop.permute.xlu0 %1797
    %1799 = vrot.lane.b32.xlu0 %v1524, 88
    %v1800 = vpop.permute.xlu0 %1799
    %v1802 = vsel %vm175, %v1798, 0
    %v1805 = vsel %vm175, %v1800, 0
    %1807 = vmatprep.subr.bf16.mxu0 0
    %1808 = vmatpush1.bf16.xpose.msra.mxu0 %v1805
    %1809 = vmatprep.subr.bf16.mxu0 0
    %1810 = vmatpush1.bf16.xpose.msra.mxu0 0
    %1811 = vmatprep.subr.bf16.mxu0 0
    %1812 = vmatpush1.bf16.xpose.msra.mxu0 0
    %1813 = vmatprep.subr.bf16.mxu0 0
    %1814 = vmatpush1.bf16.xpose.msra.mxu0 0
    %1815 = vmatprep.subr.bf16.mxu0 0
    %1816 = vmatpush1.bf16.xpose.msra.mxu0 0
    %1817 = vmatprep.subr.bf16.mxu0 0
    %1818 = vmatpush1.bf16.xpose.msra.mxu0 0
    %1819 = vmatprep.subr.bf16.mxu0 0
    %1820 = vmatpush1.bf16.xpose.msra.mxu0 0
    %1821 = vmatprep.subr.bf16.mxu0 0
    %1822 = vmatpush1.bf16.xpose.msra.mxu0 0
    %1823 = vmatprep.subr.bf16.mxu0 0
    %1824 = vmatpush1.bf16.xpose.msra.mxu0 0
    %1825 = vmatprep.subr.bf16.mxu0 0
    %1826 = vmatpush1.bf16.xpose.msra.mxu0 0
    %1827 = vmatprep.subr.bf16.mxu0 0
    %1828 = vmatpush1.bf16.xpose.msra.mxu0 0
    %1829 = vmatprep.subr.bf16.mxu0 0
    %1830 = vmatpush1.bf16.xpose.msra.mxu0 0
    %1831 = vmatprep.subr.bf16.mxu0 0
    %1832 = vmatpush1.bf16.xpose.msra.mxu0 0
    %1833 = vmatprep.subr.bf16.mxu0 0
    %1834 = vmatpush1.bf16.xpose.msra.mxu0 0
    %1835 = vmatprep.subr.bf16.mxu0 0
    %1836 = vmatpush1.bf16.xpose.msra.mxu0 0
    %1837 = vmatprep.subr.bf16.mxu0 0
    %1838 = vmatpush1.bf16.xpose.msra.mxu0 0
    %1839 = vmatprep.mubr.bf16.mxu0 0
    %1840 = vmatmul.mubr.bf16.gmra.mrb[0].mxu0 %v1802
    %v1841 = vpop.f32.mrb[0].mxu0
    %v1842 = vadd.f32 0.0, %v1841
    %v1843 = vpop.f32.mrb[0].mxu0
    %v1844 = vpop.f32.mrb[0].mxu0
    %v1845 = vpop.f32.mrb[0].mxu0
    %1846 = vdwg.mxu0
    %v1847 = vmul.f32 %v1792, 0.35355338
    %v1848 = vmul.f32 %v1842, 0.35355338
    %v1849 = vsel %vm175, %v1847, -inf
    %1850 = vmax.xlane.f32.xlu0 %v1849
    %v1851 = vpop.xlane.xlu0 %1850
    %v1852 = vsel %vm175, %v1848, -inf
    %1853 = vmax.xlane.f32.xlu0 %v1852
    %v1854 = vpop.xlane.xlu0 %1853
    %v1855 = vsub.f32 %v1847, %v1851
    %v1856 = vsub.f32 %v1848, %v1854
    %v1857 = vmul.f32 %v1855, 1.442695
    %v1858 = vpow.pop %v1857
    %v1859 = vmul.f32 %v1856, 1.442695
    %v1860 = vpow.pop %v1859
    %v1861 = vsel %vm175, %v1858, 0.0
    %1862 = vadd.xlane.f32.xlu0 %v1861
    %v1863 = vpop.xlane.xlu0 %1862
    %v1864 = vsel %vm175, %v1860, 0.0
    %1865 = vadd.xlane.f32.xlu0 %v1864
    %v1866 = vpop.xlane.xlu0 %1865
    %v1867 = vrcp.pop %v1863
    %v1868 = vmul.f32 %v1858, %v1867
    %v1869 = vrcp.pop %v1866
    %v1870 = vmul.f32 %v1860, %v1869
    %v1871 = vpack.c.bf16 %v1868, %v1868
    %v1872 = vpack.c.bf16 %v1870, %v1870
    %1873 = vrot.lane.b32.xlu0 %v1523, 56
    %v1874 = vpop.permute.xlu0 %1873
    %v1876 = vsel %vm175, %v1871, 0
    %v1879 = vsel %vm302, %v1874, 0
    %1881 = vmatprep.subr.bf16.mxu0 0
    %1882 = vmatpush1.bf16.msra.mxu0 %v1879
    %1883 = vmatprep.subr.bf16.mxu0 0
    %1884 = vmatpush1.bf16.msra.mxu0 0
    %1885 = vmatprep.subr.bf16.mxu0 0
    %1886 = vmatpush1.bf16.msra.mxu0 0
    %1887 = vmatprep.subr.bf16.mxu0 0
    %1888 = vmatpush1.bf16.msra.mxu0 0
    %1889 = vmatprep.subr.bf16.mxu0 0
    %1890 = vmatpush1.bf16.msra.mxu0 0
    %1891 = vmatprep.subr.bf16.mxu0 0
    %1892 = vmatpush1.bf16.msra.mxu0 0
    %1893 = vmatprep.subr.bf16.mxu0 0
    %1894 = vmatpush1.bf16.msra.mxu0 0
    %1895 = vmatprep.subr.bf16.mxu0 0
    %1896 = vmatpush1.bf16.msra.mxu0 0
    %1897 = vmatprep.subr.bf16.mxu0 0
    %1898 = vmatpush1.bf16.msra.mxu0 0
    %1899 = vmatprep.subr.bf16.mxu0 0
    %1900 = vmatpush1.bf16.msra.mxu0 0
    %1901 = vmatprep.subr.bf16.mxu0 0
    %1902 = vmatpush1.bf16.msra.mxu0 0
    %1903 = vmatprep.subr.bf16.mxu0 0
    %1904 = vmatpush1.bf16.msra.mxu0 0
    %1905 = vmatprep.subr.bf16.mxu0 0
    %1906 = vmatpush1.bf16.msra.mxu0 0
    %1907 = vmatprep.subr.bf16.mxu0 0
    %1908 = vmatpush1.bf16.msra.mxu0 0
    %1909 = vmatprep.subr.bf16.mxu0 0
    %1910 = vmatpush1.bf16.msra.mxu0 0
    %1911 = vmatprep.subr.bf16.mxu0 0
    %1912 = vmatpush1.bf16.msra.mxu0 0
    %1913 = vmatprep.mubr.bf16.mxu0 0
    %1914 = vmatmul.mubr.bf16.gmra.mrb[0].mxu0 %v1876
    %v1915 = vpop.f32.mrb[0].mxu0
    %v1916 = vadd.f32 0.0, %v1915
    %v1917 = vpop.f32.mrb[0].mxu0
    %v1918 = vpop.f32.mrb[0].mxu0
    %v1919 = vpop.f32.mrb[0].mxu0
    %1920 = vdwg.mxu0
    %1921 = vrot.lane.b32.xlu0 %v1524, 56
    %v1922 = vpop.permute.xlu0 %1921
    %v1924 = vsel %vm175, %v1872, 0
    %v1927 = vsel %vm302, %v1922, 0
    %1929 = vmatprep.subr.bf16.mxu0 0
    %1930 = vmatpush1.bf16.msra.mxu0 %v1927
    %1931 = vmatprep.subr.bf16.mxu0 0
    %1932 = vmatpush1.bf16.msra.mxu0 0
    %1933 = vmatprep.subr.bf16.mxu0 0
    %1934 = vmatpush1.bf16.msra.mxu0 0
    %1935 = vmatprep.subr.bf16.mxu0 0
    %1936 = vmatpush1.bf16.msra.mxu0 0
    %1937 = vmatprep.subr.bf16.mxu0 0
    %1938 = vmatpush1.bf16.msra.mxu0 0
    %1939 = vmatprep.subr.bf16.mxu0 0
    %1940 = vmatpush1.bf16.msra.mxu0 0
    %1941 = vmatprep.subr.bf16.mxu0 0
    %1942 = vmatpush1.bf16.msra.mxu0 0
    %1943 = vmatprep.subr.bf16.mxu0 0
    %1944 = vmatpush1.bf16.msra.mxu0 0
    %1945 = vmatprep.subr.bf16.mxu0 0
    %1946 = vmatpush1.bf16.msra.mxu0 0
    %1947 = vmatprep.subr.bf16.mxu0 0
    %1948 = vmatpush1.bf16.msra.mxu0 0
    %1949 = vmatprep.subr.bf16.mxu0 0
    %1950 = vmatpush1.bf16.msra.mxu0 0
    %1951 = vmatprep.subr.bf16.mxu0 0
    %1952 = vmatpush1.bf16.msra.mxu0 0
    %1953 = vmatprep.subr.bf16.mxu0 0
    %1954 = vmatpush1.bf16.msra.mxu0 0
    %1955 = vmatprep.subr.bf16.mxu0 0
    %1956 = vmatpush1.bf16.msra.mxu0 0
    %1957 = vmatprep.subr.bf16.mxu0 0
    %1958 = vmatpush1.bf16.msra.mxu0 0
    %1959 = vmatprep.subr.bf16.mxu0 0
    %1960 = vmatpush1.bf16.msra.mxu0 0
    %1961 = vmatprep.mubr.bf16.mxu0 0
    %1962 = vmatmul.mubr.bf16.gmra.mrb[0].mxu0 %v1924
    %v1963 = vpop.f32.mrb[0].mxu0
    %v1964 = vadd.f32 0.0, %v1963
    %v1965 = vpop.f32.mrb[0].mxu0
    %v1966 = vpop.f32.mrb[0].mxu0
    %v1967 = vpop.f32.mrb[0].mxu0
    %1968 = vdwg.mxu0
    %v1969 = vpack.c.bf16 %v1916, %v1916
    %v1970 = vpack.c.bf16 %v1964, %v1964
    %1971 = vrot.lane.b32.xlu0 %v1523, 112
    %v1972 = vpop.permute.xlu0 %1971
    %1973 = vrot.lane.b32.xlu0 %v1523, 80
    %v1974 = vpop.permute.xlu0 %1973
    %v1976 = vsel %vm175, %v1972, 0
    %v1979 = vsel %vm175, %v1974, 0
    %1981 = vmatprep.subr.bf16.mxu0 0
    %1982 = vmatpush1.bf16.xpose.msra.mxu0 %v1979
    %1983 = vmatprep.subr.bf16.mxu0 0
    %1984 = vmatpush1.bf16.xpose.msra.mxu0 0
    %1985 = vmatprep.subr.bf16.mxu0 0
    %1986 = vmatpush1.bf16.xpose.msra.mxu0 0
    %1987 = vmatprep.subr.bf16.mxu0 0
    %1988 = vmatpush1.bf16.xpose.msra.mxu0 0
    %1989 = vmatprep.subr.bf16.mxu0 0
    %1990 = vmatpush1.bf16.xpose.msra.mxu0 0
    %1991 = vmatprep.subr.bf16.mxu0 0
    %1992 = vmatpush1.bf16.xpose.msra.mxu0 0
    %1993 = vmatprep.subr.bf16.mxu0 0
    %1994 = vmatpush1.bf16.xpose.msra.mxu0 0
    %1995 = vmatprep.subr.bf16.mxu0 0
    %1996 = vmatpush1.bf16.xpose.msra.mxu0 0
    %1997 = vmatprep.subr.bf16.mxu0 0
    %1998 = vmatpush1.bf16.xpose.msra.mxu0 0
    %1999 = vmatprep.subr.bf16.mxu0 0
    %2000 = vmatpush1.bf16.xpose.msra.mxu0 0
    %2001 = vmatprep.subr.bf16.mxu0 0
    %2002 = vmatpush1.bf16.xpose.msra.mxu0 0
    %2003 = vmatprep.subr.bf16.mxu0 0
    %2004 = vmatpush1.bf16.xpose.msra.mxu0 0
    %2005 = vmatprep.subr.bf16.mxu0 0
    %2006 = vmatpush1.bf16.xpose.msra.mxu0 0
    %2007 = vmatprep.subr.bf16.mxu0 0
    %2008 = vmatpush1.bf16.xpose.msra.mxu0 0
    %2009 = vmatprep.subr.bf16.mxu0 0
    %2010 = vmatpush1.bf16.xpose.msra.mxu0 0
    %2011 = vmatprep.subr.bf16.mxu0 0
    %2012 = vmatpush1.bf16.xpose.msra.mxu0 0
    %2013 = vmatprep.mubr.bf16.mxu0 0
    %2014 = vmatmul.mubr.bf16.gmra.mrb[0].mxu0 %v1976
    %v2015 = vpop.f32.mrb[0].mxu0
    %v2016 = vadd.f32 0.0, %v2015
    %v2017 = vpop.f32.mrb[0].mxu0
    %v2018 = vpop.f32.mrb[0].mxu0
    %v2019 = vpop.f32.mrb[0].mxu0
    %2020 = vdwg.mxu0
    %2021 = vrot.lane.b32.xlu0 %v1524, 112
    %v2022 = vpop.permute.xlu0 %2021
    %2023 = vrot.lane.b32.xlu0 %v1524, 80
    %v2024 = vpop.permute.xlu0 %2023
    %v2026 = vsel %vm175, %v2022, 0
    %v2029 = vsel %vm175, %v2024, 0
    %2031 = vmatprep.subr.bf16.mxu0 0
    %2032 = vmatpush1.bf16.xpose.msra.mxu0 %v2029
    %2033 = vmatprep.subr.bf16.mxu0 0
    %2034 = vmatpush1.bf16.xpose.msra.mxu0 0
    %2035 = vmatprep.subr.bf16.mxu0 0
    %2036 = vmatpush1.bf16.xpose.msra.mxu0 0
    %2037 = vmatprep.subr.bf16.mxu0 0
    %2038 = vmatpush1.bf16.xpose.msra.mxu0 0
    %2039 = vmatprep.subr.bf16.mxu0 0
    %2040 = vmatpush1.bf16.xpose.msra.mxu0 0
    %2041 = vmatprep.subr.bf16.mxu0 0
    %2042 = vmatpush1.bf16.xpose.msra.mxu0 0
    %2043 = vmatprep.subr.bf16.mxu0 0
    %2044 = vmatpush1.bf16.xpose.msra.mxu0 0
    %2045 = vmatprep.subr.bf16.mxu0 0
    %2046 = vmatpush1.bf16.xpose.msra.mxu0 0
    %2047 = vmatprep.subr.bf16.mxu0 0
    %2048 = vmatpush1.bf16.xpose.msra.mxu0 0
    %2049 = vmatprep.subr.bf16.mxu0 0
    %2050 = vmatpush1.bf16.xpose.msra.mxu0 0
    %2051 = vmatprep.subr.bf16.mxu0 0
    %2052 = vmatpush1.bf16.xpose.msra.mxu0 0
    %2053 = vmatprep.subr.bf16.mxu0 0
    %2054 = vmatpush1.bf16.xpose.msra.mxu0 0
    %2055 = vmatprep.subr.bf16.mxu0 0
    %2056 = vmatpush1.bf16.xpose.msra.mxu0 0
    %2057 = vmatprep.subr.bf16.mxu0 0
    %2058 = vmatpush1.bf16.xpose.msra.mxu0 0
    %2059 = vmatprep.subr.bf16.mxu0 0
    %2060 = vmatpush1.bf16.xpose.msra.mxu0 0
    %2061 = vmatprep.subr.bf16.mxu0 0
    %2062 = vmatpush1.bf16.xpose.msra.mxu0 0
    %2063 = vmatprep.mubr.bf16.mxu0 0
    %2064 = vmatmul.mubr.bf16.gmra.mrb[0].mxu0 %v2026
    %v2065 = vpop.f32.mrb[0].mxu0
    %v2066 = vadd.f32 0.0, %v2065
    %v2067 = vpop.f32.mrb[0].mxu0
    %v2068 = vpop.f32.mrb[0].mxu0
    %v2069 = vpop.f32.mrb[0].mxu0
    %2070 = vdwg.mxu0
    %v2071 = vmul.f32 %v2016, 0.35355338
    %v2072 = vmul.f32 %v2066, 0.35355338
    %v2073 = vsel %vm175, %v2071, -inf
    %2074 = vmax.xlane.f32.xlu0 %v2073
    %v2075 = vpop.xlane.xlu0 %2074
    %v2076 = vsel %vm175, %v2072, -inf
    %2077 = vmax.xlane.f32.xlu0 %v2076
    %v2078 = vpop.xlane.xlu0 %2077
    %v2079 = vsub.f32 %v2071, %v2075
    %v2080 = vsub.f32 %v2072, %v2078
    %v2081 = vmul.f32 %v2079, 1.442695
    %v2082 = vpow.pop %v2081
    %v2083 = vmul.f32 %v2080, 1.442695
    %v2084 = vpow.pop %v2083
    %v2085 = vsel %vm175, %v2082, 0.0
    %2086 = vadd.xlane.f32.xlu0 %v2085
    %v2087 = vpop.xlane.xlu0 %2086
    %v2088 = vsel %vm175, %v2084, 0.0
    %2089 = vadd.xlane.f32.xlu0 %v2088
    %v2090 = vpop.xlane.xlu0 %2089
    %v2091 = vrcp.pop %v2087
    %v2092 = vmul.f32 %v2082, %v2091
    %v2093 = vrcp.pop %v2090
    %v2094 = vmul.f32 %v2084, %v2093
    %v2095 = vpack.c.bf16 %v2092, %v2092
    %v2096 = vpack.c.bf16 %v2094, %v2094
    %2097 = vrot.lane.b32.xlu0 %v1523, 48
    %v2098 = vpop.permute.xlu0 %2097
    %v2100 = vsel %vm175, %v2095, 0
    %v2103 = vsel %vm302, %v2098, 0
    %2105 = vmatprep.subr.bf16.mxu0 0
    %2106 = vmatpush1.bf16.msra.mxu0 %v2103
    %2107 = vmatprep.subr.bf16.mxu0 0
    %2108 = vmatpush1.bf16.msra.mxu0 0
    %2109 = vmatprep.subr.bf16.mxu0 0
    %2110 = vmatpush1.bf16.msra.mxu0 0
    %2111 = vmatprep.subr.bf16.mxu0 0
    %2112 = vmatpush1.bf16.msra.mxu0 0
    %2113 = vmatprep.subr.bf16.mxu0 0
    %2114 = vmatpush1.bf16.msra.mxu0 0
    %2115 = vmatprep.subr.bf16.mxu0 0
    %2116 = vmatpush1.bf16.msra.mxu0 0
    %2117 = vmatprep.subr.bf16.mxu0 0
    %2118 = vmatpush1.bf16.msra.mxu0 0
    %2119 = vmatprep.subr.bf16.mxu0 0
    %2120 = vmatpush1.bf16.msra.mxu0 0
    %2121 = vmatprep.subr.bf16.mxu0 0
    %2122 = vmatpush1.bf16.msra.mxu0 0
    %2123 = vmatprep.subr.bf16.mxu0 0
    %2124 = vmatpush1.bf16.msra.mxu0 0
    %2125 = vmatprep.subr.bf16.mxu0 0
    %2126 = vmatpush1.bf16.msra.mxu0 0
    %2127 = vmatprep.subr.bf16.mxu0 0
    %2128 = vmatpush1.bf16.msra.mxu0 0
    %2129 = vmatprep.subr.bf16.mxu0 0
    %2130 = vmatpush1.bf16.msra.mxu0 0
    %2131 = vmatprep.subr.bf16.mxu0 0
    %2132 = vmatpush1.bf16.msra.mxu0 0
    %2133 = vmatprep.subr.bf16.mxu0 0
    %2134 = vmatpush1.bf16.msra.mxu0 0
    %2135 = vmatprep.subr.bf16.mxu0 0
    %2136 = vmatpush1.bf16.msra.mxu0 0
    %2137 = vmatprep.mubr.bf16.mxu0 0
    %2138 = vmatmul.mubr.bf16.gmra.mrb[0].mxu0 %v2100
    %v2139 = vpop.f32.mrb[0].mxu0
    %v2140 = vadd.f32 0.0, %v2139
    %v2141 = vpop.f32.mrb[0].mxu0
    %v2142 = vpop.f32.mrb[0].mxu0
    %v2143 = vpop.f32.mrb[0].mxu0
    %2144 = vdwg.mxu0
    %2145 = vrot.lane.b32.xlu0 %v1524, 48
    %v2146 = vpop.permute.xlu0 %2145
    %v2148 = vsel %vm175, %v2096, 0
    %v2151 = vsel %vm302, %v2146, 0
    %2153 = vmatprep.subr.bf16.mxu0 0
    %2154 = vmatpush1.bf16.msra.mxu0 %v2151
    %2155 = vmatprep.subr.bf16.mxu0 0
    %2156 = vmatpush1.bf16.msra.mxu0 0
    %2157 = vmatprep.subr.bf16.mxu0 0
    %2158 = vmatpush1.bf16.msra.mxu0 0
    %2159 = vmatprep.subr.bf16.mxu0 0
    %2160 = vmatpush1.bf16.msra.mxu0 0
    %2161 = vmatprep.subr.bf16.mxu0 0
    %2162 = vmatpush1.bf16.msra.mxu0 0
    %2163 = vmatprep.subr.bf16.mxu0 0
    %2164 = vmatpush1.bf16.msra.mxu0 0
    %2165 = vmatprep.subr.bf16.mxu0 0
    %2166 = vmatpush1.bf16.msra.mxu0 0
    %2167 = vmatprep.subr.bf16.mxu0 0
    %2168 = vmatpush1.bf16.msra.mxu0 0
    %2169 = vmatprep.subr.bf16.mxu0 0
    %2170 = vmatpush1.bf16.msra.mxu0 0
    %2171 = vmatprep.subr.bf16.mxu0 0
    %2172 = vmatpush1.bf16.msra.mxu0 0
    %2173 = vmatprep.subr.bf16.mxu0 0
    %2174 = vmatpush1.bf16.msra.mxu0 0
    %2175 = vmatprep.subr.bf16.mxu0 0
    %2176 = vmatpush1.bf16.msra.mxu0 0
    %2177 = vmatprep.subr.bf16.mxu0 0
    %2178 = vmatpush1.bf16.msra.mxu0 0
    %2179 = vmatprep.subr.bf16.mxu0 0
    %2180 = vmatpush1.bf16.msra.mxu0 0
    %2181 = vmatprep.subr.bf16.mxu0 0
    %2182 = vmatpush1.bf16.msra.mxu0 0
    %2183 = vmatprep.subr.bf16.mxu0 0
    %2184 = vmatpush1.bf16.msra.mxu0 0
    %2185 = vmatprep.mubr.bf16.mxu0 0
    %2186 = vmatmul.mubr.bf16.gmra.mrb[0].mxu0 %v2148
    %v2187 = vpop.f32.mrb[0].mxu0
    %v2188 = vadd.f32 0.0, %v2187
    %v2189 = vpop.f32.mrb[0].mxu0
    %v2190 = vpop.f32.mrb[0].mxu0
    %v2191 = vpop.f32.mrb[0].mxu0
    %2192 = vdwg.mxu0
    %v2193 = vpack.c.bf16 %v2140, %v2140
    %v2194 = vpack.c.bf16 %v2188, %v2188
    %2195 = vrot.lane.b32.xlu0 %v1523, 104
    %v2196 = vpop.permute.xlu0 %2195
    %2197 = vrot.lane.b32.xlu0 %v1523, 72
    %v2198 = vpop.permute.xlu0 %2197
    %v2200 = vsel %vm175, %v2196, 0
    %v2203 = vsel %vm175, %v2198, 0
    %2205 = vmatprep.subr.bf16.mxu0 0
    %2206 = vmatpush1.bf16.xpose.msra.mxu0 %v2203
    %2207 = vmatprep.subr.bf16.mxu0 0
    %2208 = vmatpush1.bf16.xpose.msra.mxu0 0
    %2209 = vmatprep.subr.bf16.mxu0 0
    %2210 = vmatpush1.bf16.xpose.msra.mxu0 0
    %2211 = vmatprep.subr.bf16.mxu0 0
    %2212 = vmatpush1.bf16.xpose.msra.mxu0 0
    %2213 = vmatprep.subr.bf16.mxu0 0
    %2214 = vmatpush1.bf16.xpose.msra.mxu0 0
    %2215 = vmatprep.subr.bf16.mxu0 0
    %2216 = vmatpush1.bf16.xpose.msra.mxu0 0
    %2217 = vmatprep.subr.bf16.mxu0 0
    %2218 = vmatpush1.bf16.xpose.msra.mxu0 0
    %2219 = vmatprep.subr.bf16.mxu0 0
    %2220 = vmatpush1.bf16.xpose.msra.mxu0 0
    %2221 = vmatprep.subr.bf16.mxu0 0
    %2222 = vmatpush1.bf16.xpose.msra.mxu0 0
    %2223 = vmatprep.subr.bf16.mxu0 0
    %2224 = vmatpush1.bf16.xpose.msra.mxu0 0
    %2225 = vmatprep.subr.bf16.mxu0 0
    %2226 = vmatpush1.bf16.xpose.msra.mxu0 0
    %2227 = vmatprep.subr.bf16.mxu0 0
    %2228 = vmatpush1.bf16.xpose.msra.mxu0 0
    %2229 = vmatprep.subr.bf16.mxu0 0
    %2230 = vmatpush1.bf16.xpose.msra.mxu0 0
    %2231 = vmatprep.subr.bf16.mxu0 0
    %2232 = vmatpush1.bf16.xpose.msra.mxu0 0
    %2233 = vmatprep.subr.bf16.mxu0 0
    %2234 = vmatpush1.bf16.xpose.msra.mxu0 0
    %2235 = vmatprep.subr.bf16.mxu0 0
    %2236 = vmatpush1.bf16.xpose.msra.mxu0 0
    %2237 = vmatprep.mubr.bf16.mxu0 0
    %2238 = vmatmul.mubr.bf16.gmra.mrb[0].mxu0 %v2200
    %v2239 = vpop.f32.mrb[0].mxu0
    %v2240 = vadd.f32 0.0, %v2239
    %v2241 = vpop.f32.mrb[0].mxu0
    %v2242 = vpop.f32.mrb[0].mxu0
    %v2243 = vpop.f32.mrb[0].mxu0
    %2244 = vdwg.mxu0
    %2245 = vrot.lane.b32.xlu0 %v1524, 104
    %v2246 = vpop.permute.xlu0 %2245
    %2247 = vrot.lane.b32.xlu0 %v1524, 72
    %v2248 = vpop.permute.xlu0 %2247
    %v2250 = vsel %vm175, %v2246, 0
    %v2253 = vsel %vm175, %v2248, 0
    %2255 = vmatprep.subr.bf16.mxu0 0
    %2256 = vmatpush1.bf16.xpose.msra.mxu0 %v2253
    %2257 = vmatprep.subr.bf16.mxu0 0
    %2258 = vmatpush1.bf16.xpose.msra.mxu0 0
    %2259 = vmatprep.subr.bf16.mxu0 0
    %2260 = vmatpush1.bf16.xpose.msra.mxu0 0
    %2261 = vmatprep.subr.bf16.mxu0 0
    %2262 = vmatpush1.bf16.xpose.msra.mxu0 0
    %2263 = vmatprep.subr.bf16.mxu0 0
    %2264 = vmatpush1.bf16.xpose.msra.mxu0 0
    %2265 = vmatprep.subr.bf16.mxu0 0
    %2266 = vmatpush1.bf16.xpose.msra.mxu0 0
    %2267 = vmatprep.subr.bf16.mxu0 0
    %2268 = vmatpush1.bf16.xpose.msra.mxu0 0
    %2269 = vmatprep.subr.bf16.mxu0 0
    %2270 = vmatpush1.bf16.xpose.msra.mxu0 0
    %2271 = vmatprep.subr.bf16.mxu0 0
    %2272 = vmatpush1.bf16.xpose.msra.mxu0 0
    %2273 = vmatprep.subr.bf16.mxu0 0
    %2274 = vmatpush1.bf16.xpose.msra.mxu0 0
    %2275 = vmatprep.subr.bf16.mxu0 0
    %2276 = vmatpush1.bf16.xpose.msra.mxu0 0
    %2277 = vmatprep.subr.bf16.mxu0 0
    %2278 = vmatpush1.bf16.xpose.msra.mxu0 0
    %2279 = vmatprep.subr.bf16.mxu0 0
    %2280 = vmatpush1.bf16.xpose.msra.mxu0 0
    %2281 = vmatprep.subr.bf16.mxu0 0
    %2282 = vmatpush1.bf16.xpose.msra.mxu0 0
    %2283 = vmatprep.subr.bf16.mxu0 0
    %2284 = vmatpush1.bf16.xpose.msra.mxu0 0
    %2285 = vmatprep.subr.bf16.mxu0 0
    %2286 = vmatpush1.bf16.xpose.msra.mxu0 0
    %2287 = vmatprep.mubr.bf16.mxu0 0
    %2288 = vmatmul.mubr.bf16.gmra.mrb[0].mxu0 %v2250
    %v2289 = vpop.f32.mrb[0].mxu0
    %v2290 = vadd.f32 0.0, %v2289
    %v2291 = vpop.f32.mrb[0].mxu0
    %v2292 = vpop.f32.mrb[0].mxu0
    %v2293 = vpop.f32.mrb[0].mxu0
    %2294 = vdwg.mxu0
    %v2295 = vmul.f32 %v2240, 0.35355338
    %v2296 = vmul.f32 %v2290, 0.35355338
    %v2297 = vsel %vm175, %v2295, -inf
    %2298 = vmax.xlane.f32.xlu0 %v2297
    %v2299 = vpop.xlane.xlu0 %2298
    %v2300 = vsel %vm175, %v2296, -inf
    %2301 = vmax.xlane.f32.xlu0 %v2300
    %v2302 = vpop.xlane.xlu0 %2301
    %v2303 = vsub.f32 %v2295, %v2299
    %v2304 = vsub.f32 %v2296, %v2302
    %v2305 = vmul.f32 %v2303, 1.442695
    %v2306 = vpow.pop %v2305
    %v2307 = vmul.f32 %v2304, 1.442695
    %v2308 = vpow.pop %v2307
    %v2309 = vsel %vm175, %v2306, 0.0
    %2310 = vadd.xlane.f32.xlu0 %v2309
    %v2311 = vpop.xlane.xlu0 %2310
    %v2312 = vsel %vm175, %v2308, 0.0
    %2313 = vadd.xlane.f32.xlu0 %v2312
    %v2314 = vpop.xlane.xlu0 %2313
    %v2315 = vrcp.pop %v2311
    %v2316 = vmul.f32 %v2306, %v2315
    %v2317 = vrcp.pop %v2314
    %v2318 = vmul.f32 %v2308, %v2317
    %v2319 = vpack.c.bf16 %v2316, %v2316
    %v2320 = vpack.c.bf16 %v2318, %v2318
    %2321 = vrot.lane.b32.xlu0 %v1523, 40
    %v2322 = vpop.permute.xlu0 %2321
    %v2324 = vsel %vm175, %v2319, 0
    %v2327 = vsel %vm302, %v2322, 0
    %2329 = vmatprep.subr.bf16.mxu0 0
    %2330 = vmatpush1.bf16.msra.mxu0 %v2327
    %2331 = vmatprep.subr.bf16.mxu0 0
    %2332 = vmatpush1.bf16.msra.mxu0 0
    %2333 = vmatprep.subr.bf16.mxu0 0
    %2334 = vmatpush1.bf16.msra.mxu0 0
    %2335 = vmatprep.subr.bf16.mxu0 0
    %2336 = vmatpush1.bf16.msra.mxu0 0
    %2337 = vmatprep.subr.bf16.mxu0 0
    %2338 = vmatpush1.bf16.msra.mxu0 0
    %2339 = vmatprep.subr.bf16.mxu0 0
    %2340 = vmatpush1.bf16.msra.mxu0 0
    %2341 = vmatprep.subr.bf16.mxu0 0
    %2342 = vmatpush1.bf16.msra.mxu0 0
    %2343 = vmatprep.subr.bf16.mxu0 0
    %2344 = vmatpush1.bf16.msra.mxu0 0
    %2345 = vmatprep.subr.bf16.mxu0 0
    %2346 = vmatpush1.bf16.msra.mxu0 0
    %2347 = vmatprep.subr.bf16.mxu0 0
    %2348 = vmatpush1.bf16.msra.mxu0 0
    %2349 = vmatprep.subr.bf16.mxu0 0
    %2350 = vmatpush1.bf16.msra.mxu0 0
    %2351 = vmatprep.subr.bf16.mxu0 0
    %2352 = vmatpush1.bf16.msra.mxu0 0
    %2353 = vmatprep.subr.bf16.mxu0 0
    %2354 = vmatpush1.bf16.msra.mxu0 0
    %2355 = vmatprep.subr.bf16.mxu0 0
    %2356 = vmatpush1.bf16.msra.mxu0 0
    %2357 = vmatprep.subr.bf16.mxu0 0
    %2358 = vmatpush1.bf16.msra.mxu0 0
    %2359 = vmatprep.subr.bf16.mxu0 0
    %2360 = vmatpush1.bf16.msra.mxu0 0
    %2361 = vmatprep.mubr.bf16.mxu0 0
    %2362 = vmatmul.mubr.bf16.gmra.mrb[0].mxu0 %v2324
    %v2363 = vpop.f32.mrb[0].mxu0
    %v2364 = vadd.f32 0.0, %v2363
    %v2365 = vpop.f32.mrb[0].mxu0
    %v2366 = vpop.f32.mrb[0].mxu0
    %v2367 = vpop.f32.mrb[0].mxu0
    %2368 = vdwg.mxu0
    %2369 = vrot.lane.b32.xlu0 %v1524, 40
    %v2370 = vpop.permute.xlu0 %2369
    %v2372 = vsel %vm175, %v2320, 0
    %v2375 = vsel %vm302, %v2370, 0
    %2377 = vmatprep.subr.bf16.mxu0 0
    %2378 = vmatpush1.bf16.msra.mxu0 %v2375
    %2379 = vmatprep.subr.bf16.mxu0 0
    %2380 = vmatpush1.bf16.msra.mxu0 0
    %2381 = vmatprep.subr.bf16.mxu0 0
    %2382 = vmatpush1.bf16.msra.mxu0 0
    %2383 = vmatprep.subr.bf16.mxu0 0
    %2384 = vmatpush1.bf16.msra.mxu0 0
    %2385 = vmatprep.subr.bf16.mxu0 0
    %2386 = vmatpush1.bf16.msra.mxu0 0
    %2387 = vmatprep.subr.bf16.mxu0 0
    %2388 = vmatpush1.bf16.msra.mxu0 0
    %2389 = vmatprep.subr.bf16.mxu0 0
    %2390 = vmatpush1.bf16.msra.mxu0 0
    %2391 = vmatprep.subr.bf16.mxu0 0
    %2392 = vmatpush1.bf16.msra.mxu0 0
    %2393 = vmatprep.subr.bf16.mxu0 0
    %2394 = vmatpush1.bf16.msra.mxu0 0
    %2395 = vmatprep.subr.bf16.mxu0 0
    %2396 = vmatpush1.bf16.msra.mxu0 0
    %2397 = vmatprep.subr.bf16.mxu0 0
    %2398 = vmatpush1.bf16.msra.mxu0 0
    %2399 = vmatprep.subr.bf16.mxu0 0
    %2400 = vmatpush1.bf16.msra.mxu0 0
    %2401 = vmatprep.subr.bf16.mxu0 0
    %2402 = vmatpush1.bf16.msra.mxu0 0
    %2403 = vmatprep.subr.bf16.mxu0 0
    %2404 = vmatpush1.bf16.msra.mxu0 0
    %2405 = vmatprep.subr.bf16.mxu0 0
    %2406 = vmatpush1.bf16.msra.mxu0 0
    %2407 = vmatprep.subr.bf16.mxu0 0
    %2408 = vmatpush1.bf16.msra.mxu0 0
    %2409 = vmatprep.mubr.bf16.mxu0 0
    %2410 = vmatmul.mubr.bf16.gmra.mrb[0].mxu0 %v2372
    %v2411 = vpop.f32.mrb[0].mxu0
    %v2412 = vadd.f32 0.0, %v2411
    %v2413 = vpop.f32.mrb[0].mxu0
    %v2414 = vpop.f32.mrb[0].mxu0
    %v2415 = vpop.f32.mrb[0].mxu0
    %2416 = vdwg.mxu0
    %v2417 = vpack.c.bf16 %v2364, %v2364
    %v2418 = vpack.c.bf16 %v2412, %v2412
    %2421 = vrot.lane.b32.xlu0 %v1969, 8
    %v2422 = vpop.permute.xlu0 %2421
    %2423 = vrot.lane.b32.xlu0 %v1970, 8
    %v2424 = vpop.permute.xlu0 %2423
    %2427 = vrot.lane.b32.xlu0 %v2193, 16
    %v2428 = vpop.permute.xlu0 %2427
    %2429 = vrot.lane.b32.xlu0 %v2194, 16
    %v2430 = vpop.permute.xlu0 %2429
    %2433 = vrot.lane.b32.xlu0 %v2417, 24
    %v2434 = vpop.permute.xlu0 %2433
    %2435 = vrot.lane.b32.xlu0 %v2418, 24
    %v2436 = vpop.permute.xlu0 %2435
    %v2439 = vsel %vm175, %v1745, %v2422
    %v2442 = vsel %vm175, %v1746, %v2424
    %v2444 = vsel %vm1092, %v2439, %v2428
    %v2446 = vsel %vm1092, %v2442, %v2430
    %v2448 = vsel %vm1097, %v2444, %v2434
    %v2450 = vsel %vm1097, %v2446, %v2436
    %s2451 = scalar_lea.vmem %s3, 16
    %v2452 = vld [vmem:[%s2451] sm:$0xf]
    %v2453 = vld [vmem:[%s2451 + $0x4] sm:$0xf]
    %v2454 = vld [vmem:[%s2451 + $0x8] sm:$0xf]
    %v2455 = vld [vmem:[%s2451 + $0xc] sm:$0xf]
    %v2458 = vunpack.c.l.b16 %v2448
    %v2459 = vunpack.c.l.b16 %v2450
    %v2460 = vpack.c.b16 %v2459, %v2458
    %v2465 = vunpack.c.l.b16 %v2452
    %v2466 = vunpack.c.l.b16 %v2453
    %v2467 = vunpack.c.l.b16 %v2454
    %v2468 = vunpack.c.l.b16 %v2455
    %v2469 = vpack.c.b16 %v2466, %v2465
    %v2470 = vpack.c.b16 %v2468, %v2467
    %v2474 = vsel %vm69, %v2460, 0
    %2476 = vmatprep.subr.bf16.mxu0 0
    %2477 = vmatpush1.bf16.msra.mxu0 %v2469
    %2478 = vmatprep.subr.bf16.mxu0 0
    %2479 = vmatpush1.bf16.msra.mxu0 %v2470
    %2480 = vmatprep.subr.bf16.mxu0 0
    %2481 = vmatpush1.bf16.msra.mxu0 0
    %2482 = vmatprep.subr.bf16.mxu0 0
    %2483 = vmatpush1.bf16.msra.mxu0 0
    %2484 = vmatprep.subr.bf16.mxu0 0
    %2485 = vmatpush1.bf16.msra.mxu0 0
    %2486 = vmatprep.subr.bf16.mxu0 0
    %2487 = vmatpush1.bf16.msra.mxu0 0
    %2488 = vmatprep.subr.bf16.mxu0 0
    %2489 = vmatpush1.bf16.msra.mxu0 0
    %2490 = vmatprep.subr.bf16.mxu0 0
    %2491 = vmatpush1.bf16.msra.mxu0 0
    %2492 = vmatprep.subr.bf16.mxu0 0
    %2493 = vmatpush1.bf16.msra.mxu0 0
    %2494 = vmatprep.subr.bf16.mxu0 0
    %2495 = vmatpush1.bf16.msra.mxu0 0
    %2496 = vmatprep.subr.bf16.mxu0 0
    %2497 = vmatpush1.bf16.msra.mxu0 0
    %2498 = vmatprep.subr.bf16.mxu0 0
    %2499 = vmatpush1.bf16.msra.mxu0 0
    %2500 = vmatprep.subr.bf16.mxu0 0
    %2501 = vmatpush1.bf16.msra.mxu0 0
    %2502 = vmatprep.subr.bf16.mxu0 0
    %2503 = vmatpush1.bf16.msra.mxu0 0
    %2504 = vmatprep.subr.bf16.mxu0 0
    %2505 = vmatpush1.bf16.msra.mxu0 0
    %2506 = vmatprep.subr.bf16.mxu0 0
    %2507 = vmatpush1.bf16.msra.mxu0 0
    %2508 = vmatprep.mubr.bf16.mxu0 0
    %2509 = vmatmul.mubr.bf16.gmra.mrb[0].mxu0 %v2474
    %v2510 = vpop.f32.mrb[0].mxu0
    %v2511 = vadd.f32 0.0, %v2510
    %v2512 = vpop.f32.mrb[0].mxu0
    %v2513 = vpop.f32.mrb[0].mxu0
    %v2514 = vadd.f32 0.0, %v2513
    %v2515 = vpop.f32.mrb[0].mxu0
    %2516 = vdwg.mxu0
    %v2517 = vadd.f32 %v1419, %v2511
    %v2518 = vadd.f32 %v1420, %v2514
    %v2519 = vlaneseq
    %v2520 = vshrl.u32 %v2519, 7
    %v2521 = vsub.s32 2, %v2520
    %v2522 = vrot.slane %v1422, %v2521
    %v2523 = vadd.f32 %v2517, %v2522
    %v2524 = vadd.f32 %v2518, %v2522
    %v2525 = vsel %vm69, %v2523, 0.0
    %2526 = vadd.xlane.f32.xlu0 %v2525
    %v2527 = vpop.xlane.xlu0 %2526
    %v2528 = vsel %vm69, %v2524, 0.0
    %2529 = vadd.xlane.f32.xlu0 %v2528
    %v2530 = vpop.xlane.xlu0 %2529
    %v2531 = vmul.f32 %v2527, %v76
    %v2532 = vmul.f32 %v2530, %v76
    %v2533 = vsub.f32 %v2523, %v2531
    %v2534 = vsub.f32 %v2524, %v2532
    %v2535 = vmul.f32 %v2533, %v2533
    %v2536 = vmul.f32 %v2534, %v2534
    %v2537 = vsel %vm69, %v2535, 0.0
    %2538 = vadd.xlane.f32.xlu0 %v2537
    %v2539 = vpop.xlane.xlu0 %2538
    %v2540 = vsel %vm69, %v2536, 0.0
    %2541 = vadd.xlane.f32.xlu0 %v2540
    %v2542 = vpop.xlane.xlu0 %2541
    %v2543 = vmul.f32 %v2539, %v76
    %v2544 = vmul.f32 %v2542, %v76
    %v2545 = vadd.f32 %v2543, 1e-05
    %v2546 = vadd.f32 %v2544, 1e-05
    %v2547 = vrsqrt.pop %v2545
    %v2548 = vrsqrt.pop %v2546
    %v2549 = vmul.f32 %v2533, %v2547
    %v2550 = vmul.f32 %v2534, %v2548
    %v2551 = vlaneseq
    %v2552 = vshrl.u32 %v2551, 7
    %v2553 = vsub.s32 3, %v2552
    %v2554 = vrot.slane %v1422, %v2553
    %v2555 = vmul.f32 %v2549, %v2554
    %v2556 = vmul.f32 %v2550, %v2554
    %v2557 = vlaneseq
    %v2558 = vshrl.u32 %v2557, 7
    %v2559 = vsub.s32 4, %v2558
    %v2560 = vrot.slane %v1422, %v2559
    %v2561 = vadd.f32 %v2555, %v2560
    %v2562 = vadd.f32 %v2556, %v2560
    %v2563 = vpack.c.bf16 %v2562, %v2561
    %s2564 = scalar_lea.vmem %s4, 16
    %v2565 = vld [vmem:[%s2564] sm:$0xf]
    %v2566 = vld [vmem:[%s2564 + $0x4] sm:$0xf]
    %v2567 = vld [vmem:[%s2564 + $0x8] sm:$0xf]
    %v2568 = vld [vmem:[%s2564 + $0xc] sm:$0xf]
    %s2569 = scalar_lea.vmem %s5, 1
    %v2570 = vld [vmem:[%s2569] sm:$0x1]
    %v2572 = vlaneseq
    %v2573 = vshrl.u32 %v2572, 7
    %v2574 = vsub.s32 0, %v2573
    %v2575 = vrot.slane %v2570, %v2574
    %v2581 = vunpack.c.l.b16 %v2565
    %v2582 = vunpack.c.l.b16 %v2566
    %v2583 = vunpack.c.l.b16 %v2567
    %v2584 = vunpack.c.l.b16 %v2568
    %v2585 = vpack.c.b16 %v2582, %v2581
    %v2586 = vpack.c.b16 %v2584, %v2583
    %v2590 = vsel %vm69, %v2563, 0
    %2592 = vmatprep.subr.bf16.mxu0 0
    %2593 = vmatpush1.bf16.msra.mxu0 %v2585
    %2594 = vmatprep.subr.bf16.mxu0 0
    %2595 = vmatpush1.bf16.msra.mxu0 %v2586
    %2596 = vmatprep.subr.bf16.mxu0 0
    %2597 = vmatpush1.bf16.msra.mxu0 0
    %2598 = vmatprep.subr.bf16.mxu0 0
    %2599 = vmatpush1.bf16.msra.mxu0 0
    %2600 = vmatprep.subr.bf16.mxu0 0
    %2601 = vmatpush1.bf16.msra.mxu0 0
    %2602 = vmatprep.subr.bf16.mxu0 0
    %2603 = vmatpush1.bf16.msra.mxu0 0
    %2604 = vmatprep.subr.bf16.mxu0 0
    %2605 = vmatpush1.bf16.msra.mxu0 0
    %2606 = vmatprep.subr.bf16.mxu0 0
    %2607 = vmatpush1.bf16.msra.mxu0 0
    %2608 = vmatprep.subr.bf16.mxu0 0
    %2609 = vmatpush1.bf16.msra.mxu0 0
    %2610 = vmatprep.subr.bf16.mxu0 0
    %2611 = vmatpush1.bf16.msra.mxu0 0
    %2612 = vmatprep.subr.bf16.mxu0 0
    %2613 = vmatpush1.bf16.msra.mxu0 0
    %2614 = vmatprep.subr.bf16.mxu0 0
    %2615 = vmatpush1.bf16.msra.mxu0 0
    %2616 = vmatprep.subr.bf16.mxu0 0
    %2617 = vmatpush1.bf16.msra.mxu0 0
    %2618 = vmatprep.subr.bf16.mxu0 0
    %2619 = vmatpush1.bf16.msra.mxu0 0
    %2620 = vmatprep.subr.bf16.mxu0 0
    %2621 = vmatpush1.bf16.msra.mxu0 0
    %2622 = vmatprep.subr.bf16.mxu0 0
    %2623 = vmatpush1.bf16.msra.mxu0 0
    %2624 = vmatprep.mubr.bf16.mxu0 0
    %2625 = vmatmul.mubr.bf16.gmra.mrb[0].mxu0 %v2590
    %v2626 = vpop.f32.mrb[0].mxu0
    %v2627 = vadd.f32 %v2575, %v2626
    %v2628 = vpop.f32.mrb[0].mxu0
    %v2629 = vpop.f32.mrb[0].mxu0
    %v2630 = vadd.f32 %v2575, %v2629
    %v2631 = vpop.f32.mrb[0].mxu0
    %2632 = vdwg.mxu0
    %v2633 = vmul.f32 %v2627, 0.5
    %v2634 = vmul.f32 %v2630, 0.5
    %v2635 = vmul.f32 %v2627, 0.70710677
    %v2636 = vmul.f32 %v2630, 0.70710677
    %vm2637 = vcmp.ge.f32.partialorder %v2635, 0.0
    %vm2638 = vcmp.ge.f32.partialorder %v2636, 0.0
    %v2639 = vsel %vm2637, 1.0, -1.0
    %v2640 = vsel %vm2638, 1.0, -1.0
    %v2641 = vand.u32 2147483647, %v2635
    %v2642 = vand.u32 2147483647, %v2636
    %v2643 = vmul.f32 %v2641, 0.3275911
    %v2644 = vmul.f32 %v2642, 0.3275911
    %v2645 = vadd.f32 %v2643, 1.0
    %v2646 = vadd.f32 %v2644, 1.0
    %v2647 = vrcp.pop %v2645
    %v2648 = vmul.f32 1.0, %v2647
    %v2649 = vrcp.pop %v2646
    %v2650 = vmul.f32 1.0, %v2649
    %v2651 = vmul.f32 %v2648, 1.0614054
    %v2652 = vmul.f32 %v2650, 1.0614054
    %v2653 = vadd.f32 %v2651, -1.4531521
    %v2654 = vadd.f32 %v2652, -1.4531521
    %v2655 = vmul.f32 %v2653, %v2648
    %v2656 = vmul.f32 %v2654, %v2650
    %v2657 = vadd.f32 %v2655, 1.4214138
    %v2658 = vadd.f32 %v2656, 1.4214138
    %v2659 = vmul.f32 %v2657, %v2648
    %v2660 = vmul.f32 %v2658, %v2650
    %v2661 = vadd.f32 %v2659, -0.28449672
    %v2662 = vadd.f32 %v2660, -0.28449672
    %v2663 = vmul.f32 %v2661, %v2648
    %v2664 = vmul.f32 %v2662, %v2650
    %v2665 = vadd.f32 %v2663, 0.2548296
    %v2666 = vadd.f32 %v2664, 0.2548296
    %v2667 = vmul.f32 %v2665, %v2648
    %v2668 = vmul.f32 %v2666, %v2650
    %v2669 = vsub.f32 0.0, %v2641
    %v2670 = vsub.f32 0.0, %v2642
    %v2671 = vmul.f32 %v2669, %v2641
    %v2672 = vmul.f32 %v2670, %v2642
    %v2673 = vmul.f32 %v2671, 1.442695
    %v2674 = vpow.pop %v2673
    %v2675 = vmul.f32 %v2672, 1.442695
    %v2676 = vpow.pop %v2675
    %v2677 = vmul.f32 %v2667, %v2674
    %v2678 = vmul.f32 %v2668, %v2676
    %v2679 = vsub.f32 1.0, %v2677
    %v2680 = vsub.f32 1.0, %v2678
    %v2681 = vmul.f32 %v2639, %v2679
    %v2682 = vmul.f32 %v2640, %v2680
    %v2683 = vadd.f32 %v2681, 1.0
    %v2684 = vadd.f32 %v2682, 1.0
    %v2685 = vmul.f32 %v2633, %v2683
    %v2686 = vmul.f32 %v2634, %v2684
    %v2687 = vpack.c.bf16 %v2686, %v2685
    %s2688 = scalar_lea.vmem %s6, 32
    %v2689 = vld [vmem:[%s2688] sm:$0xf]
    %v2690 = vld [vmem:[%s2688 + $0x4] sm:$0xf]
    %v2691 = vld [vmem:[%s2688 + $0x8] sm:$0xf]
    %v2692 = vld [vmem:[%s2688 + $0xc] sm:$0xf]
    %v2693 = vld [vmem:[%s2688 + $0x10] sm:$0xf]
    %v2694 = vld [vmem:[%s2688 + $0x14] sm:$0xf]
    %v2695 = vld [vmem:[%s2688 + $0x18] sm:$0xf]
    %v2696 = vld [vmem:[%s2688 + $0x1c] sm:$0xf]
    %v2705 = vunpack.c.l.b16 %v2689
    %v2706 = vunpack.c.l.b16 %v2690
    %v2707 = vunpack.c.l.b16 %v2691
    %v2708 = vunpack.c.l.b16 %v2692
    %v2709 = vunpack.c.l.b16 %v2693
    %v2710 = vunpack.c.l.b16 %v2694
    %v2711 = vunpack.c.l.b16 %v2695
    %v2712 = vunpack.c.l.b16 %v2696
    %v2713 = vpack.c.b16 %v2706, %v2705
    %v2714 = vpack.c.b16 %v2708, %v2707
    %v2715 = vpack.c.b16 %v2710, %v2709
    %v2716 = vpack.c.b16 %v2712, %v2711
    %v2722 = vsel %vm1368, %v2687, 0
    %2724 = vmatprep.subr.bf16.mxu0 0
    %2725 = vmatpush1.bf16.msra.mxu0 %v2713
    %2726 = vmatprep.subr.bf16.mxu0 0
    %2727 = vmatpush1.bf16.msra.mxu0 %v2714
    %2728 = vmatprep.subr.bf16.mxu0 0
    %2729 = vmatpush1.bf16.msra.mxu0 %v2715
    %2730 = vmatprep.subr.bf16.mxu0 0
    %2731 = vmatpush1.bf16.msra.mxu0 %v2716
    %2732 = vmatprep.subr.bf16.mxu0 0
    %2733 = vmatpush1.bf16.msra.mxu0 0
    %2734 = vmatprep.subr.bf16.mxu0 0
    %2735 = vmatpush1.bf16.msra.mxu0 0
    %2736 = vmatprep.subr.bf16.mxu0 0
    %2737 = vmatpush1.bf16.msra.mxu0 0
    %2738 = vmatprep.subr.bf16.mxu0 0
    %2739 = vmatpush1.bf16.msra.mxu0 0
    %2740 = vmatprep.subr.bf16.mxu0 0
    %2741 = vmatpush1.bf16.msra.mxu0 0
    %2742 = vmatprep.subr.bf16.mxu0 0
    %2743 = vmatpush1.bf16.msra.mxu0 0
    %2744 = vmatprep.subr.bf16.mxu0 0
    %2745 = vmatpush1.bf16.msra.mxu0 0
    %2746 = vmatprep.subr.bf16.mxu0 0
    %2747 = vmatpush1.bf16.msra.mxu0 0
    %2748 = vmatprep.subr.bf16.mxu0 0
    %2749 = vmatpush1.bf16.msra.mxu0 0
    %2750 = vmatprep.subr.bf16.mxu0 0
    %2751 = vmatpush1.bf16.msra.mxu0 0
    %2752 = vmatprep.subr.bf16.mxu0 0
    %2753 = vmatpush1.bf16.msra.mxu0 0
    %2754 = vmatprep.subr.bf16.mxu0 0
    %2755 = vmatpush1.bf16.msra.mxu0 0
    %2756 = vmatprep.mubr.bf16.mxu0 0
    %2757 = vmatmul.mubr.bf16.gmra.mrb[0].mxu0 %v2722
    %v2758 = vpop.f32.mrb[0].mxu0
    %v2759 = vadd.f32 0.0, %v2758
    %v2760 = vpop.f32.mrb[0].mxu0
    %v2761 = vpop.f32.mrb[0].mxu0
    %v2762 = vadd.f32 0.0, %v2761
    %v2763 = vpop.f32.mrb[0].mxu0
    %2764 = vdwg.mxu0
    %v2765 = vadd.f32 %v2523, %v2759
    %v2766 = vadd.f32 %v2524, %v2762
    %v2767 = vlaneseq
    %v2768 = vshrl.u32 %v2767, 7
    %v2769 = vsub.s32 5, %v2768
    %v2770 = vrot.slane %v1422, %v2769
    %v2771 = vadd.f32 %v2765, %v2770
    %v2772 = vadd.f32 %v2766, %v2770
    %v2773 = vpack.c.bf16 %v2772, %v2771
    %v2774 = vld [vmem:[%s7] sm:$0xf]
    %v2775 = vld [vmem:[%s8] sm:$0xf]
    %v2776 = vld [vmem:[%s9] sm:$0xff]
    %v2778 = vunpack.c.l.b16 %v2773
    %v2779 = vunpack.c.h.b16 %v2773
    %v2780 = vpack.c.b16 %v2778, %v2778
    %v2781 = vpack.c.b16 %v2779, %v2779
    %v2783 = vunpack.c.l.b16 %v67
    %v2784 = vunpack.c.h.b16 %v67
    %v2785 = vpack.c.b16 %v2783, %v2783
    %v2786 = vpack.c.b16 %v2784, %v2784
    %v2788 = vsel %vm175, %v2775, 0
    %v2791 = vsel %vm302, %v2785, 0
    %2793 = vmatprep.subr.bf16.mxu0 0
    %2794 = vmatpush1.bf16.msra.mxu0 %v2791
    %2795 = vmatprep.subr.bf16.mxu0 0
    %2796 = vmatpush1.bf16.msra.mxu0 0
    %2797 = vmatprep.subr.bf16.mxu0 0
    %2798 = vmatpush1.bf16.msra.mxu0 0
    %2799 = vmatprep.subr.bf16.mxu0 0
    %2800 = vmatpush1.bf16.msra.mxu0 0
    %2801 = vmatprep.subr.bf16.mxu0 0
    %2802 = vmatpush1.bf16.msra.mxu0 0
    %2803 = vmatprep.subr.bf16.mxu0 0
    %2804 = vmatpush1.bf16.msra.mxu0 0
    %2805 = vmatprep.subr.bf16.mxu0 0
    %2806 = vmatpush1.bf16.msra.mxu0 0
    %2807 = vmatprep.subr.bf16.mxu0 0
    %2808 = vmatpush1.bf16.msra.mxu0 0
    %2809 = vmatprep.subr.bf16.mxu0 0
    %2810 = vmatpush1.bf16.msra.mxu0 0
    %2811 = vmatprep.subr.bf16.mxu0 0
    %2812 = vmatpush1.bf16.msra.mxu0 0
    %2813 = vmatprep.subr.bf16.mxu0 0
    %2814 = vmatpush1.bf16.msra.mxu0 0
    %2815 = vmatprep.subr.bf16.mxu0 0
    %2816 = vmatpush1.bf16.msra.mxu0 0
    %2817 = vmatprep.subr.bf16.mxu0 0
    %2818 = vmatpush1.bf16.msra.mxu0 0
    %2819 = vmatprep.subr.bf16.mxu0 0
    %2820 = vmatpush1.bf16.msra.mxu0 0
    %2821 = vmatprep.subr.bf16.mxu0 0
    %2822 = vmatpush1.bf16.msra.mxu0 0
    %2823 = vmatprep.subr.bf16.mxu0 0
    %2824 = vmatpush1.bf16.msra.mxu0 0
    %2825 = vmatprep.mubr.bf16.mxu0 0
    %2826 = vmatmul.mubr.bf16.gmra.mrb[0].mxu0 %v2788
    %v2827 = vpop.f32.mrb[0].mxu0
    %v2828 = vadd.f32 0.0, %v2827
    %v2829 = vpop.f32.mrb[0].mxu0
    %v2830 = vpop.f32.mrb[0].mxu0
    %v2831 = vpop.f32.mrb[0].mxu0
    %2832 = vdwg.mxu0
    %v2834 = vsel %vm175, %v2774, 0
    %v2837 = vsel %vm302, %v2780, 0
    %2839 = vmatprep.subr.bf16.mxu0 0
    %2840 = vmatpush1.bf16.msra.mxu0 %v2837
    %2841 = vmatprep.subr.bf16.mxu0 0
    %2842 = vmatpush1.bf16.msra.mxu0 0
    %2843 = vmatprep.subr.bf16.mxu0 0
    %2844 = vmatpush1.bf16.msra.mxu0 0
    %2845 = vmatprep.subr.bf16.mxu0 0
    %2846 = vmatpush1.bf16.msra.mxu0 0
    %2847 = vmatprep.subr.bf16.mxu0 0
    %2848 = vmatpush1.bf16.msra.mxu0 0
    %2849 = vmatprep.subr.bf16.mxu0 0
    %2850 = vmatpush1.bf16.msra.mxu0 0
    %2851 = vmatprep.subr.bf16.mxu0 0
    %2852 = vmatpush1.bf16.msra.mxu0 0
    %2853 = vmatprep.subr.bf16.mxu0 0
    %2854 = vmatpush1.bf16.msra.mxu0 0
    %2855 = vmatprep.subr.bf16.mxu0 0
    %2856 = vmatpush1.bf16.msra.mxu0 0
    %2857 = vmatprep.subr.bf16.mxu0 0
    %2858 = vmatpush1.bf16.msra.mxu0 0
    %2859 = vmatprep.subr.bf16.mxu0 0
    %2860 = vmatpush1.bf16.msra.mxu0 0
    %2861 = vmatprep.subr.bf16.mxu0 0
    %2862 = vmatpush1.bf16.msra.mxu0 0
    %2863 = vmatprep.subr.bf16.mxu0 0
    %2864 = vmatpush1.bf16.msra.mxu0 0
    %2865 = vmatprep.subr.bf16.mxu0 0
    %2866 = vmatpush1.bf16.msra.mxu0 0
    %2867 = vmatprep.subr.bf16.mxu0 0
    %2868 = vmatpush1.bf16.msra.mxu0 0
    %2869 = vmatprep.subr.bf16.mxu0 0
    %2870 = vmatpush1.bf16.msra.mxu0 0
    %2871 = vmatprep.mubr.bf16.mxu0 0
    %2872 = vmatmul.mubr.bf16.gmra.mrb[0].mxu0 %v2834
    %v2873 = vpop.f32.mrb[0].mxu0
    %v2874 = vadd.f32 %v2828, %v2873
    %v2875 = vpop.f32.mrb[0].mxu0
    %v2876 = vpop.f32.mrb[0].mxu0
    %v2877 = vpop.f32.mrb[0].mxu0
    %2878 = vdwg.mxu0
    %2880 = vset.pattern.permute.xlu0 0
    %2881 = vperm.xlu0 %2880, %v2776
    %v2882 = vpop.permute.xlu0 %2881
    %v2884 = vadd.f32 %v2874, %v2882
    %v2886 = vsel %vm302, %v2786, 0
    %2888 = vmatprep.subr.bf16.mxu0 0
    %2889 = vmatpush1.bf16.msra.mxu0 %v2886
    %2890 = vmatprep.subr.bf16.mxu0 0
    %2891 = vmatpush1.bf16.msra.mxu0 0
    %2892 = vmatprep.subr.bf16.mxu0 0
    %2893 = vmatpush1.bf16.msra.mxu0 0
    %2894 = vmatprep.subr.bf16.mxu0 0
    %2895 = vmatpush1.bf16.msra.mxu0 0
    %2896 = vmatprep.subr.bf16.mxu0 0
    %2897 = vmatpush1.bf16.msra.mxu0 0
    %2898 = vmatprep.subr.bf16.mxu0 0
    %2899 = vmatpush1.bf16.msra.mxu0 0
    %2900 = vmatprep.subr.bf16.mxu0 0
    %2901 = vmatpush1.bf16.msra.mxu0 0
    %2902 = vmatprep.subr.bf16.mxu0 0
    %2903 = vmatpush1.bf16.msra.mxu0 0
    %2904 = vmatprep.subr.bf16.mxu0 0
    %2905 = vmatpush1.bf16.msra.mxu0 0
    %2906 = vmatprep.subr.bf16.mxu0 0
    %2907 = vmatpush1.bf16.msra.mxu0 0
    %2908 = vmatprep.subr.bf16.mxu0 0
    %2909 = vmatpush1.bf16.msra.mxu0 0
    %2910 = vmatprep.subr.bf16.mxu0 0
    %2911 = vmatpush1.bf16.msra.mxu0 0
    %2912 = vmatprep.subr.bf16.mxu0 0
    %2913 = vmatpush1.bf16.msra.mxu0 0
    %2914 = vmatprep.subr.bf16.mxu0 0
    %2915 = vmatpush1.bf16.msra.mxu0 0
    %2916 = vmatprep.subr.bf16.mxu0 0
    %2917 = vmatpush1.bf16.msra.mxu0 0
    %2918 = vmatprep.subr.bf16.mxu0 0
    %2919 = vmatpush1.bf16.msra.mxu0 0
    %2920 = vmatprep.mubr.bf16.mxu0 0
    %2921 = vmatmul.mubr.bf16.gmra.mrb[0].mxu0 %v2788
    %v2922 = vpop.f32.mrb[0].mxu0
    %v2923 = vadd.f32 0.0, %v2922
    %v2924 = vpop.f32.mrb[0].mxu0
    %v2925 = vpop.f32.mrb[0].mxu0
    %v2926 = vpop.f32.mrb[0].mxu0
    %2927 = vdwg.mxu0
    %v2929 = vsel %vm302, %v2781, 0
    %2931 = vmatprep.subr.bf16.mxu0 0
    %2932 = vmatpush1.bf16.msra.mxu0 %v2929
    %2933 = vmatprep.subr.bf16.mxu0 0
    %2934 = vmatpush1.bf16.msra.mxu0 0
    %2935 = vmatprep.subr.bf16.mxu0 0
    %2936 = vmatpush1.bf16.msra.mxu0 0
    %2937 = vmatprep.subr.bf16.mxu0 0
    %2938 = vmatpush1.bf16.msra.mxu0 0
    %2939 = vmatprep.subr.bf16.mxu0 0
    %2940 = vmatpush1.bf16.msra.mxu0 0
    %2941 = vmatprep.subr.bf16.mxu0 0
    %2942 = vmatpush1.bf16.msra.mxu0 0
    %2943 = vmatprep.subr.bf16.mxu0 0
    %2944 = vmatpush1.bf16.msra.mxu0 0
    %2945 = vmatprep.subr.bf16.mxu0 0
    %2946 = vmatpush1.bf16.msra.mxu0 0
    %2947 = vmatprep.subr.bf16.mxu0 0
    %2948 = vmatpush1.bf16.msra.mxu0 0
    %2949 = vmatprep.subr.bf16.mxu0 0
    %2950 = vmatpush1.bf16.msra.mxu0 0
    %2951 = vmatprep.subr.bf16.mxu0 0
    %2952 = vmatpush1.bf16.msra.mxu0 0
    %2953 = vmatprep.subr.bf16.mxu0 0
    %2954 = vmatpush1.bf16.msra.mxu0 0
    %2955 = vmatprep.subr.bf16.mxu0 0
    %2956 = vmatpush1.bf16.msra.mxu0 0
    %2957 = vmatprep.subr.bf16.mxu0 0
    %2958 = vmatpush1.bf16.msra.mxu0 0
    %2959 = vmatprep.subr.bf16.mxu0 0
    %2960 = vmatpush1.bf16.msra.mxu0 0
    %2961 = vmatprep.subr.bf16.mxu0 0
    %2962 = vmatpush1.bf16.msra.mxu0 0
    %2963 = vmatprep.mubr.bf16.mxu0 0
    %2964 = vmatmul.mubr.bf16.gmra.mrb[0].mxu0 %v2834
    %v2965 = vpop.f32.mrb[0].mxu0
    %v2966 = vadd.f32 %v2923, %v2965
    %v2967 = vpop.f32.mrb[0].mxu0
    %v2968 = vpop.f32.mrb[0].mxu0
    %v2969 = vpop.f32.mrb[0].mxu0
    %2970 = vdwg.mxu0
    %v2971 = vadd.f32 %v2966, %v2882
    %s2972 = scalar_lea.vmem [#allocation5], 16
    %v2973 = vld [vmem:[%s2972] sm:$0x3f]
    %v2974 = vsel %vm69, %v2884, 0.0
    %2975 = vadd.xlane.f32.xlu0 %v2974
    %v2976 = vpop.xlane.xlu0 %2975
    %v2977 = vsel %vm69, %v2971, 0.0
    %2978 = vadd.xlane.f32.xlu0 %v2977
    %v2979 = vpop.xlane.xlu0 %2978
    %v2980 = vmul.f32 %v2976, %v76
    %v2981 = vmul.f32 %v2979, %v76
    %v2982 = vsub.f32 %v2884, %v2980
    %v2983 = vsub.f32 %v2971, %v2981
    %v2984 = vmul.f32 %v2982, %v2982
    %v2985 = vmul.f32 %v2983, %v2983
    %v2986 = vsel %vm69, %v2984, 0.0
    %2987 = vadd.xlane.f32.xlu0 %v2986
    %v2988 = vpop.xlane.xlu0 %2987
    %v2989 = vsel %vm69, %v2985, 0.0
    %2990 = vadd.xlane.f32.xlu0 %v2989
    %v2991 = vpop.xlane.xlu0 %2990
    %v2992 = vmul.f32 %v2988, %v76
    %v2993 = vmul.f32 %v2991, %v76
    %v2994 = vadd.f32 %v2992, 1e-05
    %v2995 = vadd.f32 %v2993, 1e-05
    %v2996 = vrsqrt.pop %v2994
    %v2997 = vrsqrt.pop %v2995
    %v2998 = vmul.f32 %v2982, %v2996
    %v2999 = vmul.f32 %v2983, %v2997
    %v3000 = vlaneseq
    %v3001 = vshrl.u32 %v3000, 7
    %v3002 = vsub.s32 0, %v3001
    %v3003 = vrot.slane %v2973, %v3002
    %v3004 = vmul.f32 %v2998, %v3003
    %v3005 = vmul.f32 %v2999, %v3003
    %v3006 = vlaneseq
    %v3007 = vshrl.u32 %v3006, 7
    %v3008 = vsub.s32 1, %v3007
    %v3009 = vrot.slane %v2973, %v3008
    %v3010 = vadd.f32 %v3004, %v3009
    %v3011 = vadd.f32 %v3005, %v3009
    %v3012 = vpack.c.bf16 %v3011, %v3010
    %s3013 = scalar_lea.vmem %s2, 32
    %v3014 = vld [vmem:[%s3013] sm:$0xf]
    %v3015 = vld [vmem:[%s3013 + $0x4] sm:$0xf]
    %v3016 = vld [vmem:[%s3013 + $0x8] sm:$0xf]
    %v3017 = vld [vmem:[%s3013 + $0xc] sm:$0xf]
    %v3022 = vunpack.c.l.b16 %v3014
    %v3023 = vunpack.c.l.b16 %v3015
    %v3024 = vunpack.c.l.b16 %v3016
    %v3025 = vunpack.c.l.b16 %v3017
    %v3026 = vpack.c.b16 %v3023, %v3022
    %v3027 = vpack.c.b16 %v3025, %v3024
    %v3031 = vsel %vm69, %v3012, 0
    %3033 = vmatprep.subr.bf16.mxu0 0
    %3034 = vmatpush1.bf16.msra.mxu0 %v3026
    %3035 = vmatprep.subr.bf16.mxu0 0
    %3036 = vmatpush1.bf16.msra.mxu0 %v3027
    %3037 = vmatprep.subr.bf16.mxu0 0
    %3038 = vmatpush1.bf16.msra.mxu0 0
    %3039 = vmatprep.subr.bf16.mxu0 0
    %3040 = vmatpush1.bf16.msra.mxu0 0
    %3041 = vmatprep.subr.bf16.mxu0 0
    %3042 = vmatpush1.bf16.msra.mxu0 0
    %3043 = vmatprep.subr.bf16.mxu0 0
    %3044 = vmatpush1.bf16.msra.mxu0 0
    %3045 = vmatprep.subr.bf16.mxu0 0
    %3046 = vmatpush1.bf16.msra.mxu0 0
    %3047 = vmatprep.subr.bf16.mxu0 0
    %3048 = vmatpush1.bf16.msra.mxu0 0
    %3049 = vmatprep.subr.bf16.mxu0 0
    %3050 = vmatpush1.bf16.msra.mxu0 0
    %3051 = vmatprep.subr.bf16.mxu0 0
    %3052 = vmatpush1.bf16.msra.mxu0 0
    %3053 = vmatprep.subr.bf16.mxu0 0
    %3054 = vmatpush1.bf16.msra.mxu0 0
    %3055 = vmatprep.subr.bf16.mxu0 0
    %3056 = vmatpush1.bf16.msra.mxu0 0
    %3057 = vmatprep.subr.bf16.mxu0 0
    %3058 = vmatpush1.bf16.msra.mxu0 0
    %3059 = vmatprep.subr.bf16.mxu0 0
    %3060 = vmatpush1.bf16.msra.mxu0 0
    %3061 = vmatprep.subr.bf16.mxu0 0
    %3062 = vmatpush1.bf16.msra.mxu0 0
    %3063 = vmatprep.subr.bf16.mxu0 0
    %3064 = vmatpush1.bf16.msra.mxu0 0
    %3065 = vmatprep.mubr.bf16.mxu0 0
    %3066 = vmatmul.mubr.bf16.gmra.mrb[0].mxu0 %v3031
    %v3067 = vpop.f32.mrb[0].mxu0
    %v3068 = vadd.f32 0.0, %v3067
    %v3069 = vpop.f32.mrb[0].mxu0
    %v3070 = vpop.f32.mrb[0].mxu0
    %v3071 = vadd.f32 0.0, %v3070
    %v3072 = vpop.f32.mrb[0].mxu0
    %3073 = vdwg.mxu0
    %v3074 = vpack.c.bf16 %v3068, %v3068
    %v3075 = vpack.c.bf16 %v3071, %v3071
    %3077 = vrot.lane.b32.xlu0 %v3074, 96
    %v3078 = vpop.permute.xlu0 %3077
    %v3080 = vsel %vm175, %v3074, 0
    %v3083 = vsel %vm175, %v3078, 0
    %3085 = vmatprep.subr.bf16.mxu0 0
    %3086 = vmatpush1.bf16.xpose.msra.mxu0 %v3083
    %3087 = vmatprep.subr.bf16.mxu0 0
    %3088 = vmatpush1.bf16.xpose.msra.mxu0 0
    %3089 = vmatprep.subr.bf16.mxu0 0
    %3090 = vmatpush1.bf16.xpose.msra.mxu0 0
    %3091 = vmatprep.subr.bf16.mxu0 0
    %3092 = vmatpush1.bf16.xpose.msra.mxu0 0
    %3093 = vmatprep.subr.bf16.mxu0 0
    %3094 = vmatpush1.bf16.xpose.msra.mxu0 0
    %3095 = vmatprep.subr.bf16.mxu0 0
    %3096 = vmatpush1.bf16.xpose.msra.mxu0 0
    %3097 = vmatprep.subr.bf16.mxu0 0
    %3098 = vmatpush1.bf16.xpose.msra.mxu0 0
    %3099 = vmatprep.subr.bf16.mxu0 0
    %3100 = vmatpush1.bf16.xpose.msra.mxu0 0
    %3101 = vmatprep.subr.bf16.mxu0 0
    %3102 = vmatpush1.bf16.xpose.msra.mxu0 0
    %3103 = vmatprep.subr.bf16.mxu0 0
    %3104 = vmatpush1.bf16.xpose.msra.mxu0 0
    %3105 = vmatprep.subr.bf16.mxu0 0
    %3106 = vmatpush1.bf16.xpose.msra.mxu0 0
    %3107 = vmatprep.subr.bf16.mxu0 0
    %3108 = vmatpush1.bf16.xpose.msra.mxu0 0
    %3109 = vmatprep.subr.bf16.mxu0 0
    %3110 = vmatpush1.bf16.xpose.msra.mxu0 0
    %3111 = vmatprep.subr.bf16.mxu0 0
    %3112 = vmatpush1.bf16.xpose.msra.mxu0 0
    %3113 = vmatprep.subr.bf16.mxu0 0
    %3114 = vmatpush1.bf16.xpose.msra.mxu0 0
    %3115 = vmatprep.subr.bf16.mxu0 0
    %3116 = vmatpush1.bf16.xpose.msra.mxu0 0
    %3117 = vmatprep.mubr.bf16.mxu0 0
    %3118 = vmatmul.mubr.bf16.gmra.mrb[0].mxu0 %v3080
    %v3119 = vpop.f32.mrb[0].mxu0
    %v3120 = vadd.f32 0.0, %v3119
    %v3121 = vpop.f32.mrb[0].mxu0
    %v3122 = vpop.f32.mrb[0].mxu0
    %v3123 = vpop.f32.mrb[0].mxu0
    %3124 = vdwg.mxu0
    %3126 = vrot.lane.b32.xlu0 %v3075, 96
    %v3127 = vpop.permute.xlu0 %3126
    %v3129 = vsel %vm175, %v3075, 0
    %v3132 = vsel %vm175, %v3127, 0
    %3134 = vmatprep.subr.bf16.mxu0 0
    %3135 = vmatpush1.bf16.xpose.msra.mxu0 %v3132
    %3136 = vmatprep.subr.bf16.mxu0 0
    %3137 = vmatpush1.bf16.xpose.msra.mxu0 0
    %3138 = vmatprep.subr.bf16.mxu0 0
    %3139 = vmatpush1.bf16.xpose.msra.mxu0 0
    %3140 = vmatprep.subr.bf16.mxu0 0
    %3141 = vmatpush1.bf16.xpose.msra.mxu0 0
    %3142 = vmatprep.subr.bf16.mxu0 0
    %3143 = vmatpush1.bf16.xpose.msra.mxu0 0
    %3144 = vmatprep.subr.bf16.mxu0 0
    %3145 = vmatpush1.bf16.xpose.msra.mxu0 0
    %3146 = vmatprep.subr.bf16.mxu0 0
    %3147 = vmatpush1.bf16.xpose.msra.mxu0 0
    %3148 = vmatprep.subr.bf16.mxu0 0
    %3149 = vmatpush1.bf16.xpose.msra.mxu0 0
    %3150 = vmatprep.subr.bf16.mxu0 0
    %3151 = vmatpush1.bf16.xpose.msra.mxu0 0
    %3152 = vmatprep.subr.bf16.mxu0 0
    %3153 = vmatpush1.bf16.xpose.msra.mxu0 0
    %3154 = vmatprep.subr.bf16.mxu0 0
    %3155 = vmatpush1.bf16.xpose.msra.mxu0 0
    %3156 = vmatprep.subr.bf16.mxu0 0
    %3157 = vmatpush1.bf16.xpose.msra.mxu0 0
    %3158 = vmatprep.subr.bf16.mxu0 0
    %3159 = vmatpush1.bf16.xpose.msra.mxu0 0
    %3160 = vmatprep.subr.bf16.mxu0 0
    %3161 = vmatpush1.bf16.xpose.msra.mxu0 0
    %3162 = vmatprep.subr.bf16.mxu0 0
    %3163 = vmatpush1.bf16.xpose.msra.mxu0 0
    %3164 = vmatprep.subr.bf16.mxu0 0
    %3165 = vmatpush1.bf16.xpose.msra.mxu0 0
    %3166 = vmatprep.mubr.bf16.mxu0 0
    %3167 = vmatmul.mubr.bf16.gmra.mrb[0].mxu0 %v3129
    %v3168 = vpop.f32.mrb[0].mxu0
    %v3169 = vadd.f32 0.0, %v3168
    %v3170 = vpop.f32.mrb[0].mxu0
    %v3171 = vpop.f32.mrb[0].mxu0
    %v3172 = vpop.f32.mrb[0].mxu0
    %3173 = vdwg.mxu0
    %v3174 = vmul.f32 %v3120, 0.35355338
    %v3175 = vmul.f32 %v3169, 0.35355338
    %v3176 = vsel %vm175, %v3174, -inf
    %3177 = vmax.xlane.f32.xlu0 %v3176
    %v3178 = vpop.xlane.xlu0 %3177
    %v3179 = vsel %vm175, %v3175, -inf
    %3180 = vmax.xlane.f32.xlu0 %v3179
    %v3181 = vpop.xlane.xlu0 %3180
    %v3182 = vsub.f32 %v3174, %v3178
    %v3183 = vsub.f32 %v3175, %v3181
    %v3184 = vmul.f32 %v3182, 1.442695
    %v3185 = vpow.pop %v3184
    %v3186 = vmul.f32 %v3183, 1.442695
    %v3187 = vpow.pop %v3186
    %v3188 = vsel %vm175, %v3185, 0.0
    %3189 = vadd.xlane.f32.xlu0 %v3188
    %v3190 = vpop.xlane.xlu0 %3189
    %v3191 = vsel %vm175, %v3187, 0.0
    %3192 = vadd.xlane.f32.xlu0 %v3191
    %v3193 = vpop.xlane.xlu0 %3192
    %v3194 = vrcp.pop %v3190
    %v3195 = vmul.f32 %v3185, %v3194
    %v3196 = vrcp.pop %v3193
    %v3197 = vmul.f32 %v3187, %v3196
    %v3198 = vpack.c.bf16 %v3195, %v3195
    %v3199 = vpack.c.bf16 %v3197, %v3197
    %3200 = vrot.lane.b32.xlu0 %v3074, 64
    %v3201 = vpop.permute.xlu0 %3200
    %v3203 = vsel %vm175, %v3198, 0
    %v3206 = vsel %vm302, %v3201, 0
    %3208 = vmatprep.subr.bf16.mxu0 0
    %3209 = vmatpush1.bf16.msra.mxu0 %v3206
    %3210 = vmatprep.subr.bf16.mxu0 0
    %3211 = vmatpush1.bf16.msra.mxu0 0
    %3212 = vmatprep.subr.bf16.mxu0 0
    %3213 = vmatpush1.bf16.msra.mxu0 0
    %3214 = vmatprep.subr.bf16.mxu0 0
    %3215 = vmatpush1.bf16.msra.mxu0 0
    %3216 = vmatprep.subr.bf16.mxu0 0
    %3217 = vmatpush1.bf16.msra.mxu0 0
    %3218 = vmatprep.subr.bf16.mxu0 0
    %3219 = vmatpush1.bf16.msra.mxu0 0
    %3220 = vmatprep.subr.bf16.mxu0 0
    %3221 = vmatpush1.bf16.msra.mxu0 0
    %3222 = vmatprep.subr.bf16.mxu0 0
    %3223 = vmatpush1.bf16.msra.mxu0 0
    %3224 = vmatprep.subr.bf16.mxu0 0
    %3225 = vmatpush1.bf16.msra.mxu0 0
    %3226 = vmatprep.subr.bf16.mxu0 0
    %3227 = vmatpush1.bf16.msra.mxu0 0
    %3228 = vmatprep.subr.bf16.mxu0 0
    %3229 = vmatpush1.bf16.msra.mxu0 0
    %3230 = vmatprep.subr.bf16.mxu0 0
    %3231 = vmatpush1.bf16.msra.mxu0 0
    %3232 = vmatprep.subr.bf16.mxu0 0
    %3233 = vmatpush1.bf16.msra.mxu0 0
    %3234 = vmatprep.subr.bf16.mxu0 0
    %3235 = vmatpush1.bf16.msra.mxu0 0
    %3236 = vmatprep.subr.bf16.mxu0 0
    %3237 = vmatpush1.bf16.msra.mxu0 0
    %3238 = vmatprep.subr.bf16.mxu0 0
    %3239 = vmatpush1.bf16.msra.mxu0 0
    %3240 = vmatprep.mubr.bf16.mxu0 0
    %3241 = vmatmul.mubr.bf16.gmra.mrb[0].mxu0 %v3203
    %v3242 = vpop.f32.mrb[0].mxu0
    %v3243 = vadd.f32 0.0, %v3242
    %v3244 = vpop.f32.mrb[0].mxu0
    %v3245 = vpop.f32.mrb[0].mxu0
    %v3246 = vpop.f32.mrb[0].mxu0
    %3247 = vdwg.mxu0
    %3248 = vrot.lane.b32.xlu0 %v3075, 64
    %v3249 = vpop.permute.xlu0 %3248
    %v3251 = vsel %vm175, %v3199, 0
    %v3254 = vsel %vm302, %v3249, 0
    %3256 = vmatprep.subr.bf16.mxu0 0
    %3257 = vmatpush1.bf16.msra.mxu0 %v3254
    %3258 = vmatprep.subr.bf16.mxu0 0
    %3259 = vmatpush1.bf16.msra.mxu0 0
    %3260 = vmatprep.subr.bf16.mxu0 0
    %3261 = vmatpush1.bf16.msra.mxu0 0
    %3262 = vmatprep.subr.bf16.mxu0 0
    %3263 = vmatpush1.bf16.msra.mxu0 0
    %3264 = vmatprep.subr.bf16.mxu0 0
    %3265 = vmatpush1.bf16.msra.mxu0 0
    %3266 = vmatprep.subr.bf16.mxu0 0
    %3267 = vmatpush1.bf16.msra.mxu0 0
    %3268 = vmatprep.subr.bf16.mxu0 0
    %3269 = vmatpush1.bf16.msra.mxu0 0
    %3270 = vmatprep.subr.bf16.mxu0 0
    %3271 = vmatpush1.bf16.msra.mxu0 0
    %3272 = vmatprep.subr.bf16.mxu0 0
    %3273 = vmatpush1.bf16.msra.mxu0 0
    %3274 = vmatprep.subr.bf16.mxu0 0
    %3275 = vmatpush1.bf16.msra.mxu0 0
    %3276 = vmatprep.subr.bf16.mxu0 0
    %3277 = vmatpush1.bf16.msra.mxu0 0
    %3278 = vmatprep.subr.bf16.mxu0 0
    %3279 = vmatpush1.bf16.msra.mxu0 0
    %3280 = vmatprep.subr.bf16.mxu0 0
    %3281 = vmatpush1.bf16.msra.mxu0 0
    %3282 = vmatprep.subr.bf16.mxu0 0
    %3283 = vmatpush1.bf16.msra.mxu0 0
    %3284 = vmatprep.subr.bf16.mxu0 0
    %3285 = vmatpush1.bf16.msra.mxu0 0
    %3286 = vmatprep.subr.bf16.mxu0 0
    %3287 = vmatpush1.bf16.msra.mxu0 0
    %3288 = vmatprep.mubr.bf16.mxu0 0
    %3289 = vmatmul.mubr.bf16.gmra.mrb[0].mxu0 %v3251
    %v3290 = vpop.f32.mrb[0].mxu0
    %v3291 = vadd.f32 0.0, %v3290
    %v3292 = vpop.f32.mrb[0].mxu0
    %v3293 = vpop.f32.mrb[0].mxu0
    %v3294 = vpop.f32.mrb[0].mxu0
    %3295 = vdwg.mxu0
    %v3296 = vpack.c.bf16 %v3243, %v3243
    %v3297 = vpack.c.bf16 %v3291, %v3291
    %3298 = vrot.lane.b32.xlu0 %v3074, 120
    %v3299 = vpop.permute.xlu0 %3298
    %3300 = vrot.lane.b32.xlu0 %v3074, 88
    %v3301 = vpop.permute.xlu0 %3300
    %v3303 = vsel %vm175, %v3299, 0
    %v3306 = vsel %vm175, %v3301, 0
    %3308 = vmatprep.subr.bf16.mxu0 0
    %3309 = vmatpush1.bf16.xpose.msra.mxu0 %v3306
    %3310 = vmatprep.subr.bf16.mxu0 0
    %3311 = vmatpush1.bf16.xpose.msra.mxu0 0
    %3312 = vmatprep.subr.bf16.mxu0 0
    %3313 = vmatpush1.bf16.xpose.msra.mxu0 0
    %3314 = vmatprep.subr.bf16.mxu0 0
    %3315 = vmatpush1.bf16.xpose.msra.mxu0 0
    %3316 = vmatprep.subr.bf16.mxu0 0
    %3317 = vmatpush1.bf16.xpose.msra.mxu0 0
    %3318 = vmatprep.subr.bf16.mxu0 0
    %3319 = vmatpush1.bf16.xpose.msra.mxu0 0
    %3320 = vmatprep.subr.bf16.mxu0 0
    %3321 = vmatpush1.bf16.xpose.msra.mxu0 0
    %3322 = vmatprep.subr.bf16.mxu0 0
    %3323 = vmatpush1.bf16.xpose.msra.mxu0 0
    %3324 = vmatprep.subr.bf16.mxu0 0
    %3325 = vmatpush1.bf16.xpose.msra.mxu0 0
    %3326 = vmatprep.subr.bf16.mxu0 0
    %3327 = vmatpush1.bf16.xpose.msra.mxu0 0
    %3328 = vmatprep.subr.bf16.mxu0 0
    %3329 = vmatpush1.bf16.xpose.msra.mxu0 0
    %3330 = vmatprep.subr.bf16.mxu0 0
    %3331 = vmatpush1.bf16.xpose.msra.mxu0 0
    %3332 = vmatprep.subr.bf16.mxu0 0
    %3333 = vmatpush1.bf16.xpose.msra.mxu0 0
    %3334 = vmatprep.subr.bf16.mxu0 0
    %3335 = vmatpush1.bf16.xpose.msra.mxu0 0
    %3336 = vmatprep.subr.bf16.mxu0 0
    %3337 = vmatpush1.bf16.xpose.msra.mxu0 0
    %3338 = vmatprep.subr.bf16.mxu0 0
    %3339 = vmatpush1.bf16.xpose.msra.mxu0 0
    %3340 = vmatprep.mubr.bf16.mxu0 0
    %3341 = vmatmul.mubr.bf16.gmra.mrb[0].mxu0 %v3303
    %v3342 = vpop.f32.mrb[0].mxu0
    %v3343 = vadd.f32 0.0, %v3342
    %v3344 = vpop.f32.mrb[0].mxu0
    %v3345 = vpop.f32.mrb[0].mxu0
    %v3346 = vpop.f32.mrb[0].mxu0
    %3347 = vdwg.mxu0
    %3348 = vrot.lane.b32.xlu0 %v3075, 120
    %v3349 = vpop.permute.xlu0 %3348
    %3350 = vrot.lane.b32.xlu0 %v3075, 88
    %v3351 = vpop.permute.xlu0 %3350
    %v3353 = vsel %vm175, %v3349, 0
    %v3356 = vsel %vm175, %v3351, 0
    %3358 = vmatprep.subr.bf16.mxu0 0
    %3359 = vmatpush1.bf16.xpose.msra.mxu0 %v3356
    %3360 = vmatprep.subr.bf16.mxu0 0
    %3361 = vmatpush1.bf16.xpose.msra.mxu0 0
    %3362 = vmatprep.subr.bf16.mxu0 0
    %3363 = vmatpush1.bf16.xpose.msra.mxu0 0
    %3364 = vmatprep.subr.bf16.mxu0 0
    %3365 = vmatpush1.bf16.xpose.msra.mxu0 0
    %3366 = vmatprep.subr.bf16.mxu0 0
    %3367 = vmatpush1.bf16.xpose.msra.mxu0 0
    %3368 = vmatprep.subr.bf16.mxu0 0
    %3369 = vmatpush1.bf16.xpose.msra.mxu0 0
    %3370 = vmatprep.subr.bf16.mxu0 0
    %3371 = vmatpush1.bf16.xpose.msra.mxu0 0
    %3372 = vmatprep.subr.bf16.mxu0 0
    %3373 = vmatpush1.bf16.xpose.msra.mxu0 0
    %3374 = vmatprep.subr.bf16.mxu0 0
    %3375 = vmatpush1.bf16.xpose.msra.mxu0 0
    %3376 = vmatprep.subr.bf16.mxu0 0
    %3377 = vmatpush1.bf16.xpose.msra.mxu0 0
    %3378 = vmatprep.subr.bf16.mxu0 0
    %3379 = vmatpush1.bf16.xpose.msra.mxu0 0
    %3380 = vmatprep.subr.bf16.mxu0 0
    %3381 = vmatpush1.bf16.xpose.msra.mxu0 0
    %3382 = vmatprep.subr.bf16.mxu0 0
    %3383 = vmatpush1.bf16.xpose.msra.mxu0 0
    %3384 = vmatprep.subr.bf16.mxu0 0
    %3385 = vmatpush1.bf16.xpose.msra.mxu0 0
    %3386 = vmatprep.subr.bf16.mxu0 0
    %3387 = vmatpush1.bf16.xpose.msra.mxu0 0
    %3388 = vmatprep.subr.bf16.mxu0 0
    %3389 = vmatpush1.bf16.xpose.msra.mxu0 0
    %3390 = vmatprep.mubr.bf16.mxu0 0
    %3391 = vmatmul.mubr.bf16.gmra.mrb[0].mxu0 %v3353
    %v3392 = vpop.f32.mrb[0].mxu0
    %v3393 = vadd.f32 0.0, %v3392
    %v3394 = vpop.f32.mrb[0].mxu0
    %v3395 = vpop.f32.mrb[0].mxu0
    %v3396 = vpop.f32.mrb[0].mxu0
    %3397 = vdwg.mxu0
    %v3398 = vmul.f32 %v3343, 0.35355338
    %v3399 = vmul.f32 %v3393, 0.35355338
    %v3400 = vsel %vm175, %v3398, -inf
    %3401 = vmax.xlane.f32.xlu0 %v3400
    %v3402 = vpop.xlane.xlu0 %3401
    %v3403 = vsel %vm175, %v3399, -inf
    %3404 = vmax.xlane.f32.xlu0 %v3403
    %v3405 = vpop.xlane.xlu0 %3404
    %v3406 = vsub.f32 %v3398, %v3402
    %v3407 = vsub.f32 %v3399, %v3405
    %v3408 = vmul.f32 %v3406, 1.442695
    %v3409 = vpow.pop %v3408
    %v3410 = vmul.f32 %v3407, 1.442695
    %v3411 = vpow.pop %v3410
    %v3412 = vsel %vm175, %v3409, 0.0
    %3413 = vadd.xlane.f32.xlu0 %v3412
    %v3414 = vpop.xlane.xlu0 %3413
    %v3415 = vsel %vm175, %v3411, 0.0
    %3416 = vadd.xlane.f32.xlu0 %v3415
    %v3417 = vpop.xlane.xlu0 %3416
    %v3418 = vrcp.pop %v3414
    %v3419 = vmul.f32 %v3409, %v3418
    %v3420 = vrcp.pop %v3417
    %v3421 = vmul.f32 %v3411, %v3420
    %v3422 = vpack.c.bf16 %v3419, %v3419
    %v3423 = vpack.c.bf16 %v3421, %v3421
    %3424 = vrot.lane.b32.xlu0 %v3074, 56
    %v3425 = vpop.permute.xlu0 %3424
    %v3427 = vsel %vm175, %v3422, 0
    %v3430 = vsel %vm302, %v3425, 0
    %3432 = vmatprep.subr.bf16.mxu0 0
    %3433 = vmatpush1.bf16.msra.mxu0 %v3430
    %3434 = vmatprep.subr.bf16.mxu0 0
    %3435 = vmatpush1.bf16.msra.mxu0 0
    %3436 = vmatprep.subr.bf16.mxu0 0
    %3437 = vmatpush1.bf16.msra.mxu0 0
    %3438 = vmatprep.subr.bf16.mxu0 0
    %3439 = vmatpush1.bf16.msra.mxu0 0
    %3440 = vmatprep.subr.bf16.mxu0 0
    %3441 = vmatpush1.bf16.msra.mxu0 0
    %3442 = vmatprep.subr.bf16.mxu0 0
    %3443 = vmatpush1.bf16.msra.mxu0 0
    %3444 = vmatprep.subr.bf16.mxu0 0
    %3445 = vmatpush1.bf16.msra.mxu0 0
    %3446 = vmatprep.subr.bf16.mxu0 0
    %3447 = vmatpush1.bf16.msra.mxu0 0
    %3448 = vmatprep.subr.bf16.mxu0 0
    %3449 = vmatpush1.bf16.msra.mxu0 0
    %3450 = vmatprep.subr.bf16.mxu0 0
    %3451 = vmatpush1.bf16.msra.mxu0 0
    %3452 = vmatprep.subr.bf16.mxu0 0
    %3453 = vmatpush1.bf16.msra.mxu0 0
    %3454 = vmatprep.subr.bf16.mxu0 0
    %3455 = vmatpush1.bf16.msra.mxu0 0
    %3456 = vmatprep.subr.bf16.mxu0 0
    %3457 = vmatpush1.bf16.msra.mxu0 0
    %3458 = vmatprep.subr.bf16.mxu0 0
    %3459 = vmatpush1.bf16.msra.mxu0 0
    %3460 = vmatprep.subr.bf16.mxu0 0
    %3461 = vmatpush1.bf16.msra.mxu0 0
    %3462 = vmatprep.subr.bf16.mxu0 0
    %3463 = vmatpush1.bf16.msra.mxu0 0
    %3464 = vmatprep.mubr.bf16.mxu0 0
    %3465 = vmatmul.mubr.bf16.gmra.mrb[0].mxu0 %v3427
    %v3466 = vpop.f32.mrb[0].mxu0
    %v3467 = vadd.f32 0.0, %v3466
    %v3468 = vpop.f32.mrb[0].mxu0
    %v3469 = vpop.f32.mrb[0].mxu0
    %v3470 = vpop.f32.mrb[0].mxu0
    %3471 = vdwg.mxu0
    %3472 = vrot.lane.b32.xlu0 %v3075, 56
    %v3473 = vpop.permute.xlu0 %3472
    %v3475 = vsel %vm175, %v3423, 0
    %v3478 = vsel %vm302, %v3473, 0
    %3480 = vmatprep.subr.bf16.mxu0 0
    %3481 = vmatpush1.bf16.msra.mxu0 %v3478
    %3482 = vmatprep.subr.bf16.mxu0 0
    %3483 = vmatpush1.bf16.msra.mxu0 0
    %3484 = vmatprep.subr.bf16.mxu0 0
    %3485 = vmatpush1.bf16.msra.mxu0 0
    %3486 = vmatprep.subr.bf16.mxu0 0
    %3487 = vmatpush1.bf16.msra.mxu0 0
    %3488 = vmatprep.subr.bf16.mxu0 0
    %3489 = vmatpush1.bf16.msra.mxu0 0
    %3490 = vmatprep.subr.bf16.mxu0 0
    %3491 = vmatpush1.bf16.msra.mxu0 0
    %3492 = vmatprep.subr.bf16.mxu0 0
    %3493 = vmatpush1.bf16.msra.mxu0 0
    %3494 = vmatprep.subr.bf16.mxu0 0
    %3495 = vmatpush1.bf16.msra.mxu0 0
    %3496 = vmatprep.subr.bf16.mxu0 0
    %3497 = vmatpush1.bf16.msra.mxu0 0
    %3498 = vmatprep.subr.bf16.mxu0 0
    %3499 = vmatpush1.bf16.msra.mxu0 0
    %3500 = vmatprep.subr.bf16.mxu0 0
    %3501 = vmatpush1.bf16.msra.mxu0 0
    %3502 = vmatprep.subr.bf16.mxu0 0
    %3503 = vmatpush1.bf16.msra.mxu0 0
    %3504 = vmatprep.subr.bf16.mxu0 0
    %3505 = vmatpush1.bf16.msra.mxu0 0
    %3506 = vmatprep.subr.bf16.mxu0 0
    %3507 = vmatpush1.bf16.msra.mxu0 0
    %3508 = vmatprep.subr.bf16.mxu0 0
    %3509 = vmatpush1.bf16.msra.mxu0 0
    %3510 = vmatprep.subr.bf16.mxu0 0
    %3511 = vmatpush1.bf16.msra.mxu0 0
    %3512 = vmatprep.mubr.bf16.mxu0 0
    %3513 = vmatmul.mubr.bf16.gmra.mrb[0].mxu0 %v3475
    %v3514 = vpop.f32.mrb[0].mxu0
    %v3515 = vadd.f32 0.0, %v3514
    %v3516 = vpop.f32.mrb[0].mxu0
    %v3517 = vpop.f32.mrb[0].mxu0
    %v3518 = vpop.f32.mrb[0].mxu0
    %3519 = vdwg.mxu0
    %v3520 = vpack.c.bf16 %v3467, %v3467
    %v3521 = vpack.c.bf16 %v3515, %v3515
    %3522 = vrot.lane.b32.xlu0 %v3074, 112
    %v3523 = vpop.permute.xlu0 %3522
    %3524 = vrot.lane.b32.xlu0 %v3074, 80
    %v3525 = vpop.permute.xlu0 %3524
    %v3527 = vsel %vm175, %v3523, 0
    %v3530 = vsel %vm175, %v3525, 0
    %3532 = vmatprep.subr.bf16.mxu0 0
    %3533 = vmatpush1.bf16.xpose.msra.mxu0 %v3530
    %3534 = vmatprep.subr.bf16.mxu0 0
    %3535 = vmatpush1.bf16.xpose.msra.mxu0 0
    %3536 = vmatprep.subr.bf16.mxu0 0
    %3537 = vmatpush1.bf16.xpose.msra.mxu0 0
    %3538 = vmatprep.subr.bf16.mxu0 0
    %3539 = vmatpush1.bf16.xpose.msra.mxu0 0
    %3540 = vmatprep.subr.bf16.mxu0 0
    %3541 = vmatpush1.bf16.xpose.msra.mxu0 0
    %3542 = vmatprep.subr.bf16.mxu0 0
    %3543 = vmatpush1.bf16.xpose.msra.mxu0 0
    %3544 = vmatprep.subr.bf16.mxu0 0
    %3545 = vmatpush1.bf16.xpose.msra.mxu0 0
    %3546 = vmatprep.subr.bf16.mxu0 0
    %3547 = vmatpush1.bf16.xpose.msra.mxu0 0
    %3548 = vmatprep.subr.bf16.mxu0 0
    %3549 = vmatpush1.bf16.xpose.msra.mxu0 0
    %3550 = vmatprep.subr.bf16.mxu0 0
    %3551 = vmatpush1.bf16.xpose.msra.mxu0 0
    %3552 = vmatprep.subr.bf16.mxu0 0
    %3553 = vmatpush1.bf16.xpose.msra.mxu0 0
    %3554 = vmatprep.subr.bf16.mxu0 0
    %3555 = vmatpush1.bf16.xpose.msra.mxu0 0
    %3556 = vmatprep.subr.bf16.mxu0 0
    %3557 = vmatpush1.bf16.xpose.msra.mxu0 0
    %3558 = vmatprep.subr.bf16.mxu0 0
    %3559 = vmatpush1.bf16.xpose.msra.mxu0 0
    %3560 = vmatprep.subr.bf16.mxu0 0
    %3561 = vmatpush1.bf16.xpose.msra.mxu0 0
    %3562 = vmatprep.subr.bf16.mxu0 0
    %3563 = vmatpush1.bf16.xpose.msra.mxu0 0
    %3564 = vmatprep.mubr.bf16.mxu0 0
    %3565 = vmatmul.mubr.bf16.gmra.mrb[0].mxu0 %v3527
    %v3566 = vpop.f32.mrb[0].mxu0
    %v3567 = vadd.f32 0.0, %v3566
    %v3568 = vpop.f32.mrb[0].mxu0
    %v3569 = vpop.f32.mrb[0].mxu0
    %v3570 = vpop.f32.mrb[0].mxu0
    %3571 = vdwg.mxu0
    %3572 = vrot.lane.b32.xlu0 %v3075, 112
    %v3573 = vpop.permute.xlu0 %3572
    %3574 = vrot.lane.b32.xlu0 %v3075, 80
    %v3575 = vpop.permute.xlu0 %3574
    %v3577 = vsel %vm175, %v3573, 0
    %v3580 = vsel %vm175, %v3575, 0
    %3582 = vmatprep.subr.bf16.mxu0 0
    %3583 = vmatpush1.bf16.xpose.msra.mxu0 %v3580
    %3584 = vmatprep.subr.bf16.mxu0 0
    %3585 = vmatpush1.bf16.xpose.msra.mxu0 0
    %3586 = vmatprep.subr.bf16.mxu0 0
    %3587 = vmatpush1.bf16.xpose.msra.mxu0 0
    %3588 = vmatprep.subr.bf16.mxu0 0
    %3589 = vmatpush1.bf16.xpose.msra.mxu0 0
    %3590 = vmatprep.subr.bf16.mxu0 0
    %3591 = vmatpush1.bf16.xpose.msra.mxu0 0
    %3592 = vmatprep.subr.bf16.mxu0 0
    %3593 = vmatpush1.bf16.xpose.msra.mxu0 0
    %3594 = vmatprep.subr.bf16.mxu0 0
    %3595 = vmatpush1.bf16.xpose.msra.mxu0 0
    %3596 = vmatprep.subr.bf16.mxu0 0
    %3597 = vmatpush1.bf16.xpose.msra.mxu0 0
    %3598 = vmatprep.subr.bf16.mxu0 0
    %3599 = vmatpush1.bf16.xpose.msra.mxu0 0
    %3600 = vmatprep.subr.bf16.mxu0 0
    %3601 = vmatpush1.bf16.xpose.msra.mxu0 0
    %3602 = vmatprep.subr.bf16.mxu0 0
    %3603 = vmatpush1.bf16.xpose.msra.mxu0 0
    %3604 = vmatprep.subr.bf16.mxu0 0
    %3605 = vmatpush1.bf16.xpose.msra.mxu0 0
    %3606 = vmatprep.subr.bf16.mxu0 0
    %3607 = vmatpush1.bf16.xpose.msra.mxu0 0
    %3608 = vmatprep.subr.bf16.mxu0 0
    %3609 = vmatpush1.bf16.xpose.msra.mxu0 0
    %3610 = vmatprep.subr.bf16.mxu0 0
    %3611 = vmatpush1.bf16.xpose.msra.mxu0 0
    %3612 = vmatprep.subr.bf16.mxu0 0
    %3613 = vmatpush1.bf16.xpose.msra.mxu0 0
    %3614 = vmatprep.mubr.bf16.mxu0 0
    %3615 = vmatmul.mubr.bf16.gmra.mrb[0].mxu0 %v3577
    %v3616 = vpop.f32.mrb[0].mxu0
    %v3617 = vadd.f32 0.0, %v3616
    %v3618 = vpop.f32.mrb[0].mxu0
    %v3619 = vpop.f32.mrb[0].mxu0
    %v3620 = vpop.f32.mrb[0].mxu0
    %3621 = vdwg.mxu0
    %v3622 = vmul.f32 %v3567, 0.35355338
    %v3623 = vmul.f32 %v3617, 0.35355338
    %v3624 = vsel %vm175, %v3622, -inf
    %3625 = vmax.xlane.f32.xlu0 %v3624
    %v3626 = vpop.xlane.xlu0 %3625
    %v3627 = vsel %vm175, %v3623, -inf
    %3628 = vmax.xlane.f32.xlu0 %v3627
    %v3629 = vpop.xlane.xlu0 %3628
    %v3630 = vsub.f32 %v3622, %v3626
    %v3631 = vsub.f32 %v3623, %v3629
    %v3632 = vmul.f32 %v3630, 1.442695
    %v3633 = vpow.pop %v3632
    %v3634 = vmul.f32 %v3631, 1.442695
    %v3635 = vpow.pop %v3634
    %v3636 = vsel %vm175, %v3633, 0.0
    %3637 = vadd.xlane.f32.xlu0 %v3636
    %v3638 = vpop.xlane.xlu0 %3637
    %v3639 = vsel %vm175, %v3635, 0.0
    %3640 = vadd.xlane.f32.xlu0 %v3639
    %v3641 = vpop.xlane.xlu0 %3640
    %v3642 = vrcp.pop %v3638
    %v3643 = vmul.f32 %v3633, %v3642
    %v3644 = vrcp.pop %v3641
    %v3645 = vmul.f32 %v3635, %v3644
    %v3646 = vpack.c.bf16 %v3643, %v3643
    %v3647 = vpack.c.bf16 %v3645, %v3645
    %3648 = vrot.lane.b32.xlu0 %v3074, 48
    %v3649 = vpop.permute.xlu0 %3648
    %v3651 = vsel %vm175, %v3646, 0
    %v3654 = vsel %vm302, %v3649, 0
    %3656 = vmatprep.subr.bf16.mxu0 0
    %3657 = vmatpush1.bf16.msra.mxu0 %v3654
    %3658 = vmatprep.subr.bf16.mxu0 0
    %3659 = vmatpush1.bf16.msra.mxu0 0
    %3660 = vmatprep.subr.bf16.mxu0 0
    %3661 = vmatpush1.bf16.msra.mxu0 0
    %3662 = vmatprep.subr.bf16.mxu0 0
    %3663 = vmatpush1.bf16.msra.mxu0 0
    %3664 = vmatprep.subr.bf16.mxu0 0
    %3665 = vmatpush1.bf16.msra.mxu0 0
    %3666 = vmatprep.subr.bf16.mxu0 0
    %3667 = vmatpush1.bf16.msra.mxu0 0
    %3668 = vmatprep.subr.bf16.mxu0 0
    %3669 = vmatpush1.bf16.msra.mxu0 0
    %3670 = vmatprep.subr.bf16.mxu0 0
    %3671 = vmatpush1.bf16.msra.mxu0 0
    %3672 = vmatprep.subr.bf16.mxu0 0
    %3673 = vmatpush1.bf16.msra.mxu0 0
    %3674 = vmatprep.subr.bf16.mxu0 0
    %3675 = vmatpush1.bf16.msra.mxu0 0
    %3676 = vmatprep.subr.bf16.mxu0 0
    %3677 = vmatpush1.bf16.msra.mxu0 0
    %3678 = vmatprep.subr.bf16.mxu0 0
    %3679 = vmatpush1.bf16.msra.mxu0 0
    %3680 = vmatprep.subr.bf16.mxu0 0
    %3681 = vmatpush1.bf16.msra.mxu0 0
    %3682 = vmatprep.subr.bf16.mxu0 0
    %3683 = vmatpush1.bf16.msra.mxu0 0
    %3684 = vmatprep.subr.bf16.mxu0 0
    %3685 = vmatpush1.bf16.msra.mxu0 0
    %3686 = vmatprep.subr.bf16.mxu0 0
    %3687 = vmatpush1.bf16.msra.mxu0 0
    %3688 = vmatprep.mubr.bf16.mxu0 0
    %3689 = vmatmul.mubr.bf16.gmra.mrb[0].mxu0 %v3651
    %v3690 = vpop.f32.mrb[0].mxu0
    %v3691 = vadd.f32 0.0, %v3690
    %v3692 = vpop.f32.mrb[0].mxu0
    %v3693 = vpop.f32.mrb[0].mxu0
    %v3694 = vpop.f32.mrb[0].mxu0
    %3695 = vdwg.mxu0
    %3696 = vrot.lane.b32.xlu0 %v3075, 48
    %v3697 = vpop.permute.xlu0 %3696
    %v3699 = vsel %vm175, %v3647, 0
    %v3702 = vsel %vm302, %v3697, 0
    %3704 = vmatprep.subr.bf16.mxu0 0
    %3705 = vmatpush1.bf16.msra.mxu0 %v3702
    %3706 = vmatprep.subr.bf16.mxu0 0
    %3707 = vmatpush1.bf16.msra.mxu0 0
    %3708 = vmatprep.subr.bf16.mxu0 0
    %3709 = vmatpush1.bf16.msra.mxu0 0
    %3710 = vmatprep.subr.bf16.mxu0 0
    %3711 = vmatpush1.bf16.msra.mxu0 0
    %3712 = vmatprep.subr.bf16.mxu0 0
    %3713 = vmatpush1.bf16.msra.mxu0 0
    %3714 = vmatprep.subr.bf16.mxu0 0
    %3715 = vmatpush1.bf16.msra.mxu0 0
    %3716 = vmatprep.subr.bf16.mxu0 0
    %3717 = vmatpush1.bf16.msra.mxu0 0
    %3718 = vmatprep.subr.bf16.mxu0 0
    %3719 = vmatpush1.bf16.msra.mxu0 0
    %3720 = vmatprep.subr.bf16.mxu0 0
    %3721 = vmatpush1.bf16.msra.mxu0 0
    %3722 = vmatprep.subr.bf16.mxu0 0
    %3723 = vmatpush1.bf16.msra.mxu0 0
    %3724 = vmatprep.subr.bf16.mxu0 0
    %3725 = vmatpush1.bf16.msra.mxu0 0
    %3726 = vmatprep.subr.bf16.mxu0 0
    %3727 = vmatpush1.bf16.msra.mxu0 0
    %3728 = vmatprep.subr.bf16.mxu0 0
    %3729 = vmatpush1.bf16.msra.mxu0 0
    %3730 = vmatprep.subr.bf16.mxu0 0
    %3731 = vmatpush1.bf16.msra.mxu0 0
    %3732 = vmatprep.subr.bf16.mxu0 0
    %3733 = vmatpush1.bf16.msra.mxu0 0
    %3734 = vmatprep.subr.bf16.mxu0 0
    %3735 = vmatpush1.bf16.msra.mxu0 0
    %3736 = vmatprep.mubr.bf16.mxu0 0
    %3737 = vmatmul.mubr.bf16.gmra.mrb[0].mxu0 %v3699
    %v3738 = vpop.f32.mrb[0].mxu0
    %v3739 = vadd.f32 0.0, %v3738
    %v3740 = vpop.f32.mrb[0].mxu0
    %v3741 = vpop.f32.mrb[0].mxu0
    %v3742 = vpop.f32.mrb[0].mxu0
    %3743 = vdwg.mxu0
    %v3744 = vpack.c.bf16 %v3691, %v3691
    %v3745 = vpack.c.bf16 %v3739, %v3739
    %3746 = vrot.lane.b32.xlu0 %v3074, 104
    %v3747 = vpop.permute.xlu0 %3746
    %3748 = vrot.lane.b32.xlu0 %v3074, 72
    %v3749 = vpop.permute.xlu0 %3748
    %v3751 = vsel %vm175, %v3747, 0
    %v3754 = vsel %vm175, %v3749, 0
    %3756 = vmatprep.subr.bf16.mxu0 0
    %3757 = vmatpush1.bf16.xpose.msra.mxu0 %v3754
    %3758 = vmatprep.subr.bf16.mxu0 0
    %3759 = vmatpush1.bf16.xpose.msra.mxu0 0
    %3760 = vmatprep.subr.bf16.mxu0 0
    %3761 = vmatpush1.bf16.xpose.msra.mxu0 0
    %3762 = vmatprep.subr.bf16.mxu0 0
    %3763 = vmatpush1.bf16.xpose.msra.mxu0 0
    %3764 = vmatprep.subr.bf16.mxu0 0
    %3765 = vmatpush1.bf16.xpose.msra.mxu0 0
    %3766 = vmatprep.subr.bf16.mxu0 0
    %3767 = vmatpush1.bf16.xpose.msra.mxu0 0
    %3768 = vmatprep.subr.bf16.mxu0 0
    %3769 = vmatpush1.bf16.xpose.msra.mxu0 0
    %3770 = vmatprep.subr.bf16.mxu0 0
    %3771 = vmatpush1.bf16.xpose.msra.mxu0 0
    %3772 = vmatprep.subr.bf16.mxu0 0
    %3773 = vmatpush1.bf16.xpose.msra.mxu0 0
    %3774 = vmatprep.subr.bf16.mxu0 0
    %3775 = vmatpush1.bf16.xpose.msra.mxu0 0
    %3776 = vmatprep.subr.bf16.mxu0 0
    %3777 = vmatpush1.bf16.xpose.msra.mxu0 0
    %3778 = vmatprep.subr.bf16.mxu0 0
    %3779 = vmatpush1.bf16.xpose.msra.mxu0 0
    %3780 = vmatprep.subr.bf16.mxu0 0
    %3781 = vmatpush1.bf16.xpose.msra.mxu0 0
    %3782 = vmatprep.subr.bf16.mxu0 0
    %3783 = vmatpush1.bf16.xpose.msra.mxu0 0
    %3784 = vmatprep.subr.bf16.mxu0 0
    %3785 = vmatpush1.bf16.xpose.msra.mxu0 0
    %3786 = vmatprep.subr.bf16.mxu0 0
    %3787 = vmatpush1.bf16.xpose.msra.mxu0 0
    %3788 = vmatprep.mubr.bf16.mxu0 0
    %3789 = vmatmul.mubr.bf16.gmra.mrb[0].mxu0 %v3751
    %v3790 = vpop.f32.mrb[0].mxu0
    %v3791 = vadd.f32 0.0, %v3790
    %v3792 = vpop.f32.mrb[0].mxu0
    %v3793 = vpop.f32.mrb[0].mxu0
    %v3794 = vpop.f32.mrb[0].mxu0
    %3795 = vdwg.mxu0
    %3796 = vrot.lane.b32.xlu0 %v3075, 104
    %v3797 = vpop.permute.xlu0 %3796
    %3798 = vrot.lane.b32.xlu0 %v3075, 72
    %v3799 = vpop.permute.xlu0 %3798
    %v3801 = vsel %vm175, %v3797, 0
    %v3804 = vsel %vm175, %v3799, 0
    %3806 = vmatprep.subr.bf16.mxu0 0
    %3807 = vmatpush1.bf16.xpose.msra.mxu0 %v3804
    %3808 = vmatprep.subr.bf16.mxu0 0
    %3809 = vmatpush1.bf16.xpose.msra.mxu0 0
    %3810 = vmatprep.subr.bf16.mxu0 0
    %3811 = vmatpush1.bf16.xpose.msra.mxu0 0
    %3812 = vmatprep.subr.bf16.mxu0 0
    %3813 = vmatpush1.bf16.xpose.msra.mxu0 0
    %3814 = vmatprep.subr.bf16.mxu0 0
    %3815 = vmatpush1.bf16.xpose.msra.mxu0 0
    %3816 = vmatprep.subr.bf16.mxu0 0
    %3817 = vmatpush1.bf16.xpose.msra.mxu0 0
    %3818 = vmatprep.subr.bf16.mxu0 0
    %3819 = vmatpush1.bf16.xpose.msra.mxu0 0
    %3820 = vmatprep.subr.bf16.mxu0 0
    %3821 = vmatpush1.bf16.xpose.msra.mxu0 0
    %3822 = vmatprep.subr.bf16.mxu0 0
    %3823 = vmatpush1.bf16.xpose.msra.mxu0 0
    %3824 = vmatprep.subr.bf16.mxu0 0
    %3825 = vmatpush1.bf16.xpose.msra.mxu0 0
    %3826 = vmatprep.subr.bf16.mxu0 0
    %3827 = vmatpush1.bf16.xpose.msra.mxu0 0
    %3828 = vmatprep.subr.bf16.mxu0 0
    %3829 = vmatpush1.bf16.xpose.msra.mxu0 0
    %3830 = vmatprep.subr.bf16.mxu0 0
    %3831 = vmatpush1.bf16.xpose.msra.mxu0 0
    %3832 = vmatprep.subr.bf16.mxu0 0
    %3833 = vmatpush1.bf16.xpose.msra.mxu0 0
    %3834 = vmatprep.subr.bf16.mxu0 0
    %3835 = vmatpush1.bf16.xpose.msra.mxu0 0
    %3836 = vmatprep.subr.bf16.mxu0 0
    %3837 = vmatpush1.bf16.xpose.msra.mxu0 0
    %3838 = vmatprep.mubr.bf16.mxu0 0
    %3839 = vmatmul.mubr.bf16.gmra.mrb[0].mxu0 %v3801
    %v3840 = vpop.f32.mrb[0].mxu0
    %v3841 = vadd.f32 0.0, %v3840
    %v3842 = vpop.f32.mrb[0].mxu0
    %v3843 = vpop.f32.mrb[0].mxu0
    %v3844 = vpop.f32.mrb[0].mxu0
    %3845 = vdwg.mxu0
    %v3846 = vmul.f32 %v3791, 0.35355338
    %v3847 = vmul.f32 %v3841, 0.35355338
    %v3848 = vsel %vm175, %v3846, -inf
    %3849 = vmax.xlane.f32.xlu0 %v3848
    %v3850 = vpop.xlane.xlu0 %3849
    %v3851 = vsel %vm175, %v3847, -inf
    %3852 = vmax.xlane.f32.xlu0 %v3851
    %v3853 = vpop.xlane.xlu0 %3852
    %v3854 = vsub.f32 %v3846, %v3850
    %v3855 = vsub.f32 %v3847, %v3853
    %v3856 = vmul.f32 %v3854, 1.442695
    %v3857 = vpow.pop %v3856
    %v3858 = vmul.f32 %v3855, 1.442695
    %v3859 = vpow.pop %v3858
    %v3860 = vsel %vm175, %v3857, 0.0
    %3861 = vadd.xlane.f32.xlu0 %v3860
    %v3862 = vpop.xlane.xlu0 %3861
    %v3863 = vsel %vm175, %v3859, 0.0
    %3864 = vadd.xlane.f32.xlu0 %v3863
    %v3865 = vpop.xlane.xlu0 %3864
    %v3866 = vrcp.pop %v3862
    %v3867 = vmul.f32 %v3857, %v3866
    %v3868 = vrcp.pop %v3865
    %v3869 = vmul.f32 %v3859, %v3868
    %v3870 = vpack.c.bf16 %v3867, %v3867
    %v3871 = vpack.c.bf16 %v3869, %v3869
    %3872 = vrot.lane.b32.xlu0 %v3074, 40
    %v3873 = vpop.permute.xlu0 %3872
    %v3875 = vsel %vm175, %v3870, 0
    %v3878 = vsel %vm302, %v3873, 0
    %3880 = vmatprep.subr.bf16.mxu0 0
    %3881 = vmatpush1.bf16.msra.mxu0 %v3878
    %3882 = vmatprep.subr.bf16.mxu0 0
    %3883 = vmatpush1.bf16.msra.mxu0 0
    %3884 = vmatprep.subr.bf16.mxu0 0
    %3885 = vmatpush1.bf16.msra.mxu0 0
    %3886 = vmatprep.subr.bf16.mxu0 0
    %3887 = vmatpush1.bf16.msra.mxu0 0
    %3888 = vmatprep.subr.bf16.mxu0 0
    %3889 = vmatpush1.bf16.msra.mxu0 0
    %3890 = vmatprep.subr.bf16.mxu0 0
    %3891 = vmatpush1.bf16.msra.mxu0 0
    %3892 = vmatprep.subr.bf16.mxu0 0
    %3893 = vmatpush1.bf16.msra.mxu0 0
    %3894 = vmatprep.subr.bf16.mxu0 0
    %3895 = vmatpush1.bf16.msra.mxu0 0
    %3896 = vmatprep.subr.bf16.mxu0 0
    %3897 = vmatpush1.bf16.msra.mxu0 0
    %3898 = vmatprep.subr.bf16.mxu0 0
    %3899 = vmatpush1.bf16.msra.mxu0 0
    %3900 = vmatprep.subr.bf16.mxu0 0
    %3901 = vmatpush1.bf16.msra.mxu0 0
    %3902 = vmatprep.subr.bf16.mxu0 0
    %3903 = vmatpush1.bf16.msra.mxu0 0
    %3904 = vmatprep.subr.bf16.mxu0 0
    %3905 = vmatpush1.bf16.msra.mxu0 0
    %3906 = vmatprep.subr.bf16.mxu0 0
    %3907 = vmatpush1.bf16.msra.mxu0 0
    %3908 = vmatprep.subr.bf16.mxu0 0
    %3909 = vmatpush1.bf16.msra.mxu0 0
    %3910 = vmatprep.subr.bf16.mxu0 0
    %3911 = vmatpush1.bf16.msra.mxu0 0
    %3912 = vmatprep.mubr.bf16.mxu0 0
    %3913 = vmatmul.mubr.bf16.gmra.mrb[0].mxu0 %v3875
    %v3914 = vpop.f32.mrb[0].mxu0
    %v3915 = vadd.f32 0.0, %v3914
    %v3916 = vpop.f32.mrb[0].mxu0
    %v3917 = vpop.f32.mrb[0].mxu0
    %v3918 = vpop.f32.mrb[0].mxu0
    %3919 = vdwg.mxu0
    %3920 = vrot.lane.b32.xlu0 %v3075, 40
    %v3921 = vpop.permute.xlu0 %3920
    %v3923 = vsel %vm175, %v3871, 0
    %v3926 = vsel %vm302, %v3921, 0
    %3928 = vmatprep.subr.bf16.mxu0 0
    %3929 = vmatpush1.bf16.msra.mxu0 %v3926
    %3930 = vmatprep.subr.bf16.mxu0 0
    %3931 = vmatpush1.bf16.msra.mxu0 0
    %3932 = vmatprep.subr.bf16.mxu0 0
    %3933 = vmatpush1.bf16.msra.mxu0 0
    %3934 = vmatprep.subr.bf16.mxu0 0
    %3935 = vmatpush1.bf16.msra.mxu0 0
    %3936 = vmatprep.subr.bf16.mxu0 0
    %3937 = vmatpush1.bf16.msra.mxu0 0
    %3938 = vmatprep.subr.bf16.mxu0 0
    %3939 = vmatpush1.bf16.msra.mxu0 0
    %3940 = vmatprep.subr.bf16.mxu0 0
    %3941 = vmatpush1.bf16.msra.mxu0 0
    %3942 = vmatprep.subr.bf16.mxu0 0
    %3943 = vmatpush1.bf16.msra.mxu0 0
    %3944 = vmatprep.subr.bf16.mxu0 0
    %3945 = vmatpush1.bf16.msra.mxu0 0
    %3946 = vmatprep.subr.bf16.mxu0 0
    %3947 = vmatpush1.bf16.msra.mxu0 0
    %3948 = vmatprep.subr.bf16.mxu0 0
    %3949 = vmatpush1.bf16.msra.mxu0 0
    %3950 = vmatprep.subr.bf16.mxu0 0
    %3951 = vmatpush1.bf16.msra.mxu0 0
    %3952 = vmatprep.subr.bf16.mxu0 0
    %3953 = vmatpush1.bf16.msra.mxu0 0
    %3954 = vmatprep.subr.bf16.mxu0 0
    %3955 = vmatpush1.bf16.msra.mxu0 0
    %3956 = vmatprep.subr.bf16.mxu0 0
    %3957 = vmatpush1.bf16.msra.mxu0 0
    %3958 = vmatprep.subr.bf16.mxu0 0
    %3959 = vmatpush1.bf16.msra.mxu0 0
    %3960 = vmatprep.mubr.bf16.mxu0 0
    %3961 = vmatmul.mubr.bf16.gmra.mrb[0].mxu0 %v3923
    %v3962 = vpop.f32.mrb[0].mxu0
    %v3963 = vadd.f32 0.0, %v3962
    %v3964 = vpop.f32.mrb[0].mxu0
    %v3965 = vpop.f32.mrb[0].mxu0
    %v3966 = vpop.f32.mrb[0].mxu0
    %3967 = vdwg.mxu0
    %v3968 = vpack.c.bf16 %v3915, %v3915
    %v3969 = vpack.c.bf16 %v3963, %v3963
    %3972 = vrot.lane.b32.xlu0 %v3520, 8
    %v3973 = vpop.permute.xlu0 %3972
    %3974 = vrot.lane.b32.xlu0 %v3521, 8
    %v3975 = vpop.permute.xlu0 %3974
    %3978 = vrot.lane.b32.xlu0 %v3744, 16
    %v3979 = vpop.permute.xlu0 %3978
    %3980 = vrot.lane.b32.xlu0 %v3745, 16
    %v3981 = vpop.permute.xlu0 %3980
    %3984 = vrot.lane.b32.xlu0 %v3968, 24
    %v3985 = vpop.permute.xlu0 %3984
    %3986 = vrot.lane.b32.xlu0 %v3969, 24
    %v3987 = vpop.permute.xlu0 %3986
    %v3990 = vsel %vm175, %v3296, %v3973
    %v3993 = vsel %vm175, %v3297, %v3975
    %v3995 = vsel %vm1092, %v3990, %v3979
    %v3997 = vsel %vm1092, %v3993, %v3981
    %v3999 = vsel %vm1097, %v3995, %v3985
    %v4001 = vsel %vm1097, %v3997, %v3987
    %s4002 = scalar_lea.vmem %s3, 32
    %v4003 = vld [vmem:[%s4002] sm:$0xf]
    %v4004 = vld [vmem:[%s4002 + $0x4] sm:$0xf]
    %v4005 = vld [vmem:[%s4002 + $0x8] sm:$0xf]
    %v4006 = vld [vmem:[%s4002 + $0xc] sm:$0xf]
    %v4009 = vunpack.c.l.b16 %v3999
    %v4010 = vunpack.c.l.b16 %v4001
    %v4011 = vpack.c.b16 %v4010, %v4009
    %v4016 = vunpack.c.l.b16 %v4003
    %v4017 = vunpack.c.l.b16 %v4004
    %v4018 = vunpack.c.l.b16 %v4005
    %v4019 = vunpack.c.l.b16 %v4006
    %v4020 = vpack.c.b16 %v4017, %v4016
    %v4021 = vpack.c.b16 %v4019, %v4018
    %v4025 = vsel %vm69, %v4011, 0
    %4027 = vmatprep.subr.bf16.mxu0 0
    %4028 = vmatpush1.bf16.msra.mxu0 %v4020
    %4029 = vmatprep.subr.bf16.mxu0 0
    %4030 = vmatpush1.bf16.msra.mxu0 %v4021
    %4031 = vmatprep.subr.bf16.mxu0 0
    %4032 = vmatpush1.bf16.msra.mxu0 0
    %4033 = vmatprep.subr.bf16.mxu0 0
    %4034 = vmatpush1.bf16.msra.mxu0 0
    %4035 = vmatprep.subr.bf16.mxu0 0
    %4036 = vmatpush1.bf16.msra.mxu0 0
    %4037 = vmatprep.subr.bf16.mxu0 0
    %4038 = vmatpush1.bf16.msra.mxu0 0
    %4039 = vmatprep.subr.bf16.mxu0 0
    %4040 = vmatpush1.bf16.msra.mxu0 0
    %4041 = vmatprep.subr.bf16.mxu0 0
    %4042 = vmatpush1.bf16.msra.mxu0 0
    %4043 = vmatprep.subr.bf16.mxu0 0
    %4044 = vmatpush1.bf16.msra.mxu0 0
    %4045 = vmatprep.subr.bf16.mxu0 0
    %4046 = vmatpush1.bf16.msra.mxu0 0
    %4047 = vmatprep.subr.bf16.mxu0 0
    %4048 = vmatpush1.bf16.msra.mxu0 0
    %4049 = vmatprep.subr.bf16.mxu0 0
    %4050 = vmatpush1.bf16.msra.mxu0 0
    %4051 = vmatprep.subr.bf16.mxu0 0
    %4052 = vmatpush1.bf16.msra.mxu0 0
    %4053 = vmatprep.subr.bf16.mxu0 0
    %4054 = vmatpush1.bf16.msra.mxu0 0
    %4055 = vmatprep.subr.bf16.mxu0 0
    %4056 = vmatpush1.bf16.msra.mxu0 0
    %4057 = vmatprep.subr.bf16.mxu0 0
    %4058 = vmatpush1.bf16.msra.mxu0 0
    %4059 = vmatprep.mubr.bf16.mxu0 0
    %4060 = vmatmul.mubr.bf16.gmra.mrb[0].mxu0 %v4025
    %v4061 = vpop.f32.mrb[0].mxu0
    %v4062 = vadd.f32 0.0, %v4061
    %v4063 = vpop.f32.mrb[0].mxu0
    %v4064 = vpop.f32.mrb[0].mxu0
    %v4065 = vadd.f32 0.0, %v4064
    %v4066 = vpop.f32.mrb[0].mxu0
    %4067 = vdwg.mxu0
    %v4068 = vadd.f32 %v2884, %v4062
    %v4069 = vadd.f32 %v2971, %v4065
    %v4070 = vlaneseq
    %v4071 = vshrl.u32 %v4070, 7
    %v4072 = vsub.s32 2, %v4071
    %v4073 = vrot.slane %v2973, %v4072
    %v4074 = vadd.f32 %v4068, %v4073
    %v4075 = vadd.f32 %v4069, %v4073
    %v4076 = vsel %vm69, %v4074, 0.0
    %4077 = vadd.xlane.f32.xlu0 %v4076
    %v4078 = vpop.xlane.xlu0 %4077
    %v4079 = vsel %vm69, %v4075, 0.0
    %4080 = vadd.xlane.f32.xlu0 %v4079
    %v4081 = vpop.xlane.xlu0 %4080
    %v4082 = vmul.f32 %v4078, %v76
    %v4083 = vmul.f32 %v4081, %v76
    %v4084 = vsub.f32 %v4074, %v4082
    %v4085 = vsub.f32 %v4075, %v4083
    %v4086 = vmul.f32 %v4084, %v4084
    %v4087 = vmul.f32 %v4085, %v4085
    %v4088 = vsel %vm69, %v4086, 0.0
    %4089 = vadd.xlane.f32.xlu0 %v4088
    %v4090 = vpop.xlane.xlu0 %4089
    %v4091 = vsel %vm69, %v4087, 0.0
    %4092 = vadd.xlane.f32.xlu0 %v4091
    %v4093 = vpop.xlane.xlu0 %4092
    %v4094 = vmul.f32 %v4090, %v76
    %v4095 = vmul.f32 %v4093, %v76
    %v4096 = vadd.f32 %v4094, 1e-05
    %v4097 = vadd.f32 %v4095, 1e-05
    %v4098 = vrsqrt.pop %v4096
    %v4099 = vrsqrt.pop %v4097
    %v4100 = vmul.f32 %v4084, %v4098
    %v4101 = vmul.f32 %v4085, %v4099
    %v4102 = vlaneseq
    %v4103 = vshrl.u32 %v4102, 7
    %v4104 = vsub.s32 3, %v4103
    %v4105 = vrot.slane %v2973, %v4104
    %v4106 = vmul.f32 %v4100, %v4105
    %v4107 = vmul.f32 %v4101, %v4105
    %v4108 = vlaneseq
    %v4109 = vshrl.u32 %v4108, 7
    %v4110 = vsub.s32 4, %v4109
    %v4111 = vrot.slane %v2973, %v4110
    %v4112 = vadd.f32 %v4106, %v4111
    %v4113 = vadd.f32 %v4107, %v4111
    %v4114 = vpack.c.bf16 %v4113, %v4112
    %s4115 = scalar_lea.vmem %s4, 32
    %v4116 = vld [vmem:[%s4115] sm:$0xf]
    %v4117 = vld [vmem:[%s4115 + $0x4] sm:$0xf]
    %v4118 = vld [vmem:[%s4115 + $0x8] sm:$0xf]
    %v4119 = vld [vmem:[%s4115 + $0xc] sm:$0xf]
    %s4120 = scalar_lea.vmem %s5, 2
    %v4121 = vld [vmem:[%s4120] sm:$0x1]
    %v4123 = vlaneseq
    %v4124 = vshrl.u32 %v4123, 7
    %v4125 = vsub.s32 0, %v4124
    %v4126 = vrot.slane %v4121, %v4125
    %v4132 = vunpack.c.l.b16 %v4116
    %v4133 = vunpack.c.l.b16 %v4117
    %v4134 = vunpack.c.l.b16 %v4118
    %v4135 = vunpack.c.l.b16 %v4119
    %v4136 = vpack.c.b16 %v4133, %v4132
    %v4137 = vpack.c.b16 %v4135, %v4134
    %v4141 = vsel %vm69, %v4114, 0
    %4143 = vmatprep.subr.bf16.mxu0 0
    %4144 = vmatpush1.bf16.msra.mxu0 %v4136
    %4145 = vmatprep.subr.bf16.mxu0 0
    %4146 = vmatpush1.bf16.msra.mxu0 %v4137
    %4147 = vmatprep.subr.bf16.mxu0 0
    %4148 = vmatpush1.bf16.msra.mxu0 0
    %4149 = vmatprep.subr.bf16.mxu0 0
    %4150 = vmatpush1.bf16.msra.mxu0 0
    %4151 = vmatprep.subr.bf16.mxu0 0
    %4152 = vmatpush1.bf16.msra.mxu0 0
    %4153 = vmatprep.subr.bf16.mxu0 0
    %4154 = vmatpush1.bf16.msra.mxu0 0
    %4155 = vmatprep.subr.bf16.mxu0 0
    %4156 = vmatpush1.bf16.msra.mxu0 0
    %4157 = vmatprep.subr.bf16.mxu0 0
    %4158 = vmatpush1.bf16.msra.mxu0 0
    %4159 = vmatprep.subr.bf16.mxu0 0
    %4160 = vmatpush1.bf16.msra.mxu0 0
    %4161 = vmatprep.subr.bf16.mxu0 0
    %4162 = vmatpush1.bf16.msra.mxu0 0
    %4163 = vmatprep.subr.bf16.mxu0 0
    %4164 = vmatpush1.bf16.msra.mxu0 0
    %4165 = vmatprep.subr.bf16.mxu0 0
    %4166 = vmatpush1.bf16.msra.mxu0 0
    %4167 = vmatprep.subr.bf16.mxu0 0
    %4168 = vmatpush1.bf16.msra.mxu0 0
    %4169 = vmatprep.subr.bf16.mxu0 0
    %4170 = vmatpush1.bf16.msra.mxu0 0
    %4171 = vmatprep.subr.bf16.mxu0 0
    %4172 = vmatpush1.bf16.msra.mxu0 0
    %4173 = vmatprep.subr.bf16.mxu0 0
    %4174 = vmatpush1.bf16.msra.mxu0 0
    %4175 = vmatprep.mubr.bf16.mxu0 0
    %4176 = vmatmul.mubr.bf16.gmra.mrb[0].mxu0 %v4141
    %v4177 = vpop.f32.mrb[0].mxu0
    %v4178 = vadd.f32 %v4126, %v4177
    %v4179 = vpop.f32.mrb[0].mxu0
    %v4180 = vpop.f32.mrb[0].mxu0
    %v4181 = vadd.f32 %v4126, %v4180
    %v4182 = vpop.f32.mrb[0].mxu0
    %4183 = vdwg.mxu0
    %v4184 = vmul.f32 %v4178, 0.5
    %v4185 = vmul.f32 %v4181, 0.5
    %v4186 = vmul.f32 %v4178, 0.70710677
    %v4187 = vmul.f32 %v4181, 0.70710677
    %vm4188 = vcmp.ge.f32.partialorder %v4186, 0.0
    %vm4189 = vcmp.ge.f32.partialorder %v4187, 0.0
    %v4190 = vsel %vm4188, 1.0, -1.0
    %v4191 = vsel %vm4189, 1.0, -1.0
    %v4192 = vand.u32 2147483647, %v4186
    %v4193 = vand.u32 2147483647, %v4187
    %v4194 = vmul.f32 %v4192, 0.3275911
    %v4195 = vmul.f32 %v4193, 0.3275911
    %v4196 = vadd.f32 %v4194, 1.0
    %v4197 = vadd.f32 %v4195, 1.0
    %v4198 = vrcp.pop %v4196
    %v4199 = vmul.f32 1.0, %v4198
    %v4200 = vrcp.pop %v4197
    %v4201 = vmul.f32 1.0, %v4200
    %v4202 = vmul.f32 %v4199, 1.0614054
    %v4203 = vmul.f32 %v4201, 1.0614054
    %v4204 = vadd.f32 %v4202, -1.4531521
    %v4205 = vadd.f32 %v4203, -1.4531521
    %v4206 = vmul.f32 %v4204, %v4199
    %v4207 = vmul.f32 %v4205, %v4201
    %v4208 = vadd.f32 %v4206, 1.4214138
    %v4209 = vadd.f32 %v4207, 1.4214138
    %v4210 = vmul.f32 %v4208, %v4199
    %v4211 = vmul.f32 %v4209, %v4201
    %v4212 = vadd.f32 %v4210, -0.28449672
    %v4213 = vadd.f32 %v4211, -0.28449672
    %v4214 = vmul.f32 %v4212, %v4199
    %v4215 = vmul.f32 %v4213, %v4201
    %v4216 = vadd.f32 %v4214, 0.2548296
    %v4217 = vadd.f32 %v4215, 0.2548296
    %v4218 = vmul.f32 %v4216, %v4199
    %v4219 = vmul.f32 %v4217, %v4201
    %v4220 = vsub.f32 0.0, %v4192
    %v4221 = vsub.f32 0.0, %v4193
    %v4222 = vmul.f32 %v4220, %v4192
    %v4223 = vmul.f32 %v4221, %v4193
    %v4224 = vmul.f32 %v4222, 1.442695
    %v4225 = vpow.pop %v4224
    %v4226 = vmul.f32 %v4223, 1.442695
    %v4227 = vpow.pop %v4226
    %v4228 = vmul.f32 %v4218, %v4225
    %v4229 = vmul.f32 %v4219, %v4227
    %v4230 = vsub.f32 1.0, %v4228
    %v4231 = vsub.f32 1.0, %v4229
    %v4232 = vmul.f32 %v4190, %v4230
    %v4233 = vmul.f32 %v4191, %v4231
    %v4234 = vadd.f32 %v4232, 1.0
    %v4235 = vadd.f32 %v4233, 1.0
    %v4236 = vmul.f32 %v4184, %v4234
    %v4237 = vmul.f32 %v4185, %v4235
    %v4238 = vpack.c.bf16 %v4237, %v4236
    %s4239 = scalar_lea.vmem %s6, 64
    %v4240 = vld [vmem:[%s4239] sm:$0xf]
    %v4241 = vld [vmem:[%s4239 + $0x4] sm:$0xf]
    %v4242 = vld [vmem:[%s4239 + $0x8] sm:$0xf]
    %v4243 = vld [vmem:[%s4239 + $0xc] sm:$0xf]
    %v4244 = vld [vmem:[%s4239 + $0x10] sm:$0xf]
    %v4245 = vld [vmem:[%s4239 + $0x14] sm:$0xf]
    %v4246 = vld [vmem:[%s4239 + $0x18] sm:$0xf]
    %v4247 = vld [vmem:[%s4239 + $0x1c] sm:$0xf]
    %v4256 = vunpack.c.l.b16 %v4240
    %v4257 = vunpack.c.l.b16 %v4241
    %v4258 = vunpack.c.l.b16 %v4242
    %v4259 = vunpack.c.l.b16 %v4243
    %v4260 = vunpack.c.l.b16 %v4244
    %v4261 = vunpack.c.l.b16 %v4245
    %v4262 = vunpack.c.l.b16 %v4246
    %v4263 = vunpack.c.l.b16 %v4247
    %v4264 = vpack.c.b16 %v4257, %v4256
    %v4265 = vpack.c.b16 %v4259, %v4258
    %v4266 = vpack.c.b16 %v4261, %v4260
    %v4267 = vpack.c.b16 %v4263, %v4262
    %v4273 = vsel %vm1368, %v4238, 0
    %4275 = vmatprep.subr.bf16.mxu0 0
    %4276 = vmatpush1.bf16.msra.mxu0 %v4264
    %4277 = vmatprep.subr.bf16.mxu0 0
    %4278 = vmatpush1.bf16.msra.mxu0 %v4265
    %4279 = vmatprep.subr.bf16.mxu0 0
    %4280 = vmatpush1.bf16.msra.mxu0 %v4266
    %4281 = vmatprep.subr.bf16.mxu0 0
    %4282 = vmatpush1.bf16.msra.mxu0 %v4267
    %4283 = vmatprep.subr.bf16.mxu0 0
    %4284 = vmatpush1.bf16.msra.mxu0 0
    %4285 = vmatprep.subr.bf16.mxu0 0
    %4286 = vmatpush1.bf16.msra.mxu0 0
    %4287 = vmatprep.subr.bf16.mxu0 0
    %4288 = vmatpush1.bf16.msra.mxu0 0
    %4289 = vmatprep.subr.bf16.mxu0 0
    %4290 = vmatpush1.bf16.msra.mxu0 0
    %4291 = vmatprep.subr.bf16.mxu0 0
    %4292 = vmatpush1.bf16.msra.mxu0 0
    %4293 = vmatprep.subr.bf16.mxu0 0
    %4294 = vmatpush1.bf16.msra.mxu0 0
    %4295 = vmatprep.subr.bf16.mxu0 0
    %4296 = vmatpush1.bf16.msra.mxu0 0
    %4297 = vmatprep.subr.bf16.mxu0 0
    %4298 = vmatpush1.bf16.msra.mxu0 0
    %4299 = vmatprep.subr.bf16.mxu0 0
    %4300 = vmatpush1.bf16.msra.mxu0 0
    %4301 = vmatprep.subr.bf16.mxu0 0
    %4302 = vmatpush1.bf16.msra.mxu0 0
    %4303 = vmatprep.subr.bf16.mxu0 0
    %4304 = vmatpush1.bf16.msra.mxu0 0
    %4305 = vmatprep.subr.bf16.mxu0 0
    %4306 = vmatpush1.bf16.msra.mxu0 0
    %4307 = vmatprep.mubr.bf16.mxu0 0
    %4308 = vmatmul.mubr.bf16.gmra.mrb[0].mxu0 %v4273
    %v4309 = vpop.f32.mrb[0].mxu0
    %v4310 = vadd.f32 0.0, %v4309
    %v4311 = vpop.f32.mrb[0].mxu0
    %v4312 = vpop.f32.mrb[0].mxu0
    %v4313 = vadd.f32 0.0, %v4312
    %v4314 = vpop.f32.mrb[0].mxu0
    %4315 = vdwg.mxu0
    %v4316 = vadd.f32 %v4074, %v4310
    %v4317 = vadd.f32 %v4075, %v4313
    %v4318 = vlaneseq
    %v4319 = vshrl.u32 %v4318, 7
    %v4320 = vsub.s32 5, %v4319
    %v4321 = vrot.slane %v2973, %v4320
    %v4322 = vadd.f32 %v4316, %v4321
    %v4323 = vadd.f32 %v4317, %v4321
    %4324 = vst.msk [vmem:[#allocation7] sm:$0xff] %vm69, %v4322
    %4325 = vst.msk [vmem:[#allocation7 + $0x8] sm:$0xff] %vm69, %v4323
    // Predicated region
    $region50: #{tpu_custom_call.1} parent=1 // pred_check
      _
    $region51: #{tpu_custom_call.1} parent=1 // pred_check_branch
      %4327 = sbr.rel (0) target = $region53
    $region52: #{tpu_custom_call.1} parent=1 // pred_region
      %s4329 = ssub.s32 256, 256
      %4330 = vsyncadd [#allocation4], %s4329
      %s4331 = sshll.u32 [#allocation7], 4
      %s4332 = int_to_ptr.vmem [resolvable:$true] %s4331
      %4337 = dma.vmem_to_hbm [thread:$0]  %s4332, 256, %s10, [#allocation4], 128, 128, 8
    $region53: #{tpu_custom_call.1} parent=1 // pred_fallthru
      _
    // Predicated region
    $region54: #{tpu_custom_call.1} parent=1 // pred_check
      _
    $region55: #{tpu_custom_call.1} parent=1 // pred_check_branch
      %4339 = sbr.rel (0) target = $region57
    $region56: #{tpu_custom_call.1} parent=1 // pred_region
      %4340 = dma.done [#allocation4], 256
    $region57: #{tpu_custom_call.1} parent=1 // pred_fallthru
      _
    %4341 = vsyncpa [#allocation3], 1
    %4342 = vsyncpa [#allocation6], 1
    %4343 = vsyncpa [#allocation4], 1

</llo_original>
